<compile_context>
chip_gen: v7x
topology: tpu7x:2x2x1
jax: 0.10.0
libtpu: 0.0.40
codegen_flags: <defaults>
</compile_context>

<pallas_src>
import functools

import jax
import jax.numpy as jnp
from jax.experimental import pallas as pl
from jax.experimental.pallas import tpu as pltpu


# ---------------------------------------------------------------------------
# Shared in-kernel helpers
# ---------------------------------------------------------------------------
def _leaky(y, slope):
    """torch.nn.functional.leaky_relu with a runtime (SMEM) slope."""
    return jnp.where(y >= 0, y, slope * y)


def _zero_pad_border(pad_ref, Ho, Wo, pad):
    """Zero only the halo border of the persistent VMEM pad scratch.

    Done every grid step (NOT @pl.when(program_id==0)): the grid axis is
    marked "parallel", so on v7x each TensorCore owns its own scratch and may
    never execute step 0.  Zeroing just the border keeps the saving the
    review asked for while staying correct under any core split.
    """
    if pad == 0:
        return
    Hp, Wp, C = pad_ref.shape
    pad_ref[0:pad, :, :] = jnp.zeros((pad, Wp, C), jnp.float32)
    pad_ref[pad + Ho:, :, :] = jnp.zeros((Hp - pad - Ho, Wp, C), jnp.float32)
    pad_ref[:, 0:pad, :] = jnp.zeros((Hp, pad, C), jnp.float32)
    pad_ref[:, pad + Wo:, :] = jnp.zeros((Hp, Wp - pad - Wo, C), jnp.float32)


def _depthwise_bn(pad_ref, dww, dwb, K, Ho, Wo):
    """Depthwise KxK 'same' conv (taps from zero-padded VMEM scratch) + BN bias.

    BN scale is pre-folded into dww; acc stays in registers/VMEM.
    (For real widths, add a channel/row inner tile to bound vreg pressure.)
    """
    acc = jnp.zeros((Ho, Wo, dww.shape[1]), jnp.float32)
    for dy in range(K):
        for dx in range(K):
            tap = pad_ref[dy:dy + Ho, dx:dx + Wo, :]    # direct VMEM loads
            acc = acc + tap * dww[dy * K + dx]
    return acc + dwb


# ---------------------------------------------------------------------------
# Fused stage kernel: conv1+BN -> leaky -> conv2+BN -> ReLU -> [pool]
#                     -> depthwise KxK -> BN          (one kernel per stage)
# ---------------------------------------------------------------------------
def _stage_kernel(slope_ref, x_ref, w1_ref, b1_ref, w2_ref, b2_ref,
                  dww_ref, dwb_ref, o_ref, pad_ref, *,
                  pool, K, C_in, Ho, Wo, pad):
    slope = slope_ref[0]
    w1 = w1_ref[...]
    b1 = b1_ref[...]
    w2 = w2_ref[...]
    b2 = b2_ref[...]

    def mm(v):
        # bf16 MXU dots, f32 accumulate / epilogue.
        y = jnp.dot(v.astype(jnp.bfloat16), w1,
                    preferred_element_type=jnp.float32) + b1
        y = _leaky(y, slope)
        y = jnp.dot(y.astype(jnp.bfloat16), w2,
                    preferred_element_type=jnp.float32) + b2
        # ReLU of the `activation` module, hoisted before the max-pool
        # (exact commutation).
        return jnp.maximum(y, 0.0)

    _zero_pad_border(pad_ref, Ho, Wo, pad)

    x = x_ref[0]                                         # (rows, lanes)
    if pool:
        # Lane layout of x: [w-even pixel channels | w-odd pixel channels]
        # (free wrapper regroup), so the W-direction pool is a lane-slice max.
        pw = jnp.maximum(mm(x[:, :C_in]), mm(x[:, C_in:]))   # (2*Ho*Wo, C_out)
        # H-direction pool: contiguous row-slice max, scatter into the
        # zero-padded depthwise scratch.
        for ho in range(Ho):
            top = pw[(2 * ho) * Wo:(2 * ho) * Wo + Wo, :]
            bot = pw[(2 * ho + 1) * Wo:(2 * ho + 1) * Wo + Wo, :]
            pad_ref[pad + ho, pad:pad + Wo, :] = jnp.maximum(top, bot)
    else:
        y = mm(x)                                        # (Ho*Wo, C_out)
        for ho in range(Ho):
            pad_ref[pad + ho, pad:pad + Wo, :] = y[ho * Wo:(ho + 1) * Wo, :]

    o_ref[...] = _depthwise_bn(pad_ref, dww_ref[...], dwb_ref[...],
                               K, Ho, Wo).astype(o_ref.dtype)
    # TODO(synk): deformable_LKA attention is omitted (no clean Pallas equivalent).


# ---------------------------------------------------------------------------
# Fused stem kernel: conv(4x4,s4)+BN -> leaky -> conv(1x1)+BN -> ReLU
#                    -> depthwise KxK -> BN
# ---------------------------------------------------------------------------
def _stem_kernel(slope_ref, x_ref, w1_ref, b1_ref, w2_ref, b2_ref,
                 dww_ref, dwb_ref, o_ref, pad_ref, y1_ref, *,
                 K, C0, Ho, Wo, pad):
    slope = slope_ref[0]

    _zero_pad_border(pad_ref, Ho, Wo, pad)

    # stem1 (4x4 stride-4 conv + BN): the dx/channel part of the patch is a
    # free wrapper regroup onto lanes, so one wide matmul computes all four
    # dy partial products; the dy reduction is 4 contiguous slices of P.
    P = jnp.dot(x_ref[0].astype(jnp.bfloat16), w1_ref[...],
                preferred_element_type=jnp.float32)        # (H*Wo, 4*C0)
    b1 = b1_ref[...]
    for j in range(Ho):
        acc = P[(4 * j) * Wo:(4 * j) * Wo + Wo, 0:C0]
        for dy in range(1, 4):
            r0 = (4 * j + dy) * Wo
            acc = acc + P[r0:r0 + Wo, dy * C0:(dy + 1) * C0]
        y1_ref[j * Wo:(j + 1) * Wo, :] = acc + b1

    # leaky -> stem2 (1x1 conv + BN) -> activation's ReLU
    y = _leaky(y1_ref[...], slope)
    y = jnp.dot(y.astype(jnp.bfloat16), w2_ref[...],
                preferred_element_type=jnp.float32) + b2_ref[...]
    y = jnp.maximum(y, 0.0)
    for j in range(Ho):
        pad_ref[pad + j, pad:pad + Wo, :] = y[j * Wo:(j + 1) * Wo, :]

    o_ref[...] = _depthwise_bn(pad_ref, dww_ref[...], dwb_ref[...],
                               K, Ho, Wo).astype(o_ref.dtype)


# ---------------------------------------------------------------------------
# pallas_call wrappers (all wrapper reshapes below are free row-major regroups)
# ---------------------------------------------------------------------------
def _resident(shape):
    """Constant-index BlockSpec: weights stay resident across the grid."""
    return pl.BlockSpec(shape, lambda n: (0,) * len(shape))


def stem_forward(x_nhwc, p, slope_arr):
    N, H, W, Cin = x_nhwc.shape
    Ho, Wo = H // 4, W // 4
    if H != 4 * Ho or W != 4 * Wo:
        x_nhwc = x_nhwc[:, :4 * Ho, :4 * Wo, :]
        H, W = 4 * Ho, 4 * Wo
    C0 = p["w2"].shape[1]
    K = p["K"]
    pad = (K - 1) // 2
    Hp, Wp = Ho + 2 * pad, Wo + 2 * pad

    # Free regroup: columns into groups of 4 (stride-4 phase dx merged with
    # channels onto the lane dim) — no XLA copy, unlike a patch transpose.
    xs = x_nhwc.reshape(N, H * Wo, 4 * Cin)

    kernel = functools.partial(_stem_kernel, K=K, C0=C0, Ho=Ho, Wo=Wo, pad=pad)
    out = pl.pallas_call(
        kernel,
        out_shape=jax.ShapeDtypeStruct((N * Ho, Wo, C0), jnp.float32),
        grid=(N,),
        in_specs=[
            pl.BlockSpec(memory_space=pltpu.MemorySpace.SMEM),      # act_learn
            pl.BlockSpec((1, H * Wo, 4 * Cin), lambda n: (n, 0, 0)),
            _resident((4 * Cin, 4 * C0)),
            _resident((1, C0)),
            _resident((C0, C0)),
            _resident((1, C0)),
            _resident((K * K, C0)),
            _resident((1, 1, C0)),
        ],
        out_specs=pl.BlockSpec((Ho, Wo, C0), lambda n: (n, 0, 0)),
        scratch_shapes=[pltpu.VMEM((Hp, Wp, C0), jnp.float32),
                        pltpu.VMEM((Ho * Wo, C0), jnp.float32)],
        compiler_params=pltpu.CompilerParams(
            dimension_semantics=("parallel",)),
    )(slope_arr, xs, p["w1"], p["b1"], p["w2"], p["b2"], p["act_w"], p["act_b"])
    return out.reshape(N, Ho, Wo, C0)


def stage_forward(x_nhwc, p, slope_arr):
    N, H, W, C_in = x_nhwc.shape
    C_out = p["w2"].shape[1]
    K = p["K"]
    pad = (K - 1) // 2
    pool = (p["stride"] != 1)

    if pool:
        Ho, Wo = H // 2, W // 2
        if H != 2 * Ho or W != 2 * Wo:                   # MaxPool2d(2) floors
            x_nhwc = x_nhwc[:, :2 * Ho, :2 * Wo, :]
            H, W = 2 * Ho, 2 * Wo
        # Free regroup: W-pixel pairs side by side on the lane dim.
        xs = x_nhwc.reshape(N, H * Wo, 2 * C_in)
        x_spec = pl.BlockSpec((1, H * Wo, 2 * C_in), lambda n: (n, 0, 0))
    else:
        Ho, Wo = H, W
        xs = x_nhwc.reshape(N, H * W, C_in)
        x_spec = pl.BlockSpec((1, H * W, C_in), lambda n: (n, 0, 0))
    Hp, Wp = Ho + 2 * pad, Wo + 2 * pad

    kernel = functools.partial(_stage_kernel, pool=pool, K=K, C_in=C_in,
                               Ho=Ho, Wo=Wo, pad=pad)
    out = pl.pallas_call(
        kernel,
        out_shape=jax.ShapeDtypeStruct((N * Ho, Wo, C_out), jnp.float32),
        grid=(N,),
        in_specs=[
            pl.BlockSpec(memory_space=pltpu.MemorySpace.SMEM),      # act_learn
            x_spec,
            _resident((C_in, C_in)),
            _resident((1, C_in)),
            _resident((C_in, C_out)),
            _resident((1, C_out)),
            _resident((K * K, C_out)),
            _resident((1, 1, C_out)),
        ],
        out_specs=pl.BlockSpec((Ho, Wo, C_out), lambda n: (n, 0, 0)),
        scratch_shapes=[pltpu.VMEM((Hp, Wp, C_out), jnp.float32)],
        compiler_params=pltpu.CompilerParams(
            dimension_semantics=("parallel",)),
    )(slope_arr, xs, p["w1"], p["b1"], p["w2"], p["b2"], p["act_w"], p["act_b"])
    return out.reshape(N, Ho, Wo, C_out)


# ---------------------------------------------------------------------------
# Model forward (NHWC end-to-end; pyramid converted to NCHW once at the end)
# ---------------------------------------------------------------------------
def vanillanet_forward(x_nchw, params):
    x = jnp.transpose(x_nchw, (0, 2, 3, 1)).astype(jnp.float32)   # NHWC once
    slope = params["act_learn"]

    feats = [stem_forward(x, params["stem"], slope)]
    for sp in params["stages"]:
        feats.append(stage_forward(feats[-1], sp, slope))

    # Single conversion pass to the module's NCHW convention (could be skipped
    # entirely if the consumer accepts NHWC).
    return [jnp.transpose(f, (0, 3, 1, 2)) for f in feats]


# ---------------------------------------------------------------------------
# Deterministic parameter construction (eval-mode BN folded into weights)
# ---------------------------------------------------------------------------
def trunc_normal(key, shape, std=0.02):
    return (std * jax.random.truncated_normal(key, -2.0, 2.0, shape)).astype(jnp.float32)


def bn_scale_bias(key, c, eps=1e-6):
    k1, k2, k3, k4 = jax.random.split(key, 4)
    gamma = 1.0 + 0.1 * jax.random.normal(k1, (c,))
    beta = 0.1 * jax.random.normal(k2, (c,))
    mean = 0.1 * jax.random.normal(k3, (c,))
    var = 0.5 + jnp.abs(jax.random.normal(k4, (c,)))
    scale = gamma / jnp.sqrt(var + eps)
    bias = beta - mean * scale
    return scale.astype(jnp.float32), bias.astype(jnp.float32)


def make_act_params(key, dim, act_num):
    """activation module: depthwise (2*act_num+1)^2 conv weights, BN folded."""
    K = 2 * act_num + 1
    k1, k2 = jax.random.split(key)
    w = trunc_normal(k1, (dim, 1, K, K))                    # PyTorch layout
    w_flat = jnp.transpose(w.reshape(dim, K * K), (1, 0))   # (K*K, dim)
    scale, bias = bn_scale_bias(k2, dim)
    return {"w": (w_flat * scale[None, :]).astype(jnp.float32),
            "b": bias.reshape(1, 1, dim)}


def make_params(key, in_chans, dims, strides, act_num):
    K = 2 * act_num + 1
    keys = iter(jax.random.split(key, 8 + 8 * len(strides)))
    params = {"act_learn": jnp.ones((1,), jnp.float32)}     # runtime SMEM scalar

    C0 = dims[0]
    # stem1: Conv2d(in_chans, C0, 4, stride=4) + BN   (conv bias init 0)
    w1 = trunc_normal(next(keys), (C0, in_chans, 4, 4))     # torch OIHW
    s1, b1 = bn_scale_bias(next(keys), C0)
    # wide layout for the in-kernel stride-4 trick: [dx*Cin+ci, dy*C0+co]
    w1_wide = jnp.transpose(w1, (3, 1, 2, 0)).reshape(4 * in_chans, 4 * C0)
    w1_wide = w1_wide * jnp.tile(s1, 4)[None, :]
    # stem2: Conv2d(C0, C0, 1) + BN
    w2 = trunc_normal(next(keys), (C0, C0, 1, 1)).reshape(C0, C0)
    s2, b2 = bn_scale_bias(next(keys), C0)
    w2f = jnp.transpose(w2, (1, 0)) * s2[None, :]
    act = make_act_params(next(keys), C0, act_num)
    params["stem"] = {
        "w1": w1_wide.astype(jnp.bfloat16), "b1": b1.reshape(1, C0),
        "w2": w2f.astype(jnp.bfloat16), "b2": b2.reshape(1, C0),
        "act_w": act["w"], "act_b": act["b"], "K": K,
    }

    stages = []
    for i, s in enumerate(strides):
        dim, dim_out = dims[i], dims[i + 1]
        cw1 = trunc_normal(next(keys), (dim, dim, 1, 1)).reshape(dim, dim).T
        cs1, cb1 = bn_scale_bias(next(keys), dim)
        cw2 = trunc_normal(next(keys), (dim_out, dim, 1, 1)).reshape(dim_out, dim).T
        cs2, cb2 = bn_scale_bias(next(keys), dim_out)
        act = make_act_params(next(keys), dim_out, act_num)
        stages.append({
            "w1": (cw1 * cs1[None, :]).astype(jnp.bfloat16),
            "b1": cb1.reshape(1, dim),
            "w2": (cw2 * cs2[None, :]).astype(jnp.bfloat16),
            "b2": cb2.reshape(1, dim_out),
            "act_w": act["w"], "act_b": act["b"], "K": K, "stride": s,
        })
    params["stages"] = stages
    return params


# ---------------------------------------------------------------------------
if __name__ == "__main__":
    key = jax.random.PRNGKey(0)
    kx, kp = jax.random.split(key)

    in_chans = 3
    dims = [16, 32, 48, 64]      # dims[i] -> dims[i+1] per stage
    strides = [2, 2, 1]          # 3 stages
    act_num = 3                  # 7x7 depthwise kernel in `activation`

    x = jax.random.normal(kx, (2, in_chans, 32, 32), jnp.float32)  # NCHW input
    params = make_params(kp, in_chans, dims, strides, act_num)

    outs = vanillanet_forward(x, params)
    for o in outs:
        jax.block_until_ready(o)

    # Output pyramid shapes (stem: /4, then pools per stride) + finite check
    expected = [(2, 16, 8, 8), (2, 32, 4, 4), (2, 48, 2, 2), (2, 64, 2, 2)]
    assert [tuple(o.shape) for o in outs] == expected, [o.shape for o in outs]
    assert all(bool(jnp.isfinite(o).all()) for o in outs)
    print("KERNEL_OK")
</pallas_src>

<mosaic_0001>
module attributes {stable_mosaic.version = 11 : i64} {
  func.func @_stem_kernel(%arg0: i32, %arg1: memref<1xf32, #tpu.memory_space<smem>>, %arg2: memref<1x256x12xf32, #tpu.memory_space<vmem>>, %arg3: memref<12x64xbf16, #tpu.memory_space<vmem>>, %arg4: memref<1x16xf32, #tpu.memory_space<vmem>>, %arg5: memref<16x16xbf16, #tpu.memory_space<vmem>>, %arg6: memref<1x16xf32, #tpu.memory_space<vmem>>, %arg7: memref<49x16xf32, #tpu.memory_space<vmem>>, %arg8: memref<1x1x16xf32, #tpu.memory_space<vmem>>, %arg9: memref<8x8x16xf32, #tpu.memory_space<vmem>>, %arg10: memref<14x14x16xf32, #tpu.memory_space<vmem>>, %arg11: memref<64x16xf32, #tpu.memory_space<vmem>>) attributes {dimension_semantics = [#tpu.dimension_semantics<parallel>], iteration_bounds = array<i64: 2>, scalar_prefetch = 0 : i64, scratch_operands = 2 : i64, tpu.core_type = #tpu.core_type<tc>, window_params = [{transform_indices = @transform_0, window_bounds = array<i64: 1>}, {transform_indices = @transform_1, window_bounds = array<i64: 1, 256, 12>}, {pipeline_mode = #tpu.pipeline_mode<synchronous>, transform_indices = @transform_2, window_bounds = array<i64: 12, 64>}, {pipeline_mode = #tpu.pipeline_mode<synchronous>, transform_indices = @transform_3, window_bounds = array<i64: 1, 16>}, {pipeline_mode = #tpu.pipeline_mode<synchronous>, transform_indices = @transform_4, window_bounds = array<i64: 16, 16>}, {pipeline_mode = #tpu.pipeline_mode<synchronous>, transform_indices = @transform_5, window_bounds = array<i64: 1, 16>}, {pipeline_mode = #tpu.pipeline_mode<synchronous>, transform_indices = @transform_6, window_bounds = array<i64: 49, 16>}, {pipeline_mode = #tpu.pipeline_mode<synchronous>, transform_indices = @transform_7, window_bounds = array<i64: 1, 1, 16>}, {transform_indices = @transform_8, window_bounds = array<i64: 8, 8, 16>}]} {
    %c0 = arith.constant 0 : index
    %0 = memref.load %arg1[%c0] : memref<1xf32, #tpu.memory_space<smem>>
    %cst = arith.constant 0.000000e+00 : f32
    %1 = vector.broadcast %cst : f32 to vector<3x14x16xf32>
    %c0_0 = arith.constant 0 : index
    %c0_1 = arith.constant 0 : index
    %c0_2 = arith.constant 0 : index
    %2 = vector.load %arg10[%c0_0, %c0_1, %c0_2] : memref<14x14x16xf32, #tpu.memory_space<vmem>>, vector<3x14x16xf32>
    tpu.vector_store %arg10[%c0_0, %c0_1, %c0_2], %1 {strides = array<i32>} : memref<14x14x16xf32, #tpu.memory_space<vmem>>, vector<3x14x16xf32>,
    %cst_3 = arith.constant 0.000000e+00 : f32
    %3 = vector.broadcast %cst_3 : f32 to vector<3x14x16xf32>
    %c11 = arith.constant 11 : index
    %c0_4 = arith.constant 0 : index
    %c0_5 = arith.constant 0 : index
    %4 = vector.load %arg10[%c11, %c0_4, %c0_5] : memref<14x14x16xf32, #tpu.memory_space<vmem>>, vector<3x14x16xf32>
    tpu.vector_store %arg10[%c11, %c0_4, %c0_5], %3 {strides = array<i32>} : memref<14x14x16xf32, #tpu.memory_space<vmem>>, vector<3x14x16xf32>,
    %cst_6 = arith.constant 0.000000e+00 : f32
    %5 = vector.broadcast %cst_6 : f32 to vector<14x3x16xf32>
    %c0_7 = arith.constant 0 : index
    %c0_8 = arith.constant 0 : index
    %c0_9 = arith.constant 0 : index
    %6 = vector.load %arg10[%c0_7, %c0_8, %c0_9] : memref<14x14x16xf32, #tpu.memory_space<vmem>>, vector<14x3x16xf32>
    tpu.vector_store %arg10[%c0_7, %c0_8, %c0_9], %5 {strides = array<i32>} : memref<14x14x16xf32, #tpu.memory_space<vmem>>, vector<14x3x16xf32>,
    %cst_10 = arith.constant 0.000000e+00 : f32
    %7 = vector.broadcast %cst_10 : f32 to vector<14x3x16xf32>
    %c0_11 = arith.constant 0 : index
    %c11_12 = arith.constant 11 : index
    %c0_13 = arith.constant 0 : index
    %8 = vector.load %arg10[%c0_11, %c11_12, %c0_13] : memref<14x14x16xf32, #tpu.memory_space<vmem>>, vector<14x3x16xf32>
    tpu.vector_store %arg10[%c0_11, %c11_12, %c0_13], %7 {strides = array<i32>} : memref<14x14x16xf32, #tpu.memory_space<vmem>>, vector<14x3x16xf32>,
    %c0_14 = arith.constant 0 : index
    %c0_15 = arith.constant 0 : index
    %c0_16 = arith.constant 0 : index
    %9 = vector.load %arg2[%c0_14, %c0_15, %c0_16] : memref<1x256x12xf32, #tpu.memory_space<vmem>>, vector<1x256x12xf32>
    %10 = vector.shape_cast %9 : vector<1x256x12xf32> to vector<256x12xf32>
    %11 = arith.truncf %10 : vector<256x12xf32> to vector<256x12xbf16>
    %c0_17 = arith.constant 0 : index
    %c0_18 = arith.constant 0 : index
    %12 = vector.load %arg3[%c0_17, %c0_18] : memref<12x64xbf16, #tpu.memory_space<vmem>>, vector<12x64xbf16>
    %cst_19 = arith.constant dense<0.000000e+00> : vector<256x64xf32>
    %13 = tpu.matmul %11, %12, %cst_19 {dimension_numbers = #tpu.dot_dimension_numbers<[1], [0], [0], [1], [0, 0, 1, 1], [], []>} : vector<256x12xbf16>, vector<12x64xbf16>, vector<256x64xf32> -> vector<256x64xf32>
    %c0_20 = arith.constant 0 : index
    %c0_21 = arith.constant 0 : index
    %14 = vector.load %arg4[%c0_20, %c0_21] : memref<1x16xf32, #tpu.memory_space<vmem>>, vector<1x16xf32>
    %15 = vector.extract_strided_slice %13 {offsets = [0, 0], sizes = [8, 16], strides = [1, 1]} : vector<256x64xf32> to vector<8x16xf32>
    %16 = vector.extract_strided_slice %13 {offsets = [8, 16], sizes = [8, 16], strides = [1, 1]} : vector<256x64xf32> to vector<8x16xf32>
    %17 = arith.addf %15, %16 : vector<8x16xf32>
    %18 = vector.extract_strided_slice %13 {offsets = [16, 32], sizes = [8, 16], strides = [1, 1]} : vector<256x64xf32> to vector<8x16xf32>
    %19 = arith.addf %17, %18 : vector<8x16xf32>
    %20 = vector.extract_strided_slice %13 {offsets = [24, 48], sizes = [8, 16], strides = [1, 1]} : vector<256x64xf32> to vector<8x16xf32>
    %21 = arith.addf %19, %20 : vector<8x16xf32>
    %22 = vector.broadcast %14 : vector<1x16xf32> to vector<8x16xf32>
    %23 = arith.addf %21, %22 : vector<8x16xf32>
    %c0_22 = arith.constant 0 : index
    %c0_23 = arith.constant 0 : index
    %24 = vector.load %arg11[%c0_22, %c0_23] : memref<64x16xf32, #tpu.memory_space<vmem>>, vector<8x16xf32>
    tpu.vector_store %arg11[%c0_22, %c0_23], %23 {strides = array<i32>} : memref<64x16xf32, #tpu.memory_space<vmem>>, vector<8x16xf32>,
    %25 = vector.extract_strided_slice %13 {offsets = [32, 0], sizes = [8, 16], strides = [1, 1]} : vector<256x64xf32> to vector<8x16xf32>
    %26 = vector.extract_strided_slice %13 {offsets = [40, 16], sizes = [8, 16], strides = [1, 1]} : vector<256x64xf32> to vector<8x16xf32>
    %27 = arith.addf %25, %26 : vector<8x16xf32>
    %28 = vector.extract_strided_slice %13 {offsets = [48, 32], sizes = [8, 16], strides = [1, 1]} : vector<256x64xf32> to vector<8x16xf32>
    %29 = arith.addf %27, %28 : vector<8x16xf32>
    %30 = vector.extract_strided_slice %13 {offsets = [56, 48], sizes = [8, 16], strides = [1, 1]} : vector<256x64xf32> to vector<8x16xf32>
    %31 = arith.addf %29, %30 : vector<8x16xf32>
    %32 = vector.broadcast %14 : vector<1x16xf32> to vector<8x16xf32>
    %33 = arith.addf %31, %32 : vector<8x16xf32>
    %c8 = arith.constant 8 : index
    %c0_24 = arith.constant 0 : index
    %34 = vector.load %arg11[%c8, %c0_24] : memref<64x16xf32, #tpu.memory_space<vmem>>, vector<8x16xf32>
    tpu.vector_store %arg11[%c8, %c0_24], %33 {strides = array<i32>} : memref<64x16xf32, #tpu.memory_space<vmem>>, vector<8x16xf32>,
    %35 = vector.extract_strided_slice %13 {offsets = [64, 0], sizes = [8, 16], strides = [1, 1]} : vector<256x64xf32> to vector<8x16xf32>
    %36 = vector.extract_strided_slice %13 {offsets = [72, 16], sizes = [8, 16], strides = [1, 1]} : vector<256x64xf32> to vector<8x16xf32>
    %37 = arith.addf %35, %36 : vector<8x16xf32>
    %38 = vector.extract_strided_slice %13 {offsets = [80, 32], sizes = [8, 16], strides = [1, 1]} : vector<256x64xf32> to vector<8x16xf32>
    %39 = arith.addf %37, %38 : vector<8x16xf32>
    %40 = vector.extract_strided_slice %13 {offsets = [88, 48], sizes = [8, 16], strides = [1, 1]} : vector<256x64xf32> to vector<8x16xf32>
    %41 = arith.addf %39, %40 : vector<8x16xf32>
    %42 = vector.broadcast %14 : vector<1x16xf32> to vector<8x16xf32>
    %43 = arith.addf %41, %42 : vector<8x16xf32>
    %c16 = arith.constant 16 : index
    %c0_25 = arith.constant 0 : index
    %44 = vector.load %arg11[%c16, %c0_25] : memref<64x16xf32, #tpu.memory_space<vmem>>, vector<8x16xf32>
    tpu.vector_store %arg11[%c16, %c0_25], %43 {strides = array<i32>} : memref<64x16xf32, #tpu.memory_space<vmem>>, vector<8x16xf32>,
    %45 = vector.extract_strided_slice %13 {offsets = [96, 0], sizes = [8, 16], strides = [1, 1]} : vector<256x64xf32> to vector<8x16xf32>
    %46 = vector.extract_strided_slice %13 {offsets = [104, 16], sizes = [8, 16], strides = [1, 1]} : vector<256x64xf32> to vector<8x16xf32>
    %47 = arith.addf %45, %46 : vector<8x16xf32>
    %48 = vector.extract_strided_slice %13 {offsets = [112, 32], sizes = [8, 16], strides = [1, 1]} : vector<256x64xf32> to vector<8x16xf32>
    %49 = arith.addf %47, %48 : vector<8x16xf32>
    %50 = vector.extract_strided_slice %13 {offsets = [120, 48], sizes = [8, 16], strides = [1, 1]} : vector<256x64xf32> to vector<8x16xf32>
    %51 = arith.addf %49, %50 : vector<8x16xf32>
    %52 = vector.broadcast %14 : vector<1x16xf32> to vector<8x16xf32>
    %53 = arith.addf %51, %52 : vector<8x16xf32>
    %c24 = arith.constant 24 : index
    %c0_26 = arith.constant 0 : index
    %54 = vector.load %arg11[%c24, %c0_26] : memref<64x16xf32, #tpu.memory_space<vmem>>, vector<8x16xf32>
    tpu.vector_store %arg11[%c24, %c0_26], %53 {strides = array<i32>} : memref<64x16xf32, #tpu.memory_space<vmem>>, vector<8x16xf32>,
    %55 = vector.extract_strided_slice %13 {offsets = [128, 0], sizes = [8, 16], strides = [1, 1]} : vector<256x64xf32> to vector<8x16xf32>
    %56 = vector.extract_strided_slice %13 {offsets = [136, 16], sizes = [8, 16], strides = [1, 1]} : vector<256x64xf32> to vector<8x16xf32>
    %57 = arith.addf %55, %56 : vector<8x16xf32>
    %58 = vector.extract_strided_slice %13 {offsets = [144, 32], sizes = [8, 16], strides = [1, 1]} : vector<256x64xf32> to vector<8x16xf32>
    %59 = arith.addf %57, %58 : vector<8x16xf32>
    %60 = vector.extract_strided_slice %13 {offsets = [152, 48], sizes = [8, 16], strides = [1, 1]} : vector<256x64xf32> to vector<8x16xf32>
    %61 = arith.addf %59, %60 : vector<8x16xf32>
    %62 = vector.broadcast %14 : vector<1x16xf32> to vector<8x16xf32>
    %63 = arith.addf %61, %62 : vector<8x16xf32>
    %c32 = arith.constant 32 : index
    %c0_27 = arith.constant 0 : index
    %64 = vector.load %arg11[%c32, %c0_27] : memref<64x16xf32, #tpu.memory_space<vmem>>, vector<8x16xf32>
    tpu.vector_store %arg11[%c32, %c0_27], %63 {strides = array<i32>} : memref<64x16xf32, #tpu.memory_space<vmem>>, vector<8x16xf32>,
    %65 = vector.extract_strided_slice %13 {offsets = [160, 0], sizes = [8, 16], strides = [1, 1]} : vector<256x64xf32> to vector<8x16xf32>
    %66 = vector.extract_strided_slice %13 {offsets = [168, 16], sizes = [8, 16], strides = [1, 1]} : vector<256x64xf32> to vector<8x16xf32>
    %67 = arith.addf %65, %66 : vector<8x16xf32>
    %68 = vector.extract_strided_slice %13 {offsets = [176, 32], sizes = [8, 16], strides = [1, 1]} : vector<256x64xf32> to vector<8x16xf32>
    %69 = arith.addf %67, %68 : vector<8x16xf32>
    %70 = vector.extract_strided_slice %13 {offsets = [184, 48], sizes = [8, 16], strides = [1, 1]} : vector<256x64xf32> to vector<8x16xf32>
    %71 = arith.addf %69, %70 : vector<8x16xf32>
    %72 = vector.broadcast %14 : vector<1x16xf32> to vector<8x16xf32>
    %73 = arith.addf %71, %72 : vector<8x16xf32>
    %c40 = arith.constant 40 : index
    %c0_28 = arith.constant 0 : index
    %74 = vector.load %arg11[%c40, %c0_28] : memref<64x16xf32, #tpu.memory_space<vmem>>, vector<8x16xf32>
    tpu.vector_store %arg11[%c40, %c0_28], %73 {strides = array<i32>} : memref<64x16xf32, #tpu.memory_space<vmem>>, vector<8x16xf32>,
    %75 = vector.extract_strided_slice %13 {offsets = [192, 0], sizes = [8, 16], strides = [1, 1]} : vector<256x64xf32> to vector<8x16xf32>
    %76 = vector.extract_strided_slice %13 {offsets = [200, 16], sizes = [8, 16], strides = [1, 1]} : vector<256x64xf32> to vector<8x16xf32>
    %77 = arith.addf %75, %76 : vector<8x16xf32>
    %78 = vector.extract_strided_slice %13 {offsets = [208, 32], sizes = [8, 16], strides = [1, 1]} : vector<256x64xf32> to vector<8x16xf32>
    %79 = arith.addf %77, %78 : vector<8x16xf32>
    %80 = vector.extract_strided_slice %13 {offsets = [216, 48], sizes = [8, 16], strides = [1, 1]} : vector<256x64xf32> to vector<8x16xf32>
    %81 = arith.addf %79, %80 : vector<8x16xf32>
    %82 = vector.broadcast %14 : vector<1x16xf32> to vector<8x16xf32>
    %83 = arith.addf %81, %82 : vector<8x16xf32>
    %c48 = arith.constant 48 : index
    %c0_29 = arith.constant 0 : index
    %84 = vector.load %arg11[%c48, %c0_29] : memref<64x16xf32, #tpu.memory_space<vmem>>, vector<8x16xf32>
    tpu.vector_store %arg11[%c48, %c0_29], %83 {strides = array<i32>} : memref<64x16xf32, #tpu.memory_space<vmem>>, vector<8x16xf32>,
    %85 = vector.extract_strided_slice %13 {offsets = [224, 0], sizes = [8, 16], strides = [1, 1]} : vector<256x64xf32> to vector<8x16xf32>
    %86 = vector.extract_strided_slice %13 {offsets = [232, 16], sizes = [8, 16], strides = [1, 1]} : vector<256x64xf32> to vector<8x16xf32>
    %87 = arith.addf %85, %86 : vector<8x16xf32>
    %88 = vector.extract_strided_slice %13 {offsets = [240, 32], sizes = [8, 16], strides = [1, 1]} : vector<256x64xf32> to vector<8x16xf32>
    %89 = arith.addf %87, %88 : vector<8x16xf32>
    %90 = vector.extract_strided_slice %13 {offsets = [248, 48], sizes = [8, 16], strides = [1, 1]} : vector<256x64xf32> to vector<8x16xf32>
    %91 = arith.addf %89, %90 : vector<8x16xf32>
    %92 = vector.broadcast %14 : vector<1x16xf32> to vector<8x16xf32>
    %93 = arith.addf %91, %92 : vector<8x16xf32>
    %c56 = arith.constant 56 : index
    %c0_30 = arith.constant 0 : index
    %94 = vector.load %arg11[%c56, %c0_30] : memref<64x16xf32, #tpu.memory_space<vmem>>, vector<8x16xf32>
    tpu.vector_store %arg11[%c56, %c0_30], %93 {strides = array<i32>} : memref<64x16xf32, #tpu.memory_space<vmem>>, vector<8x16xf32>,
    %c0_31 = arith.constant 0 : index
    %c0_32 = arith.constant 0 : index
    %95 = vector.load %arg11[%c0_31, %c0_32] : memref<64x16xf32, #tpu.memory_space<vmem>>, vector<64x16xf32>
    %cst_33 = arith.constant 0.000000e+00 : f32
    %96 = vector.broadcast %cst_33 : f32 to vector<64x16xf32>
    %97 = arith.cmpf oge, %95, %96 : vector<64x16xf32>
    %98 = vector.broadcast %0 : f32 to vector<64x16xf32>
    %99 = arith.mulf %98, %95 : vector<64x16xf32>
    %100 = arith.select %97, %95, %99 : vector<64x16xi1>, vector<64x16xf32>
    %101 = arith.truncf %100 : vector<64x16xf32> to vector<64x16xbf16>
    %c0_34 = arith.constant 0 : index
    %c0_35 = arith.constant 0 : index
    %102 = vector.load %arg5[%c0_34, %c0_35] : memref<16x16xbf16, #tpu.memory_space<vmem>>, vector<16x16xbf16>
    %cst_36 = arith.constant dense<0.000000e+00> : vector<64x16xf32>
    %103 = tpu.matmul %101, %102, %cst_36 {dimension_numbers = #tpu.dot_dimension_numbers<[1], [0], [0], [1], [0, 0, 1, 1], [], []>} : vector<64x16xbf16>, vector<16x16xbf16>, vector<64x16xf32> -> vector<64x16xf32>
    %c0_37 = arith.constant 0 : index
    %c0_38 = arith.constant 0 : index
    %104 = vector.load %arg6[%c0_37, %c0_38] : memref<1x16xf32, #tpu.memory_space<vmem>>, vector<1x16xf32>
    %105 = vector.broadcast %104 : vector<1x16xf32> to vector<64x16xf32>
    %106 = arith.addf %103, %105 : vector<64x16xf32>
    %cst_39 = arith.constant 0.000000e+00 : f32
    %107 = vector.broadcast %cst_39 : f32 to vector<64x16xf32>
    %108 = arith.maximumf %106, %107 : vector<64x16xf32>
    %109 = vector.extract_strided_slice %108 {offsets = [0, 0], sizes = [8, 16], strides = [1, 1]} : vector<64x16xf32> to vector<8x16xf32>
    %c3 = arith.constant 3 : index
    %c3_40 = arith.constant 3 : index
    %c0_41 = arith.constant 0 : index
    %110 = vector.load %arg10[%c3, %c3_40, %c0_41] : memref<14x14x16xf32, #tpu.memory_space<vmem>>, vector<1x8x16xf32>
    %111 = vector.shape_cast %110 : vector<1x8x16xf32> to vector<8x16xf32>
    %112 = vector.shape_cast %109 : vector<8x16xf32> to vector<1x8x16xf32>
    tpu.vector_store %arg10[%c3, %c3_40, %c0_41], %112 {strides = array<i32>} : memref<14x14x16xf32, #tpu.memory_space<vmem>>, vector<1x8x16xf32>,
    %113 = vector.extract_strided_slice %108 {offsets = [8, 0], sizes = [8, 16], strides = [1, 1]} : vector<64x16xf32> to vector<8x16xf32>
    %c4 = arith.constant 4 : index
    %c3_42 = arith.constant 3 : index
    %c0_43 = arith.constant 0 : index
    %114 = vector.load %arg10[%c4, %c3_42, %c0_43] : memref<14x14x16xf32, #tpu.memory_space<vmem>>, vector<1x8x16xf32>
    %115 = vector.shape_cast %114 : vector<1x8x16xf32> to vector<8x16xf32>
    %116 = vector.shape_cast %113 : vector<8x16xf32> to vector<1x8x16xf32>
    tpu.vector_store %arg10[%c4, %c3_42, %c0_43], %116 {strides = array<i32>} : memref<14x14x16xf32, #tpu.memory_space<vmem>>, vector<1x8x16xf32>,
    %117 = vector.extract_strided_slice %108 {offsets = [16, 0], sizes = [8, 16], strides = [1, 1]} : vector<64x16xf32> to vector<8x16xf32>
    %c5 = arith.constant 5 : index
    %c3_44 = arith.constant 3 : index
    %c0_45 = arith.constant 0 : index
    %118 = vector.load %arg10[%c5, %c3_44, %c0_45] : memref<14x14x16xf32, #tpu.memory_space<vmem>>, vector<1x8x16xf32>
    %119 = vector.shape_cast %118 : vector<1x8x16xf32> to vector<8x16xf32>
    %120 = vector.shape_cast %117 : vector<8x16xf32> to vector<1x8x16xf32>
    tpu.vector_store %arg10[%c5, %c3_44, %c0_45], %120 {strides = array<i32>} : memref<14x14x16xf32, #tpu.memory_space<vmem>>, vector<1x8x16xf32>,
    %121 = vector.extract_strided_slice %108 {offsets = [24, 0], sizes = [8, 16], strides = [1, 1]} : vector<64x16xf32> to vector<8x16xf32>
    %c6 = arith.constant 6 : index
    %c3_46 = arith.constant 3 : index
    %c0_47 = arith.constant 0 : index
    %122 = vector.load %arg10[%c6, %c3_46, %c0_47] : memref<14x14x16xf32, #tpu.memory_space<vmem>>, vector<1x8x16xf32>
    %123 = vector.shape_cast %122 : vector<1x8x16xf32> to vector<8x16xf32>
    %124 = vector.shape_cast %121 : vector<8x16xf32> to vector<1x8x16xf32>
    tpu.vector_store %arg10[%c6, %c3_46, %c0_47], %124 {strides = array<i32>} : memref<14x14x16xf32, #tpu.memory_space<vmem>>, vector<1x8x16xf32>,
    %125 = vector.extract_strided_slice %108 {offsets = [32, 0], sizes = [8, 16], strides = [1, 1]} : vector<64x16xf32> to vector<8x16xf32>
    %c7 = arith.constant 7 : index
    %c3_48 = arith.constant 3 : index
    %c0_49 = arith.constant 0 : index
    %126 = vector.load %arg10[%c7, %c3_48, %c0_49] : memref<14x14x16xf32, #tpu.memory_space<vmem>>, vector<1x8x16xf32>
    %127 = vector.shape_cast %126 : vector<1x8x16xf32> to vector<8x16xf32>
    %128 = vector.shape_cast %125 : vector<8x16xf32> to vector<1x8x16xf32>
    tpu.vector_store %arg10[%c7, %c3_48, %c0_49], %128 {strides = array<i32>} : memref<14x14x16xf32, #tpu.memory_space<vmem>>, vector<1x8x16xf32>,
    %129 = vector.extract_strided_slice %108 {offsets = [40, 0], sizes = [8, 16], strides = [1, 1]} : vector<64x16xf32> to vector<8x16xf32>
    %c8_50 = arith.constant 8 : index
    %c3_51 = arith.constant 3 : index
    %c0_52 = arith.constant 0 : index
    %130 = vector.load %arg10[%c8_50, %c3_51, %c0_52] : memref<14x14x16xf32, #tpu.memory_space<vmem>>, vector<1x8x16xf32>
    %131 = vector.shape_cast %130 : vector<1x8x16xf32> to vector<8x16xf32>
    %132 = vector.shape_cast %129 : vector<8x16xf32> to vector<1x8x16xf32>
    tpu.vector_store %arg10[%c8_50, %c3_51, %c0_52], %132 {strides = array<i32>} : memref<14x14x16xf32, #tpu.memory_space<vmem>>, vector<1x8x16xf32>,
    %133 = vector.extract_strided_slice %108 {offsets = [48, 0], sizes = [8, 16], strides = [1, 1]} : vector<64x16xf32> to vector<8x16xf32>
    %c9 = arith.constant 9 : index
    %c3_53 = arith.constant 3 : index
    %c0_54 = arith.constant 0 : index
    %134 = vector.load %arg10[%c9, %c3_53, %c0_54] : memref<14x14x16xf32, #tpu.memory_space<vmem>>, vector<1x8x16xf32>
    %135 = vector.shape_cast %134 : vector<1x8x16xf32> to vector<8x16xf32>
    %136 = vector.shape_cast %133 : vector<8x16xf32> to vector<1x8x16xf32>
    tpu.vector_store %arg10[%c9, %c3_53, %c0_54], %136 {strides = array<i32>} : memref<14x14x16xf32, #tpu.memory_space<vmem>>, vector<1x8x16xf32>,
    %137 = vector.extract_strided_slice %108 {offsets = [56, 0], sizes = [8, 16], strides = [1, 1]} : vector<64x16xf32> to vector<8x16xf32>
    %c10 = arith.constant 10 : index
    %c3_55 = arith.constant 3 : index
    %c0_56 = arith.constant 0 : index
    %138 = vector.load %arg10[%c10, %c3_55, %c0_56] : memref<14x14x16xf32, #tpu.memory_space<vmem>>, vector<1x8x16xf32>
    %139 = vector.shape_cast %138 : vector<1x8x16xf32> to vector<8x16xf32>
    %140 = vector.shape_cast %137 : vector<8x16xf32> to vector<1x8x16xf32>
    tpu.vector_store %arg10[%c10, %c3_55, %c0_56], %140 {strides = array<i32>} : memref<14x14x16xf32, #tpu.memory_space<vmem>>, vector<1x8x16xf32>,
    %c0_57 = arith.constant 0 : index
    %c0_58 = arith.constant 0 : index
    %141 = vector.load %arg7[%c0_57, %c0_58] : memref<49x16xf32, #tpu.memory_space<vmem>>, vector<49x16xf32>
    %c0_59 = arith.constant 0 : index
    %c0_60 = arith.constant 0 : index
    %c0_61 = arith.constant 0 : index
    %142 = vector.load %arg8[%c0_59, %c0_60, %c0_61] : memref<1x1x16xf32, #tpu.memory_space<vmem>>, vector<1x1x16xf32>
    %cst_62 = arith.constant 0.000000e+00 : f32
    %143 = vector.broadcast %cst_62 : f32 to vector<8x8x16xf32>
    %c0_63 = arith.constant 0 : index
    %c0_64 = arith.constant 0 : index
    %c0_65 = arith.constant 0 : index
    %144 = vector.load %arg10[%c0_63, %c0_64, %c0_65] : memref<14x14x16xf32, #tpu.memory_space<vmem>>, vector<8x8x16xf32>
    %145 = vector.extract_strided_slice %141 {offsets = [0, 0], sizes = [1, 16], strides = [1, 1]} : vector<49x16xf32> to vector<1x16xf32>
    %146 = vector.shape_cast %145 : vector<1x16xf32> to vector<16xf32>
    %147 = vector.shape_cast %146 : vector<16xf32> to vector<1x1x16xf32>
    %148 = vector.broadcast %147 : vector<1x1x16xf32> to vector<8x8x16xf32>
    %149 = arith.mulf %144, %148 : vector<8x8x16xf32>
    %150 = arith.addf %143, %149 : vector<8x8x16xf32>
    %c0_66 = arith.constant 0 : index
    %c1 = arith.constant 1 : index
    %c0_67 = arith.constant 0 : index
    %151 = vector.load %arg10[%c0_66, %c1, %c0_67] : memref<14x14x16xf32, #tpu.memory_space<vmem>>, vector<8x8x16xf32>
    %152 = vector.extract_strided_slice %141 {offsets = [1, 0], sizes = [1, 16], strides = [1, 1]} : vector<49x16xf32> to vector<1x16xf32>
    %153 = vector.shape_cast %152 : vector<1x16xf32> to vector<16xf32>
    %154 = vector.shape_cast %153 : vector<16xf32> to vector<1x1x16xf32>
    %155 = vector.broadcast %154 : vector<1x1x16xf32> to vector<8x8x16xf32>
    %156 = arith.mulf %151, %155 : vector<8x8x16xf32>
    %157 = arith.addf %150, %156 : vector<8x8x16xf32>
    %c0_68 = arith.constant 0 : index
    %c2 = arith.constant 2 : index
    %c0_69 = arith.constant 0 : index
    %158 = vector.load %arg10[%c0_68, %c2, %c0_69] : memref<14x14x16xf32, #tpu.memory_space<vmem>>, vector<8x8x16xf32>
    %159 = vector.extract_strided_slice %141 {offsets = [2, 0], sizes = [1, 16], strides = [1, 1]} : vector<49x16xf32> to vector<1x16xf32>
    %160 = vector.shape_cast %159 : vector<1x16xf32> to vector<16xf32>
    %161 = vector.shape_cast %160 : vector<16xf32> to vector<1x1x16xf32>
    %162 = vector.broadcast %161 : vector<1x1x16xf32> to vector<8x8x16xf32>
    %163 = arith.mulf %158, %162 : vector<8x8x16xf32>
    %164 = arith.addf %157, %163 : vector<8x8x16xf32>
    %c0_70 = arith.constant 0 : index
    %c3_71 = arith.constant 3 : index
    %c0_72 = arith.constant 0 : index
    %165 = vector.load %arg10[%c0_70, %c3_71, %c0_72] : memref<14x14x16xf32, #tpu.memory_space<vmem>>, vector<8x8x16xf32>
    %166 = vector.extract_strided_slice %141 {offsets = [3, 0], sizes = [1, 16], strides = [1, 1]} : vector<49x16xf32> to vector<1x16xf32>
    %167 = vector.shape_cast %166 : vector<1x16xf32> to vector<16xf32>
    %168 = vector.shape_cast %167 : vector<16xf32> to vector<1x1x16xf32>
    %169 = vector.broadcast %168 : vector<1x1x16xf32> to vector<8x8x16xf32>
    %170 = arith.mulf %165, %169 : vector<8x8x16xf32>
    %171 = arith.addf %164, %170 : vector<8x8x16xf32>
    %c0_73 = arith.constant 0 : index
    %c4_74 = arith.constant 4 : index
    %c0_75 = arith.constant 0 : index
    %172 = vector.load %arg10[%c0_73, %c4_74, %c0_75] : memref<14x14x16xf32, #tpu.memory_space<vmem>>, vector<8x8x16xf32>
    %173 = vector.extract_strided_slice %141 {offsets = [4, 0], sizes = [1, 16], strides = [1, 1]} : vector<49x16xf32> to vector<1x16xf32>
    %174 = vector.shape_cast %173 : vector<1x16xf32> to vector<16xf32>
    %175 = vector.shape_cast %174 : vector<16xf32> to vector<1x1x16xf32>
    %176 = vector.broadcast %175 : vector<1x1x16xf32> to vector<8x8x16xf32>
    %177 = arith.mulf %172, %176 : vector<8x8x16xf32>
    %178 = arith.addf %171, %177 : vector<8x8x16xf32>
    %c0_76 = arith.constant 0 : index
    %c5_77 = arith.constant 5 : index
    %c0_78 = arith.constant 0 : index
    %179 = vector.load %arg10[%c0_76, %c5_77, %c0_78] : memref<14x14x16xf32, #tpu.memory_space<vmem>>, vector<8x8x16xf32>
    %180 = vector.extract_strided_slice %141 {offsets = [5, 0], sizes = [1, 16], strides = [1, 1]} : vector<49x16xf32> to vector<1x16xf32>
    %181 = vector.shape_cast %180 : vector<1x16xf32> to vector<16xf32>
    %182 = vector.shape_cast %181 : vector<16xf32> to vector<1x1x16xf32>
    %183 = vector.broadcast %182 : vector<1x1x16xf32> to vector<8x8x16xf32>
    %184 = arith.mulf %179, %183 : vector<8x8x16xf32>
    %185 = arith.addf %178, %184 : vector<8x8x16xf32>
    %c0_79 = arith.constant 0 : index
    %c6_80 = arith.constant 6 : index
    %c0_81 = arith.constant 0 : index
    %186 = vector.load %arg10[%c0_79, %c6_80, %c0_81] : memref<14x14x16xf32, #tpu.memory_space<vmem>>, vector<8x8x16xf32>
    %187 = vector.extract_strided_slice %141 {offsets = [6, 0], sizes = [1, 16], strides = [1, 1]} : vector<49x16xf32> to vector<1x16xf32>
    %188 = vector.shape_cast %187 : vector<1x16xf32> to vector<16xf32>
    %189 = vector.shape_cast %188 : vector<16xf32> to vector<1x1x16xf32>
    %190 = vector.broadcast %189 : vector<1x1x16xf32> to vector<8x8x16xf32>
    %191 = arith.mulf %186, %190 : vector<8x8x16xf32>
    %192 = arith.addf %185, %191 : vector<8x8x16xf32>
    %c1_82 = arith.constant 1 : index
    %c0_83 = arith.constant 0 : index
    %c0_84 = arith.constant 0 : index
    %193 = vector.load %arg10[%c1_82, %c0_83, %c0_84] : memref<14x14x16xf32, #tpu.memory_space<vmem>>, vector<8x8x16xf32>
    %194 = vector.extract_strided_slice %141 {offsets = [7, 0], sizes = [1, 16], strides = [1, 1]} : vector<49x16xf32> to vector<1x16xf32>
    %195 = vector.shape_cast %194 : vector<1x16xf32> to vector<16xf32>
    %196 = vector.shape_cast %195 : vector<16xf32> to vector<1x1x16xf32>
    %197 = vector.broadcast %196 : vector<1x1x16xf32> to vector<8x8x16xf32>
    %198 = arith.mulf %193, %197 : vector<8x8x16xf32>
    %199 = arith.addf %192, %198 : vector<8x8x16xf32>
    %c1_85 = arith.constant 1 : index
    %c1_86 = arith.constant 1 : index
    %c0_87 = arith.constant 0 : index
    %200 = vector.load %arg10[%c1_85, %c1_86, %c0_87] : memref<14x14x16xf32, #tpu.memory_space<vmem>>, vector<8x8x16xf32>
    %201 = vector.extract_strided_slice %141 {offsets = [8, 0], sizes = [1, 16], strides = [1, 1]} : vector<49x16xf32> to vector<1x16xf32>
    %202 = vector.shape_cast %201 : vector<1x16xf32> to vector<16xf32>
    %203 = vector.shape_cast %202 : vector<16xf32> to vector<1x1x16xf32>
    %204 = vector.broadcast %203 : vector<1x1x16xf32> to vector<8x8x16xf32>
    %205 = arith.mulf %200, %204 : vector<8x8x16xf32>
    %206 = arith.addf %199, %205 : vector<8x8x16xf32>
    %c1_88 = arith.constant 1 : index
    %c2_89 = arith.constant 2 : index
    %c0_90 = arith.constant 0 : index
    %207 = vector.load %arg10[%c1_88, %c2_89, %c0_90] : memref<14x14x16xf32, #tpu.memory_space<vmem>>, vector<8x8x16xf32>
    %208 = vector.extract_strided_slice %141 {offsets = [9, 0], sizes = [1, 16], strides = [1, 1]} : vector<49x16xf32> to vector<1x16xf32>
    %209 = vector.shape_cast %208 : vector<1x16xf32> to vector<16xf32>
    %210 = vector.shape_cast %209 : vector<16xf32> to vector<1x1x16xf32>
    %211 = vector.broadcast %210 : vector<1x1x16xf32> to vector<8x8x16xf32>
    %212 = arith.mulf %207, %211 : vector<8x8x16xf32>
    %213 = arith.addf %206, %212 : vector<8x8x16xf32>
    %c1_91 = arith.constant 1 : index
    %c3_92 = arith.constant 3 : index
    %c0_93 = arith.constant 0 : index
    %214 = vector.load %arg10[%c1_91, %c3_92, %c0_93] : memref<14x14x16xf32, #tpu.memory_space<vmem>>, vector<8x8x16xf32>
    %215 = vector.extract_strided_slice %141 {offsets = [10, 0], sizes = [1, 16], strides = [1, 1]} : vector<49x16xf32> to vector<1x16xf32>
    %216 = vector.shape_cast %215 : vector<1x16xf32> to vector<16xf32>
    %217 = vector.shape_cast %216 : vector<16xf32> to vector<1x1x16xf32>
    %218 = vector.broadcast %217 : vector<1x1x16xf32> to vector<8x8x16xf32>
    %219 = arith.mulf %214, %218 : vector<8x8x16xf32>
    %220 = arith.addf %213, %219 : vector<8x8x16xf32>
    %c1_94 = arith.constant 1 : index
    %c4_95 = arith.constant 4 : index
    %c0_96 = arith.constant 0 : index
    %221 = vector.load %arg10[%c1_94, %c4_95, %c0_96] : memref<14x14x16xf32, #tpu.memory_space<vmem>>, vector<8x8x16xf32>
    %222 = vector.extract_strided_slice %141 {offsets = [11, 0], sizes = [1, 16], strides = [1, 1]} : vector<49x16xf32> to vector<1x16xf32>
    %223 = vector.shape_cast %222 : vector<1x16xf32> to vector<16xf32>
    %224 = vector.shape_cast %223 : vector<16xf32> to vector<1x1x16xf32>
    %225 = vector.broadcast %224 : vector<1x1x16xf32> to vector<8x8x16xf32>
    %226 = arith.mulf %221, %225 : vector<8x8x16xf32>
    %227 = arith.addf %220, %226 : vector<8x8x16xf32>
    %c1_97 = arith.constant 1 : index
    %c5_98 = arith.constant 5 : index
    %c0_99 = arith.constant 0 : index
    %228 = vector.load %arg10[%c1_97, %c5_98, %c0_99] : memref<14x14x16xf32, #tpu.memory_space<vmem>>, vector<8x8x16xf32>
    %229 = vector.extract_strided_slice %141 {offsets = [12, 0], sizes = [1, 16], strides = [1, 1]} : vector<49x16xf32> to vector<1x16xf32>
    %230 = vector.shape_cast %229 : vector<1x16xf32> to vector<16xf32>
    %231 = vector.shape_cast %230 : vector<16xf32> to vector<1x1x16xf32>
    %232 = vector.broadcast %231 : vector<1x1x16xf32> to vector<8x8x16xf32>
    %233 = arith.mulf %228, %232 : vector<8x8x16xf32>
    %234 = arith.addf %227, %233 : vector<8x8x16xf32>
    %c1_100 = arith.constant 1 : index
    %c6_101 = arith.constant 6 : index
    %c0_102 = arith.constant 0 : index
    %235 = vector.load %arg10[%c1_100, %c6_101, %c0_102] : memref<14x14x16xf32, #tpu.memory_space<vmem>>, vector<8x8x16xf32>
    %236 = vector.extract_strided_slice %141 {offsets = [13, 0], sizes = [1, 16], strides = [1, 1]} : vector<49x16xf32> to vector<1x16xf32>
    %237 = vector.shape_cast %236 : vector<1x16xf32> to vector<16xf32>
    %238 = vector.shape_cast %237 : vector<16xf32> to vector<1x1x16xf32>
    %239 = vector.broadcast %238 : vector<1x1x16xf32> to vector<8x8x16xf32>
    %240 = arith.mulf %235, %239 : vector<8x8x16xf32>
    %241 = arith.addf %234, %240 : vector<8x8x16xf32>
    %c2_103 = arith.constant 2 : index
    %c0_104 = arith.constant 0 : index
    %c0_105 = arith.constant 0 : index
    %242 = vector.load %arg10[%c2_103, %c0_104, %c0_105] : memref<14x14x16xf32, #tpu.memory_space<vmem>>, vector<8x8x16xf32>
    %243 = vector.extract_strided_slice %141 {offsets = [14, 0], sizes = [1, 16], strides = [1, 1]} : vector<49x16xf32> to vector<1x16xf32>
    %244 = vector.shape_cast %243 : vector<1x16xf32> to vector<16xf32>
    %245 = vector.shape_cast %244 : vector<16xf32> to vector<1x1x16xf32>
    %246 = vector.broadcast %245 : vector<1x1x16xf32> to vector<8x8x16xf32>
    %247 = arith.mulf %242, %246 : vector<8x8x16xf32>
    %248 = arith.addf %241, %247 : vector<8x8x16xf32>
    %c2_106 = arith.constant 2 : index
    %c1_107 = arith.constant 1 : index
    %c0_108 = arith.constant 0 : index
    %249 = vector.load %arg10[%c2_106, %c1_107, %c0_108] : memref<14x14x16xf32, #tpu.memory_space<vmem>>, vector<8x8x16xf32>
    %250 = vector.extract_strided_slice %141 {offsets = [15, 0], sizes = [1, 16], strides = [1, 1]} : vector<49x16xf32> to vector<1x16xf32>
    %251 = vector.shape_cast %250 : vector<1x16xf32> to vector<16xf32>
    %252 = vector.shape_cast %251 : vector<16xf32> to vector<1x1x16xf32>
    %253 = vector.broadcast %252 : vector<1x1x16xf32> to vector<8x8x16xf32>
    %254 = arith.mulf %249, %253 : vector<8x8x16xf32>
    %255 = arith.addf %248, %254 : vector<8x8x16xf32>
    %c2_109 = arith.constant 2 : index
    %c2_110 = arith.constant 2 : index
    %c0_111 = arith.constant 0 : index
    %256 = vector.load %arg10[%c2_109, %c2_110, %c0_111] : memref<14x14x16xf32, #tpu.memory_space<vmem>>, vector<8x8x16xf32>
    %257 = vector.extract_strided_slice %141 {offsets = [16, 0], sizes = [1, 16], strides = [1, 1]} : vector<49x16xf32> to vector<1x16xf32>
    %258 = vector.shape_cast %257 : vector<1x16xf32> to vector<16xf32>
    %259 = vector.shape_cast %258 : vector<16xf32> to vector<1x1x16xf32>
    %260 = vector.broadcast %259 : vector<1x1x16xf32> to vector<8x8x16xf32>
    %261 = arith.mulf %256, %260 : vector<8x8x16xf32>
    %262 = arith.addf %255, %261 : vector<8x8x16xf32>
    %c2_112 = arith.constant 2 : index
    %c3_113 = arith.constant 3 : index
    %c0_114 = arith.constant 0 : index
    %263 = vector.load %arg10[%c2_112, %c3_113, %c0_114] : memref<14x14x16xf32, #tpu.memory_space<vmem>>, vector<8x8x16xf32>
    %264 = vector.extract_strided_slice %141 {offsets = [17, 0], sizes = [1, 16], strides = [1, 1]} : vector<49x16xf32> to vector<1x16xf32>
    %265 = vector.shape_cast %264 : vector<1x16xf32> to vector<16xf32>
    %266 = vector.shape_cast %265 : vector<16xf32> to vector<1x1x16xf32>
    %267 = vector.broadcast %266 : vector<1x1x16xf32> to vector<8x8x16xf32>
    %268 = arith.mulf %263, %267 : vector<8x8x16xf32>
    %269 = arith.addf %262, %268 : vector<8x8x16xf32>
    %c2_115 = arith.constant 2 : index
    %c4_116 = arith.constant 4 : index
    %c0_117 = arith.constant 0 : index
    %270 = vector.load %arg10[%c2_115, %c4_116, %c0_117] : memref<14x14x16xf32, #tpu.memory_space<vmem>>, vector<8x8x16xf32>
    %271 = vector.extract_strided_slice %141 {offsets = [18, 0], sizes = [1, 16], strides = [1, 1]} : vector<49x16xf32> to vector<1x16xf32>
    %272 = vector.shape_cast %271 : vector<1x16xf32> to vector<16xf32>
    %273 = vector.shape_cast %272 : vector<16xf32> to vector<1x1x16xf32>
    %274 = vector.broadcast %273 : vector<1x1x16xf32> to vector<8x8x16xf32>
    %275 = arith.mulf %270, %274 : vector<8x8x16xf32>
    %276 = arith.addf %269, %275 : vector<8x8x16xf32>
    %c2_118 = arith.constant 2 : index
    %c5_119 = arith.constant 5 : index
    %c0_120 = arith.constant 0 : index
    %277 = vector.load %arg10[%c2_118, %c5_119, %c0_120] : memref<14x14x16xf32, #tpu.memory_space<vmem>>, vector<8x8x16xf32>
    %278 = vector.extract_strided_slice %141 {offsets = [19, 0], sizes = [1, 16], strides = [1, 1]} : vector<49x16xf32> to vector<1x16xf32>
    %279 = vector.shape_cast %278 : vector<1x16xf32> to vector<16xf32>
    %280 = vector.shape_cast %279 : vector<16xf32> to vector<1x1x16xf32>
    %281 = vector.broadcast %280 : vector<1x1x16xf32> to vector<8x8x16xf32>
    %282 = arith.mulf %277, %281 : vector<8x8x16xf32>
    %283 = arith.addf %276, %282 : vector<8x8x16xf32>
    %c2_121 = arith.constant 2 : index
    %c6_122 = arith.constant 6 : index
    %c0_123 = arith.constant 0 : index
    %284 = vector.load %arg10[%c2_121, %c6_122, %c0_123] : memref<14x14x16xf32, #tpu.memory_space<vmem>>, vector<8x8x16xf32>
    %285 = vector.extract_strided_slice %141 {offsets = [20, 0], sizes = [1, 16], strides = [1, 1]} : vector<49x16xf32> to vector<1x16xf32>
    %286 = vector.shape_cast %285 : vector<1x16xf32> to vector<16xf32>
    %287 = vector.shape_cast %286 : vector<16xf32> to vector<1x1x16xf32>
    %288 = vector.broadcast %287 : vector<1x1x16xf32> to vector<8x8x16xf32>
    %289 = arith.mulf %284, %288 : vector<8x8x16xf32>
    %290 = arith.addf %283, %289 : vector<8x8x16xf32>
    %c3_124 = arith.constant 3 : index
    %c0_125 = arith.constant 0 : index
    %c0_126 = arith.constant 0 : index
    %291 = vector.load %arg10[%c3_124, %c0_125, %c0_126] : memref<14x14x16xf32, #tpu.memory_space<vmem>>, vector<8x8x16xf32>
    %292 = vector.extract_strided_slice %141 {offsets = [21, 0], sizes = [1, 16], strides = [1, 1]} : vector<49x16xf32> to vector<1x16xf32>
    %293 = vector.shape_cast %292 : vector<1x16xf32> to vector<16xf32>
    %294 = vector.shape_cast %293 : vector<16xf32> to vector<1x1x16xf32>
    %295 = vector.broadcast %294 : vector<1x1x16xf32> to vector<8x8x16xf32>
    %296 = arith.mulf %291, %295 : vector<8x8x16xf32>
    %297 = arith.addf %290, %296 : vector<8x8x16xf32>
    %c3_127 = arith.constant 3 : index
    %c1_128 = arith.constant 1 : index
    %c0_129 = arith.constant 0 : index
    %298 = vector.load %arg10[%c3_127, %c1_128, %c0_129] : memref<14x14x16xf32, #tpu.memory_space<vmem>>, vector<8x8x16xf32>
    %299 = vector.extract_strided_slice %141 {offsets = [22, 0], sizes = [1, 16], strides = [1, 1]} : vector<49x16xf32> to vector<1x16xf32>
    %300 = vector.shape_cast %299 : vector<1x16xf32> to vector<16xf32>
    %301 = vector.shape_cast %300 : vector<16xf32> to vector<1x1x16xf32>
    %302 = vector.broadcast %301 : vector<1x1x16xf32> to vector<8x8x16xf32>
    %303 = arith.mulf %298, %302 : vector<8x8x16xf32>
    %304 = arith.addf %297, %303 : vector<8x8x16xf32>
    %c3_130 = arith.constant 3 : index
    %c2_131 = arith.constant 2 : index
    %c0_132 = arith.constant 0 : index
    %305 = vector.load %arg10[%c3_130, %c2_131, %c0_132] : memref<14x14x16xf32, #tpu.memory_space<vmem>>, vector<8x8x16xf32>
    %306 = vector.extract_strided_slice %141 {offsets = [23, 0], sizes = [1, 16], strides = [1, 1]} : vector<49x16xf32> to vector<1x16xf32>
    %307 = vector.shape_cast %306 : vector<1x16xf32> to vector<16xf32>
    %308 = vector.shape_cast %307 : vector<16xf32> to vector<1x1x16xf32>
    %309 = vector.broadcast %308 : vector<1x1x16xf32> to vector<8x8x16xf32>
    %310 = arith.mulf %305, %309 : vector<8x8x16xf32>
    %311 = arith.addf %304, %310 : vector<8x8x16xf32>
    %c3_133 = arith.constant 3 : index
    %c3_134 = arith.constant 3 : index
    %c0_135 = arith.constant 0 : index
    %312 = vector.load %arg10[%c3_133, %c3_134, %c0_135] : memref<14x14x16xf32, #tpu.memory_space<vmem>>, vector<8x8x16xf32>
    %313 = vector.extract_strided_slice %141 {offsets = [24, 0], sizes = [1, 16], strides = [1, 1]} : vector<49x16xf32> to vector<1x16xf32>
    %314 = vector.shape_cast %313 : vector<1x16xf32> to vector<16xf32>
    %315 = vector.shape_cast %314 : vector<16xf32> to vector<1x1x16xf32>
    %316 = vector.broadcast %315 : vector<1x1x16xf32> to vector<8x8x16xf32>
    %317 = arith.mulf %312, %316 : vector<8x8x16xf32>
    %318 = arith.addf %311, %317 : vector<8x8x16xf32>
    %c3_136 = arith.constant 3 : index
    %c4_137 = arith.constant 4 : index
    %c0_138 = arith.constant 0 : index
    %319 = vector.load %arg10[%c3_136, %c4_137, %c0_138] : memref<14x14x16xf32, #tpu.memory_space<vmem>>, vector<8x8x16xf32>
    %320 = vector.extract_strided_slice %141 {offsets = [25, 0], sizes = [1, 16], strides = [1, 1]} : vector<49x16xf32> to vector<1x16xf32>
    %321 = vector.shape_cast %320 : vector<1x16xf32> to vector<16xf32>
    %322 = vector.shape_cast %321 : vector<16xf32> to vector<1x1x16xf32>
    %323 = vector.broadcast %322 : vector<1x1x16xf32> to vector<8x8x16xf32>
    %324 = arith.mulf %319, %323 : vector<8x8x16xf32>
    %325 = arith.addf %318, %324 : vector<8x8x16xf32>
    %c3_139 = arith.constant 3 : index
    %c5_140 = arith.constant 5 : index
    %c0_141 = arith.constant 0 : index
    %326 = vector.load %arg10[%c3_139, %c5_140, %c0_141] : memref<14x14x16xf32, #tpu.memory_space<vmem>>, vector<8x8x16xf32>
    %327 = vector.extract_strided_slice %141 {offsets = [26, 0], sizes = [1, 16], strides = [1, 1]} : vector<49x16xf32> to vector<1x16xf32>
    %328 = vector.shape_cast %327 : vector<1x16xf32> to vector<16xf32>
    %329 = vector.shape_cast %328 : vector<16xf32> to vector<1x1x16xf32>
    %330 = vector.broadcast %329 : vector<1x1x16xf32> to vector<8x8x16xf32>
    %331 = arith.mulf %326, %330 : vector<8x8x16xf32>
    %332 = arith.addf %325, %331 : vector<8x8x16xf32>
    %c3_142 = arith.constant 3 : index
    %c6_143 = arith.constant 6 : index
    %c0_144 = arith.constant 0 : index
    %333 = vector.load %arg10[%c3_142, %c6_143, %c0_144] : memref<14x14x16xf32, #tpu.memory_space<vmem>>, vector<8x8x16xf32>
    %334 = vector.extract_strided_slice %141 {offsets = [27, 0], sizes = [1, 16], strides = [1, 1]} : vector<49x16xf32> to vector<1x16xf32>
    %335 = vector.shape_cast %334 : vector<1x16xf32> to vector<16xf32>
    %336 = vector.shape_cast %335 : vector<16xf32> to vector<1x1x16xf32>
    %337 = vector.broadcast %336 : vector<1x1x16xf32> to vector<8x8x16xf32>
    %338 = arith.mulf %333, %337 : vector<8x8x16xf32>
    %339 = arith.addf %332, %338 : vector<8x8x16xf32>
    %c4_145 = arith.constant 4 : index
    %c0_146 = arith.constant 0 : index
    %c0_147 = arith.constant 0 : index
    %340 = vector.load %arg10[%c4_145, %c0_146, %c0_147] : memref<14x14x16xf32, #tpu.memory_space<vmem>>, vector<8x8x16xf32>
    %341 = vector.extract_strided_slice %141 {offsets = [28, 0], sizes = [1, 16], strides = [1, 1]} : vector<49x16xf32> to vector<1x16xf32>
    %342 = vector.shape_cast %341 : vector<1x16xf32> to vector<16xf32>
    %343 = vector.shape_cast %342 : vector<16xf32> to vector<1x1x16xf32>
    %344 = vector.broadcast %343 : vector<1x1x16xf32> to vector<8x8x16xf32>
    %345 = arith.mulf %340, %344 : vector<8x8x16xf32>
    %346 = arith.addf %339, %345 : vector<8x8x16xf32>
    %c4_148 = arith.constant 4 : index
    %c1_149 = arith.constant 1 : index
    %c0_150 = arith.constant 0 : index
    %347 = vector.load %arg10[%c4_148, %c1_149, %c0_150] : memref<14x14x16xf32, #tpu.memory_space<vmem>>, vector<8x8x16xf32>
    %348 = vector.extract_strided_slice %141 {offsets = [29, 0], sizes = [1, 16], strides = [1, 1]} : vector<49x16xf32> to vector<1x16xf32>
    %349 = vector.shape_cast %348 : vector<1x16xf32> to vector<16xf32>
    %350 = vector.shape_cast %349 : vector<16xf32> to vector<1x1x16xf32>
    %351 = vector.broadcast %350 : vector<1x1x16xf32> to vector<8x8x16xf32>
    %352 = arith.mulf %347, %351 : vector<8x8x16xf32>
    %353 = arith.addf %346, %352 : vector<8x8x16xf32>
    %c4_151 = arith.constant 4 : index
    %c2_152 = arith.constant 2 : index
    %c0_153 = arith.constant 0 : index
    %354 = vector.load %arg10[%c4_151, %c2_152, %c0_153] : memref<14x14x16xf32, #tpu.memory_space<vmem>>, vector<8x8x16xf32>
    %355 = vector.extract_strided_slice %141 {offsets = [30, 0], sizes = [1, 16], strides = [1, 1]} : vector<49x16xf32> to vector<1x16xf32>
    %356 = vector.shape_cast %355 : vector<1x16xf32> to vector<16xf32>
    %357 = vector.shape_cast %356 : vector<16xf32> to vector<1x1x16xf32>
    %358 = vector.broadcast %357 : vector<1x1x16xf32> to vector<8x8x16xf32>
    %359 = arith.mulf %354, %358 : vector<8x8x16xf32>
    %360 = arith.addf %353, %359 : vector<8x8x16xf32>
    %c4_154 = arith.constant 4 : index
    %c3_155 = arith.constant 3 : index
    %c0_156 = arith.constant 0 : index
    %361 = vector.load %arg10[%c4_154, %c3_155, %c0_156] : memref<14x14x16xf32, #tpu.memory_space<vmem>>, vector<8x8x16xf32>
    %362 = vector.extract_strided_slice %141 {offsets = [31, 0], sizes = [1, 16], strides = [1, 1]} : vector<49x16xf32> to vector<1x16xf32>
    %363 = vector.shape_cast %362 : vector<1x16xf32> to vector<16xf32>
    %364 = vector.shape_cast %363 : vector<16xf32> to vector<1x1x16xf32>
    %365 = vector.broadcast %364 : vector<1x1x16xf32> to vector<8x8x16xf32>
    %366 = arith.mulf %361, %365 : vector<8x8x16xf32>
    %367 = arith.addf %360, %366 : vector<8x8x16xf32>
    %c4_157 = arith.constant 4 : index
    %c4_158 = arith.constant 4 : index
    %c0_159 = arith.constant 0 : index
    %368 = vector.load %arg10[%c4_157, %c4_158, %c0_159] : memref<14x14x16xf32, #tpu.memory_space<vmem>>, vector<8x8x16xf32>
    %369 = vector.extract_strided_slice %141 {offsets = [32, 0], sizes = [1, 16], strides = [1, 1]} : vector<49x16xf32> to vector<1x16xf32>
    %370 = vector.shape_cast %369 : vector<1x16xf32> to vector<16xf32>
    %371 = vector.shape_cast %370 : vector<16xf32> to vector<1x1x16xf32>
    %372 = vector.broadcast %371 : vector<1x1x16xf32> to vector<8x8x16xf32>
    %373 = arith.mulf %368, %372 : vector<8x8x16xf32>
    %374 = arith.addf %367, %373 : vector<8x8x16xf32>
    %c4_160 = arith.constant 4 : index
    %c5_161 = arith.constant 5 : index
    %c0_162 = arith.constant 0 : index
    %375 = vector.load %arg10[%c4_160, %c5_161, %c0_162] : memref<14x14x16xf32, #tpu.memory_space<vmem>>, vector<8x8x16xf32>
    %376 = vector.extract_strided_slice %141 {offsets = [33, 0], sizes = [1, 16], strides = [1, 1]} : vector<49x16xf32> to vector<1x16xf32>
    %377 = vector.shape_cast %376 : vector<1x16xf32> to vector<16xf32>
    %378 = vector.shape_cast %377 : vector<16xf32> to vector<1x1x16xf32>
    %379 = vector.broadcast %378 : vector<1x1x16xf32> to vector<8x8x16xf32>
    %380 = arith.mulf %375, %379 : vector<8x8x16xf32>
    %381 = arith.addf %374, %380 : vector<8x8x16xf32>
    %c4_163 = arith.constant 4 : index
    %c6_164 = arith.constant 6 : index
    %c0_165 = arith.constant 0 : index
    %382 = vector.load %arg10[%c4_163, %c6_164, %c0_165] : memref<14x14x16xf32, #tpu.memory_space<vmem>>, vector<8x8x16xf32>
    %383 = vector.extract_strided_slice %141 {offsets = [34, 0], sizes = [1, 16], strides = [1, 1]} : vector<49x16xf32> to vector<1x16xf32>
    %384 = vector.shape_cast %383 : vector<1x16xf32> to vector<16xf32>
    %385 = vector.shape_cast %384 : vector<16xf32> to vector<1x1x16xf32>
    %386 = vector.broadcast %385 : vector<1x1x16xf32> to vector<8x8x16xf32>
    %387 = arith.mulf %382, %386 : vector<8x8x16xf32>
    %388 = arith.addf %381, %387 : vector<8x8x16xf32>
    %c5_166 = arith.constant 5 : index
    %c0_167 = arith.constant 0 : index
    %c0_168 = arith.constant 0 : index
    %389 = vector.load %arg10[%c5_166, %c0_167, %c0_168] : memref<14x14x16xf32, #tpu.memory_space<vmem>>, vector<8x8x16xf32>
    %390 = vector.extract_strided_slice %141 {offsets = [35, 0], sizes = [1, 16], strides = [1, 1]} : vector<49x16xf32> to vector<1x16xf32>
    %391 = vector.shape_cast %390 : vector<1x16xf32> to vector<16xf32>
    %392 = vector.shape_cast %391 : vector<16xf32> to vector<1x1x16xf32>
    %393 = vector.broadcast %392 : vector<1x1x16xf32> to vector<8x8x16xf32>
    %394 = arith.mulf %389, %393 : vector<8x8x16xf32>
    %395 = arith.addf %388, %394 : vector<8x8x16xf32>
    %c5_169 = arith.constant 5 : index
    %c1_170 = arith.constant 1 : index
    %c0_171 = arith.constant 0 : index
    %396 = vector.load %arg10[%c5_169, %c1_170, %c0_171] : memref<14x14x16xf32, #tpu.memory_space<vmem>>, vector<8x8x16xf32>
    %397 = vector.extract_strided_slice %141 {offsets = [36, 0], sizes = [1, 16], strides = [1, 1]} : vector<49x16xf32> to vector<1x16xf32>
    %398 = vector.shape_cast %397 : vector<1x16xf32> to vector<16xf32>
    %399 = vector.shape_cast %398 : vector<16xf32> to vector<1x1x16xf32>
    %400 = vector.broadcast %399 : vector<1x1x16xf32> to vector<8x8x16xf32>
    %401 = arith.mulf %396, %400 : vector<8x8x16xf32>
    %402 = arith.addf %395, %401 : vector<8x8x16xf32>
    %c5_172 = arith.constant 5 : index
    %c2_173 = arith.constant 2 : index
    %c0_174 = arith.constant 0 : index
    %403 = vector.load %arg10[%c5_172, %c2_173, %c0_174] : memref<14x14x16xf32, #tpu.memory_space<vmem>>, vector<8x8x16xf32>
    %404 = vector.extract_strided_slice %141 {offsets = [37, 0], sizes = [1, 16], strides = [1, 1]} : vector<49x16xf32> to vector<1x16xf32>
    %405 = vector.shape_cast %404 : vector<1x16xf32> to vector<16xf32>
    %406 = vector.shape_cast %405 : vector<16xf32> to vector<1x1x16xf32>
    %407 = vector.broadcast %406 : vector<1x1x16xf32> to vector<8x8x16xf32>
    %408 = arith.mulf %403, %407 : vector<8x8x16xf32>
    %409 = arith.addf %402, %408 : vector<8x8x16xf32>
    %c5_175 = arith.constant 5 : index
    %c3_176 = arith.constant 3 : index
    %c0_177 = arith.constant 0 : index
    %410 = vector.load %arg10[%c5_175, %c3_176, %c0_177] : memref<14x14x16xf32, #tpu.memory_space<vmem>>, vector<8x8x16xf32>
    %411 = vector.extract_strided_slice %141 {offsets = [38, 0], sizes = [1, 16], strides = [1, 1]} : vector<49x16xf32> to vector<1x16xf32>
    %412 = vector.shape_cast %411 : vector<1x16xf32> to vector<16xf32>
    %413 = vector.shape_cast %412 : vector<16xf32> to vector<1x1x16xf32>
    %414 = vector.broadcast %413 : vector<1x1x16xf32> to vector<8x8x16xf32>
    %415 = arith.mulf %410, %414 : vector<8x8x16xf32>
    %416 = arith.addf %409, %415 : vector<8x8x16xf32>
    %c5_178 = arith.constant 5 : index
    %c4_179 = arith.constant 4 : index
    %c0_180 = arith.constant 0 : index
    %417 = vector.load %arg10[%c5_178, %c4_179, %c0_180] : memref<14x14x16xf32, #tpu.memory_space<vmem>>, vector<8x8x16xf32>
    %418 = vector.extract_strided_slice %141 {offsets = [39, 0], sizes = [1, 16], strides = [1, 1]} : vector<49x16xf32> to vector<1x16xf32>
    %419 = vector.shape_cast %418 : vector<1x16xf32> to vector<16xf32>
    %420 = vector.shape_cast %419 : vector<16xf32> to vector<1x1x16xf32>
    %421 = vector.broadcast %420 : vector<1x1x16xf32> to vector<8x8x16xf32>
    %422 = arith.mulf %417, %421 : vector<8x8x16xf32>
    %423 = arith.addf %416, %422 : vector<8x8x16xf32>
    %c5_181 = arith.constant 5 : index
    %c5_182 = arith.constant 5 : index
    %c0_183 = arith.constant 0 : index
    %424 = vector.load %arg10[%c5_181, %c5_182, %c0_183] : memref<14x14x16xf32, #tpu.memory_space<vmem>>, vector<8x8x16xf32>
    %425 = vector.extract_strided_slice %141 {offsets = [40, 0], sizes = [1, 16], strides = [1, 1]} : vector<49x16xf32> to vector<1x16xf32>
    %426 = vector.shape_cast %425 : vector<1x16xf32> to vector<16xf32>
    %427 = vector.shape_cast %426 : vector<16xf32> to vector<1x1x16xf32>
    %428 = vector.broadcast %427 : vector<1x1x16xf32> to vector<8x8x16xf32>
    %429 = arith.mulf %424, %428 : vector<8x8x16xf32>
    %430 = arith.addf %423, %429 : vector<8x8x16xf32>
    %c5_184 = arith.constant 5 : index
    %c6_185 = arith.constant 6 : index
    %c0_186 = arith.constant 0 : index
    %431 = vector.load %arg10[%c5_184, %c6_185, %c0_186] : memref<14x14x16xf32, #tpu.memory_space<vmem>>, vector<8x8x16xf32>
    %432 = vector.extract_strided_slice %141 {offsets = [41, 0], sizes = [1, 16], strides = [1, 1]} : vector<49x16xf32> to vector<1x16xf32>
    %433 = vector.shape_cast %432 : vector<1x16xf32> to vector<16xf32>
    %434 = vector.shape_cast %433 : vector<16xf32> to vector<1x1x16xf32>
    %435 = vector.broadcast %434 : vector<1x1x16xf32> to vector<8x8x16xf32>
    %436 = arith.mulf %431, %435 : vector<8x8x16xf32>
    %437 = arith.addf %430, %436 : vector<8x8x16xf32>
    %c6_187 = arith.constant 6 : index
    %c0_188 = arith.constant 0 : index
    %c0_189 = arith.constant 0 : index
    %438 = vector.load %arg10[%c6_187, %c0_188, %c0_189] : memref<14x14x16xf32, #tpu.memory_space<vmem>>, vector<8x8x16xf32>
    %439 = vector.extract_strided_slice %141 {offsets = [42, 0], sizes = [1, 16], strides = [1, 1]} : vector<49x16xf32> to vector<1x16xf32>
    %440 = vector.shape_cast %439 : vector<1x16xf32> to vector<16xf32>
    %441 = vector.shape_cast %440 : vector<16xf32> to vector<1x1x16xf32>
    %442 = vector.broadcast %441 : vector<1x1x16xf32> to vector<8x8x16xf32>
    %443 = arith.mulf %438, %442 : vector<8x8x16xf32>
    %444 = arith.addf %437, %443 : vector<8x8x16xf32>
    %c6_190 = arith.constant 6 : index
    %c1_191 = arith.constant 1 : index
    %c0_192 = arith.constant 0 : index
    %445 = vector.load %arg10[%c6_190, %c1_191, %c0_192] : memref<14x14x16xf32, #tpu.memory_space<vmem>>, vector<8x8x16xf32>
    %446 = vector.extract_strided_slice %141 {offsets = [43, 0], sizes = [1, 16], strides = [1, 1]} : vector<49x16xf32> to vector<1x16xf32>
    %447 = vector.shape_cast %446 : vector<1x16xf32> to vector<16xf32>
    %448 = vector.shape_cast %447 : vector<16xf32> to vector<1x1x16xf32>
    %449 = vector.broadcast %448 : vector<1x1x16xf32> to vector<8x8x16xf32>
    %450 = arith.mulf %445, %449 : vector<8x8x16xf32>
    %451 = arith.addf %444, %450 : vector<8x8x16xf32>
    %c6_193 = arith.constant 6 : index
    %c2_194 = arith.constant 2 : index
    %c0_195 = arith.constant 0 : index
    %452 = vector.load %arg10[%c6_193, %c2_194, %c0_195] : memref<14x14x16xf32, #tpu.memory_space<vmem>>, vector<8x8x16xf32>
    %453 = vector.extract_strided_slice %141 {offsets = [44, 0], sizes = [1, 16], strides = [1, 1]} : vector<49x16xf32> to vector<1x16xf32>
    %454 = vector.shape_cast %453 : vector<1x16xf32> to vector<16xf32>
    %455 = vector.shape_cast %454 : vector<16xf32> to vector<1x1x16xf32>
    %456 = vector.broadcast %455 : vector<1x1x16xf32> to vector<8x8x16xf32>
    %457 = arith.mulf %452, %456 : vector<8x8x16xf32>
    %458 = arith.addf %451, %457 : vector<8x8x16xf32>
    %c6_196 = arith.constant 6 : index
    %c3_197 = arith.constant 3 : index
    %c0_198 = arith.constant 0 : index
    %459 = vector.load %arg10[%c6_196, %c3_197, %c0_198] : memref<14x14x16xf32, #tpu.memory_space<vmem>>, vector<8x8x16xf32>
    %460 = vector.extract_strided_slice %141 {offsets = [45, 0], sizes = [1, 16], strides = [1, 1]} : vector<49x16xf32> to vector<1x16xf32>
    %461 = vector.shape_cast %460 : vector<1x16xf32> to vector<16xf32>
    %462 = vector.shape_cast %461 : vector<16xf32> to vector<1x1x16xf32>
    %463 = vector.broadcast %462 : vector<1x1x16xf32> to vector<8x8x16xf32>
    %464 = arith.mulf %459, %463 : vector<8x8x16xf32>
    %465 = arith.addf %458, %464 : vector<8x8x16xf32>
    %c6_199 = arith.constant 6 : index
    %c4_200 = arith.constant 4 : index
    %c0_201 = arith.constant 0 : index
    %466 = vector.load %arg10[%c6_199, %c4_200, %c0_201] : memref<14x14x16xf32, #tpu.memory_space<vmem>>, vector<8x8x16xf32>
    %467 = vector.extract_strided_slice %141 {offsets = [46, 0], sizes = [1, 16], strides = [1, 1]} : vector<49x16xf32> to vector<1x16xf32>
    %468 = vector.shape_cast %467 : vector<1x16xf32> to vector<16xf32>
    %469 = vector.shape_cast %468 : vector<16xf32> to vector<1x1x16xf32>
    %470 = vector.broadcast %469 : vector<1x1x16xf32> to vector<8x8x16xf32>
    %471 = arith.mulf %466, %470 : vector<8x8x16xf32>
    %472 = arith.addf %465, %471 : vector<8x8x16xf32>
    %c6_202 = arith.constant 6 : index
    %c5_203 = arith.constant 5 : index
    %c0_204 = arith.constant 0 : index
    %473 = vector.load %arg10[%c6_202, %c5_203, %c0_204] : memref<14x14x16xf32, #tpu.memory_space<vmem>>, vector<8x8x16xf32>
    %474 = vector.extract_strided_slice %141 {offsets = [47, 0], sizes = [1, 16], strides = [1, 1]} : vector<49x16xf32> to vector<1x16xf32>
    %475 = vector.shape_cast %474 : vector<1x16xf32> to vector<16xf32>
    %476 = vector.shape_cast %475 : vector<16xf32> to vector<1x1x16xf32>
    %477 = vector.broadcast %476 : vector<1x1x16xf32> to vector<8x8x16xf32>
    %478 = arith.mulf %473, %477 : vector<8x8x16xf32>
    %479 = arith.addf %472, %478 : vector<8x8x16xf32>
    %c6_205 = arith.constant 6 : index
    %c6_206 = arith.constant 6 : index
    %c0_207 = arith.constant 0 : index
    %480 = vector.load %arg10[%c6_205, %c6_206, %c0_207] : memref<14x14x16xf32, #tpu.memory_space<vmem>>, vector<8x8x16xf32>
    %481 = vector.extract_strided_slice %141 {offsets = [48, 0], sizes = [1, 16], strides = [1, 1]} : vector<49x16xf32> to vector<1x16xf32>
    %482 = vector.shape_cast %481 : vector<1x16xf32> to vector<16xf32>
    %483 = vector.shape_cast %482 : vector<16xf32> to vector<1x1x16xf32>
    %484 = vector.broadcast %483 : vector<1x1x16xf32> to vector<8x8x16xf32>
    %485 = arith.mulf %480, %484 : vector<8x8x16xf32>
    %486 = arith.addf %479, %485 : vector<8x8x16xf32>
    %487 = vector.broadcast %142 : vector<1x1x16xf32> to vector<8x8x16xf32>
    %488 = arith.addf %486, %487 : vector<8x8x16xf32>
    %c0_208 = arith.constant 0 : index
    %c0_209 = arith.constant 0 : index
    %c0_210 = arith.constant 0 : index
    %489 = vector.load %arg9[%c0_208, %c0_209, %c0_210] : memref<8x8x16xf32, #tpu.memory_space<vmem>>, vector<8x8x16xf32>
    tpu.vector_store %arg9[%c0_208, %c0_209, %c0_210], %488 {strides = array<i32>} : memref<8x8x16xf32, #tpu.memory_space<vmem>>, vector<8x8x16xf32>,
    return
  }
  func.func @transform_0(%arg0: i32) -> i32 {
    %c0_i32 = arith.constant 0 : i32
    %c0_i32_0 = arith.constant 0 : i32
    return %c0_i32 : i32
  }
  func.func @transform_1(%arg0: i32) -> (i32, i32, i32) {
    %c0_i32 = arith.constant 0 : i32
    %c0_i32_0 = arith.constant 0 : i32
    %c0_i32_1 = arith.constant 0 : i32
    return %arg0, %c0_i32, %c0_i32_0 : i32, i32, i32
  }
  func.func @transform_2(%arg0: i32) -> (i32, i32) {
    %c0_i32 = arith.constant 0 : i32
    %c0_i32_0 = arith.constant 0 : i32
    %c0_i32_1 = arith.constant 0 : i32
    return %c0_i32, %c0_i32_0 : i32, i32
  }
  func.func @transform_3(%arg0: i32) -> (i32, i32) {
    %c0_i32 = arith.constant 0 : i32
    %c0_i32_0 = arith.constant 0 : i32
    %c0_i32_1 = arith.constant 0 : i32
    return %c0_i32, %c0_i32_0 : i32, i32
  }
  func.func @transform_4(%arg0: i32) -> (i32, i32) {
    %c0_i32 = arith.constant 0 : i32
    %c0_i32_0 = arith.constant 0 : i32
    %c0_i32_1 = arith.constant 0 : i32
    return %c0_i32, %c0_i32_0 : i32, i32
  }
  func.func @transform_5(%arg0: i32) -> (i32, i32) {
    %c0_i32 = arith.constant 0 : i32
    %c0_i32_0 = arith.constant 0 : i32
    %c0_i32_1 = arith.constant 0 : i32
    return %c0_i32, %c0_i32_0 : i32, i32
  }
  func.func @transform_6(%arg0: i32) -> (i32, i32) {
    %c0_i32 = arith.constant 0 : i32
    %c0_i32_0 = arith.constant 0 : i32
    %c0_i32_1 = arith.constant 0 : i32
    return %c0_i32, %c0_i32_0 : i32, i32
  }
  func.func @transform_7(%arg0: i32) -> (i32, i32, i32) {
    %c0_i32 = arith.constant 0 : i32
    %c0_i32_0 = arith.constant 0 : i32
    %c0_i32_1 = arith.constant 0 : i32
    %c0_i32_2 = arith.constant 0 : i32
    return %c0_i32, %c0_i32_0, %c0_i32_1 : i32, i32, i32
  }
  func.func @transform_8(%arg0: i32) -> (i32, i32, i32) {
    %c0_i32 = arith.constant 0 : i32
    %c0_i32_0 = arith.constant 0 : i32
    %c0_i32_1 = arith.constant 0 : i32
    return %arg0, %c0_i32, %c0_i32_0 : i32, i32, i32
  }
}

</mosaic_0001>

<llo_original>
// kernel: tpu_custom_call.1
$region0: #{tpu_custom_call.1}
  #allocation0 [shape = 'u32[]', space=smem, size = 0x4, offset = 0x4, fixed_abs, tag = 'smem constant byte address 0x4 - core index']
  #allocation1 [shape = 'u32[144,128]{1,0:T(1,128)}', space=vmem, size = 0x12000, scoped, tag = 'internal scratch']
  #allocation2 [shape = 'f32[14,14,16]{2,1,0:T(8,128)}', space=vmem, size = 0x1c000, scoped, tag = 'scratch operand']
  #allocation3 [shape = 'f32[64,16]{1,0:T(8,128)}', space=vmem, size = 0x8000, scoped, tag = 'scratch operand']
  #allocation4 [shape = 'f32[1]{0:T(128)S(6)}', space=smem, size = 0x200, scoped, tag = 'scoped memory for tpu_custom_call.1']
  %s0 = inlined_call_operand.<no memory space> [shape: f32[1], index: 0, kind: input, shape index: {}]
  %s1 = inlined_call_operand.vmem [shape: f32[2,256,12], index: 1, kind: input, shape index: {}]
  %s2 = inlined_call_operand.vmem [shape: bf16[12,64], index: 2, kind: input, shape index: {}]
  %s3 = inlined_call_operand.vmem [shape: f32[1,16], index: 3, kind: input, shape index: {}]
  %s4 = inlined_call_operand.vmem [shape: bf16[16,16], index: 4, kind: input, shape index: {}]
  %s5 = inlined_call_operand.vmem [shape: f32[1,16], index: 5, kind: input, shape index: {}]
  %s6 = inlined_call_operand.vmem [shape: f32[49,16], index: 6, kind: input, shape index: {}]
  %s7 = inlined_call_operand.vmem [shape: f32[1,1,16], index: 7, kind: input, shape index: {}]
  %s8 = inlined_call_operand.hbm [shape: f32[16,8,16], index: 8, kind: output, shape index: {}]
  %s9 = sld [smem:[#allocation0]]
  $region65: #{tpu_custom_call.1} parent=0
    _
  %s11 = ssub.s32 1, %s9
  %s12 = scalar_select 0, %s11, %s9
  %13 = sst [smem:[#allocation4]] %s0
  $region1: #{tpu_custom_call.1} parent=0
    #allocation5 [shape = 'u8[65536]{0}', space=vmem, size = 0x10000, scoped, tag = 'output window, operand 0']
    #allocation6 [shape = 's32[2]{0}', space=sflag, size = 0x8, scoped, tag = 'scoped memory for tpu_custom_call.1']
    %14 = vsyncpa [#allocation6], 0
    %s15 = scalar_lea.sflag [#allocation6], 1
    %16 = vsyncpa %s15, 0
    loop: start=0, step=1, limit=4
    $region2: #{tpu_custom_call.1} parent=1 // loop_pre_header
      _
    $region3: #{tpu_custom_call.1} parent=1 // loop_header
      %s18 = sphi 0, %s22
      %p19 = scmp.ge.s32.totalorder %s18, 4
      %s26 = sphi 0, %s26
      %s28 = sphi 0, %s26
      %s29 = sphi 0, %s28
      %s43 = sphi 0, %s29
      %s49 = sphi 0, %s51
      %s52 = sphi 0, %s49
      %s53 = sphi 0, %s52
      %s69 = sphi 0, %s53
      %s73 = sphi 0, %s73
      %s75 = sphi 0, %s73
      %s76 = sphi 0, %s75
      %s90 = sphi 0, %s76
      %s94 = sphi 0, %s94
      %s96 = sphi 0, %s94
      %s97 = sphi 0, %s96
      %s111 = sphi 0, %s97
      %s115 = sphi 0, %s115
      %s117 = sphi 0, %s115
      %s118 = sphi 0, %s117
      %s132 = sphi 0, %s118
      %s136 = sphi 0, %s136
      %s138 = sphi 0, %s136
      %s139 = sphi 0, %s138
      %s153 = sphi 0, %s139
      %s157 = sphi 0, %s157
      %s159 = sphi 0, %s157
      %s160 = sphi 0, %s159
      %s174 = sphi 0, %s160
      %s178 = sphi 0, %s178
      %s180 = sphi 0, %s178
      %s181 = sphi 0, %s180
      %s195 = sphi 0, %s181
      %s201 = sphi 0, %s203
      %s204 = sphi 0, %s201
      %s205 = sphi 0, %s204
      %s221 = sphi 0, %s205
    $region4: #{tpu_custom_call.1} parent=1 // loop_header_branch
      %21 = sbr.rel (%p19) target = $region8
    $region5: #{tpu_custom_call.1} parent=1 // loop_body
      %s23 = ssub.s32 %s18, 1
      %s24 = ssub.s32 %s18, 2
      %s25 = sadd.s32 %s18, 1
      %s27 = sadd.s32 %s26, 1
      %p30 = scmp.eq.s32.totalorder %s18, 1
      %p31 = scmp.ne.s32.totalorder %s26, %s28
      %p32 = scmp.eq.s32.totalorder %s18, 0
      %p33 = por %p31, %p32
      %p34 = scmp.ne.s32.totalorder %s26, %s28
      %p35 = scmp.eq.s32.totalorder %s23, 1
      %p36 = por %p34, %p35
      %p37 = scmp.ne.s32.totalorder %s28, %s29
      %p38 = scmp.eq.s32.totalorder %s23, 0
      %p39 = por %p37, %p38
      %p40 = scmp.ne.s32.totalorder %s28, %s29
      %p41 = scmp.eq.s32.totalorder %s24, 1
      %p42 = por %p40, %p41
      %p44 = scmp.ne.s32.totalorder %s29, %s43
      %p45 = scmp.eq.s32.totalorder %s24, 0
      %p46 = por %p44, %p45
      %s47 = ssub.s32 %s18, %s25
      %p48 = scmp.eq.s32.totalorder %s47, 0
      %s50 = sadd.s32 %s49, 1
      %s51 = scalar_select %p48, %s49, %s50
      %p54 = pneg %p48
      %p55 = scmp.eq.s32.totalorder %s18, 1
      %p56 = por %p54, %p55
      %p57 = scmp.ne.s32.totalorder %s49, %s52
      %p58 = scmp.eq.s32.totalorder %s18, 0
      %p59 = por %p57, %p58
      %p60 = scmp.ne.s32.totalorder %s49, %s52
      %p61 = scmp.eq.s32.totalorder %s23, 1
      %p62 = por %p60, %p61
      %p63 = scmp.ne.s32.totalorder %s52, %s53
      %p64 = scmp.eq.s32.totalorder %s23, 0
      %p65 = por %p63, %p64
      %p66 = scmp.ne.s32.totalorder %s52, %s53
      %p67 = scmp.eq.s32.totalorder %s24, 1
      %p68 = por %p66, %p67
      %p70 = scmp.ne.s32.totalorder %s53, %s69
      %p71 = scmp.eq.s32.totalorder %s24, 0
      %p72 = por %p70, %p71
      %s74 = sadd.s32 %s73, 1
      %p77 = scmp.eq.s32.totalorder %s18, 1
      %p78 = scmp.ne.s32.totalorder %s73, %s75
      %p79 = scmp.eq.s32.totalorder %s18, 0
      %p80 = por %p78, %p79
      %p81 = scmp.ne.s32.totalorder %s73, %s75
      %p82 = scmp.eq.s32.totalorder %s23, 1
      %p83 = por %p81, %p82
      %p84 = scmp.ne.s32.totalorder %s75, %s76
      %p85 = scmp.eq.s32.totalorder %s23, 0
      %p86 = por %p84, %p85
      %p87 = scmp.ne.s32.totalorder %s75, %s76
      %p88 = scmp.eq.s32.totalorder %s24, 1
      %p89 = por %p87, %p88
      %p91 = scmp.ne.s32.totalorder %s76, %s90
      %p92 = scmp.eq.s32.totalorder %s24, 0
      %p93 = por %p91, %p92
      %s95 = sadd.s32 %s94, 1
      %p98 = scmp.eq.s32.totalorder %s18, 1
      %p99 = scmp.ne.s32.totalorder %s94, %s96
      %p100 = scmp.eq.s32.totalorder %s18, 0
      %p101 = por %p99, %p100
      %p102 = scmp.ne.s32.totalorder %s94, %s96
      %p103 = scmp.eq.s32.totalorder %s23, 1
      %p104 = por %p102, %p103
      %p105 = scmp.ne.s32.totalorder %s96, %s97
      %p106 = scmp.eq.s32.totalorder %s23, 0
      %p107 = por %p105, %p106
      %p108 = scmp.ne.s32.totalorder %s96, %s97
      %p109 = scmp.eq.s32.totalorder %s24, 1
      %p110 = por %p108, %p109
      %p112 = scmp.ne.s32.totalorder %s97, %s111
      %p113 = scmp.eq.s32.totalorder %s24, 0
      %p114 = por %p112, %p113
      %s116 = sadd.s32 %s115, 1
      %p119 = scmp.eq.s32.totalorder %s18, 1
      %p120 = scmp.ne.s32.totalorder %s115, %s117
      %p121 = scmp.eq.s32.totalorder %s18, 0
      %p122 = por %p120, %p121
      %p123 = scmp.ne.s32.totalorder %s115, %s117
      %p124 = scmp.eq.s32.totalorder %s23, 1
      %p125 = por %p123, %p124
      %p126 = scmp.ne.s32.totalorder %s117, %s118
      %p127 = scmp.eq.s32.totalorder %s23, 0
      %p128 = por %p126, %p127
      %p129 = scmp.ne.s32.totalorder %s117, %s118
      %p130 = scmp.eq.s32.totalorder %s24, 1
      %p131 = por %p129, %p130
      %p133 = scmp.ne.s32.totalorder %s118, %s132
      %p134 = scmp.eq.s32.totalorder %s24, 0
      %p135 = por %p133, %p134
      %s137 = sadd.s32 %s136, 1
      %p140 = scmp.eq.s32.totalorder %s18, 1
      %p141 = scmp.ne.s32.totalorder %s136, %s138
      %p142 = scmp.eq.s32.totalorder %s18, 0
      %p143 = por %p141, %p142
      %p144 = scmp.ne.s32.totalorder %s136, %s138
      %p145 = scmp.eq.s32.totalorder %s23, 1
      %p146 = por %p144, %p145
      %p147 = scmp.ne.s32.totalorder %s138, %s139
      %p148 = scmp.eq.s32.totalorder %s23, 0
      %p149 = por %p147, %p148
      %p150 = scmp.ne.s32.totalorder %s138, %s139
      %p151 = scmp.eq.s32.totalorder %s24, 1
      %p152 = por %p150, %p151
      %p154 = scmp.ne.s32.totalorder %s139, %s153
      %p155 = scmp.eq.s32.totalorder %s24, 0
      %p156 = por %p154, %p155
      %s158 = sadd.s32 %s157, 1
      %p161 = scmp.eq.s32.totalorder %s18, 1
      %p162 = scmp.ne.s32.totalorder %s157, %s159
      %p163 = scmp.eq.s32.totalorder %s18, 0
      %p164 = por %p162, %p163
      %p165 = scmp.ne.s32.totalorder %s157, %s159
      %p166 = scmp.eq.s32.totalorder %s23, 1
      %p167 = por %p165, %p166
      %p168 = scmp.ne.s32.totalorder %s159, %s160
      %p169 = scmp.eq.s32.totalorder %s23, 0
      %p170 = por %p168, %p169
      %p171 = scmp.ne.s32.totalorder %s159, %s160
      %p172 = scmp.eq.s32.totalorder %s24, 1
      %p173 = por %p171, %p172
      %p175 = scmp.ne.s32.totalorder %s160, %s174
      %p176 = scmp.eq.s32.totalorder %s24, 0
      %p177 = por %p175, %p176
      %s179 = sadd.s32 %s178, 1
      %p182 = scmp.eq.s32.totalorder %s18, 1
      %p183 = scmp.ne.s32.totalorder %s178, %s180
      %p184 = scmp.eq.s32.totalorder %s18, 0
      %p185 = por %p183, %p184
      %p186 = scmp.ne.s32.totalorder %s178, %s180
      %p187 = scmp.eq.s32.totalorder %s23, 1
      %p188 = por %p186, %p187
      %p189 = scmp.ne.s32.totalorder %s180, %s181
      %p190 = scmp.eq.s32.totalorder %s23, 0
      %p191 = por %p189, %p190
      %p192 = scmp.ne.s32.totalorder %s180, %s181
      %p193 = scmp.eq.s32.totalorder %s24, 1
      %p194 = por %p192, %p193
      %p196 = scmp.ne.s32.totalorder %s181, %s195
      %p197 = scmp.eq.s32.totalorder %s24, 0
      %p198 = por %p196, %p197
      %s199 = ssub.s32 %s18, %s25
      %p200 = scmp.eq.s32.totalorder %s199, 0
      %s202 = sadd.s32 %s201, 1
      %s203 = scalar_select %p200, %s201, %s202
      %p206 = pneg %p200
      %p207 = scmp.eq.s32.totalorder %s18, 1
      %p208 = por %p206, %p207
      %p209 = scmp.ne.s32.totalorder %s201, %s204
      %p210 = scmp.eq.s32.totalorder %s18, 0
      %p211 = por %p209, %p210
      %p212 = scmp.ne.s32.totalorder %s201, %s204
      %p213 = scmp.eq.s32.totalorder %s23, 1
      %p214 = por %p212, %p213
      %p215 = scmp.ne.s32.totalorder %s204, %s205
      %p216 = scmp.eq.s32.totalorder %s23, 0
      %p217 = por %p215, %p216
      %p218 = scmp.ne.s32.totalorder %s204, %s205
      %p219 = scmp.eq.s32.totalorder %s24, 1
      %p220 = por %p218, %p219
      %p222 = scmp.ne.s32.totalorder %s205, %s221
      %p223 = scmp.eq.s32.totalorder %s24, 0
      %p224 = por %p222, %p223
      %p225 = scmp.le.s32.totalorder 1, %s18
      %p226 = scmp.lt.s32.totalorder %s18, 3
      %p227 = pnand %p225, %p226
      %p228 = pneg %p227
      // Predicated region
      $region9: #{tpu_custom_call.1} parent=5 // pred_check
        _
      $region10: #{tpu_custom_call.1} parent=5 // pred_check_branch
        %230 = sbr.rel (%p227) target = $region12
      $region11: #{tpu_custom_call.1} parent=5 // pred_region
        %s231 = ssub.s32 %s18, 1
        // Predicated region
        $region13: #{tpu_custom_call.1} parent=11 // pred_check
          %p232 = pneg %p39
        $region14: #{tpu_custom_call.1} parent=11 // pred_check_branch
          %234 = sbr.rel (%p232) target = $region16
        $region15: #{tpu_custom_call.1} parent=11 // pred_region
          _
        $region16: #{tpu_custom_call.1} parent=11 // pred_fallthru
          _
        // Predicated region
        $region17: #{tpu_custom_call.1} parent=11 // pred_check
          %p235 = pneg %p86
        $region18: #{tpu_custom_call.1} parent=11 // pred_check_branch
          %237 = sbr.rel (%p235) target = $region20
        $region19: #{tpu_custom_call.1} parent=11 // pred_region
          _
        $region20: #{tpu_custom_call.1} parent=11 // pred_fallthru
          _
        // Predicated region
        $region21: #{tpu_custom_call.1} parent=11 // pred_check
          %p238 = pneg %p107
        $region22: #{tpu_custom_call.1} parent=11 // pred_check_branch
          %240 = sbr.rel (%p238) target = $region24
        $region23: #{tpu_custom_call.1} parent=11 // pred_region
          _
        $region24: #{tpu_custom_call.1} parent=11 // pred_fallthru
          _
        // Predicated region
        $region25: #{tpu_custom_call.1} parent=11 // pred_check
          %p241 = pneg %p128
        $region26: #{tpu_custom_call.1} parent=11 // pred_check_branch
          %243 = sbr.rel (%p241) target = $region28
        $region27: #{tpu_custom_call.1} parent=11 // pred_region
          _
        $region28: #{tpu_custom_call.1} parent=11 // pred_fallthru
          _
        // Predicated region
        $region29: #{tpu_custom_call.1} parent=11 // pred_check
          %p244 = pneg %p149
        $region30: #{tpu_custom_call.1} parent=11 // pred_check_branch
          %246 = sbr.rel (%p244) target = $region32
        $region31: #{tpu_custom_call.1} parent=11 // pred_region
          _
        $region32: #{tpu_custom_call.1} parent=11 // pred_fallthru
          _
        // Predicated region
        $region33: #{tpu_custom_call.1} parent=11 // pred_check
          %p247 = pneg %p170
        $region34: #{tpu_custom_call.1} parent=11 // pred_check_branch
          %249 = sbr.rel (%p247) target = $region36
        $region35: #{tpu_custom_call.1} parent=11 // pred_region
          _
        $region36: #{tpu_custom_call.1} parent=11 // pred_fallthru
          _
        // Predicated region
        $region37: #{tpu_custom_call.1} parent=11 // pred_check
          %p250 = pneg %p191
        $region38: #{tpu_custom_call.1} parent=11 // pred_check_branch
          %252 = sbr.rel (%p250) target = $region40
        $region39: #{tpu_custom_call.1} parent=11 // pred_region
          _
        $region40: #{tpu_custom_call.1} parent=11 // pred_fallthru
          _
      $region12: #{tpu_custom_call.1} parent=5 // pred_fallthru
        _
      %p253 = scmp.lt.s32.totalorder %s18, 2
      // Predicated region
      $region41: #{tpu_custom_call.1} parent=5 // pred_check
        %p254 = pneg %p253
      $region42: #{tpu_custom_call.1} parent=5 // pred_check_branch
        %256 = sbr.rel (%p254) target = $region44
      $region43: #{tpu_custom_call.1} parent=5 // pred_region
        // Predicated region
        $region45: #{tpu_custom_call.1} parent=43 // pred_check
          %p257 = pneg %p59
        $region46: #{tpu_custom_call.1} parent=43 // pred_check_branch
          %259 = sbr.rel (%p257) target = $region48
        $region47: #{tpu_custom_call.1} parent=43 // pred_region
          %p260 = scmp.lt.s32.totalorder %s18, 1
          %s261 = scalar_select %p260, %s18, 1
          %s262 = smul.addr %s261, 32
          %s263 = smul.addr %s262, 8
          %s264 = scalar_lea.vmem %s1, %s263
        $region48: #{tpu_custom_call.1} parent=43 // pred_fallthru
          _
      $region44: #{tpu_custom_call.1} parent=5 // pred_fallthru
        _
      %p265 = scmp.le.s32.totalorder 1, %s18
      %p266 = scmp.lt.s32.totalorder %s18, 3
      %p267 = pnand %p265, %p266
      %p268 = pneg %p267
      // Predicated region
      $region49: #{tpu_custom_call.1} parent=5 // pred_check
        _
      $region50: #{tpu_custom_call.1} parent=5 // pred_check_branch
        %270 = sbr.rel (%p267) target = $region52
      $region51: #{tpu_custom_call.1} parent=5 // pred_region
        %s271 = ssub.s32 %s18, 1
        %p272 = pneg %p39
        %p273 = pneg %p36
        %p274 = scmp.lt.s32.totalorder %s23, 1
        %s275 = scalar_select %p274, %s23, 1
        %s276 = smul.addr %s275, 32
        %s277 = smul.addr %s276, 8
        %s278 = scalar_lea.vmem %s1, %s277
        %p279 = pneg %p65
        %p280 = pneg %p62
        %p281 = pneg %p86
        %p282 = pneg %p83
        %p283 = pneg %p107
        %p284 = pneg %p104
        %p285 = pneg %p128
        %p286 = pneg %p125
        %p287 = pneg %p149
        %p288 = pneg %p146
        %p289 = pneg %p170
        %p290 = pneg %p167
        %p291 = pneg %p191
        %p292 = pneg %p188
        %p293 = pneg %p217
        %p294 = pneg %p214
        %s295 = sand.u32 %s204, 1
        %s296 = scalar_lea.sflag [#allocation6], %s295
        %s297 = sand.u32 %s204, 1
        %s298 = smul.addr %s297, 64
        %s299 = scalar_lea.vmem [#allocation5], %s298
        %p300 = scmp.lt.s32.totalorder %s23, 1
        %s301 = scalar_select %p300, %s23, 1
        %s302 = smul.addr %s301, 32
        %s303 = smul.addr %s302, 8
        %s304 = scalar_lea.vmem %s1, %s303
        %s305 = smul.u32 8, %s23
        %s307 = sld [smem:[#allocation4]]
        %vm308 = vcmask 130048
        %309 = vst.msk [vmem:[#allocation2] sm:$0xff] %vm308, 0.0
        %vm310 = vcmask 128000
        %311 = vst.msk [vmem:[#allocation2 + $0x8] sm:$0x3f] %vm310, 0.0
        %312 = vst.msk [vmem:[#allocation2 + $0x10] sm:$0xff] %vm308, 0.0
        %313 = vst.msk [vmem:[#allocation2 + $0x18] sm:$0x3f] %vm310, 0.0
        %314 = vst.msk [vmem:[#allocation2 + $0x20] sm:$0xff] %vm308, 0.0
        %315 = vst.msk [vmem:[#allocation2 + $0x28] sm:$0x3f] %vm310, 0.0
        %s316 = scalar_lea.vmem [#allocation2], 176
        %317 = vst.msk [vmem:[%s316] sm:$0xff] %vm308, 0.0
        %318 = vst.msk [vmem:[%s316 + $0x8] sm:$0x3f] %vm310, 0.0
        %319 = vst.msk [vmem:[%s316 + $0x10] sm:$0xff] %vm308, 0.0
        %320 = vst.msk [vmem:[%s316 + $0x18] sm:$0x3f] %vm310, 0.0
        %321 = vst.msk [vmem:[%s316 + $0x20] sm:$0xff] %vm308, 0.0
        %322 = vst.msk [vmem:[%s316 + $0x28] sm:$0x3f] %vm310, 0.0
        %vm323 = vcmask 124928
        %324 = vst.msk [vmem:[#allocation2] sm:$0x7] %vm323, 0.0
        %325 = vst.msk [vmem:[#allocation2 + $0x10] sm:$0x7] %vm323, 0.0
        %326 = vst.msk [vmem:[#allocation2 + $0x20] sm:$0x7] %vm323, 0.0
        %327 = vst.msk [vmem:[#allocation2 + $0x30] sm:$0x7] %vm323, 0.0
        %328 = vst.msk [vmem:[#allocation2 + $0x40] sm:$0x7] %vm323, 0.0
        %329 = vst.msk [vmem:[#allocation2 + $0x50] sm:$0x7] %vm323, 0.0
        %330 = vst.msk [vmem:[#allocation2 + $0x60] sm:$0x7] %vm323, 0.0
        %331 = vst.msk [vmem:[#allocation2 + $0x70] sm:$0x7] %vm323, 0.0
        %332 = vst.msk [vmem:[#allocation2 + $0x80] sm:$0x7] %vm323, 0.0
        %333 = vst.msk [vmem:[#allocation2 + $0x90] sm:$0x7] %vm323, 0.0
        %334 = vst.msk [vmem:[#allocation2 + $0xa0] sm:$0x7] %vm323, 0.0
        %335 = vst.msk [vmem:[#allocation2 + $0xb0] sm:$0x7] %vm323, 0.0
        %336 = vst.msk [vmem:[#allocation2 + $0xc0] sm:$0x7] %vm323, 0.0
        %337 = vst.msk [vmem:[#allocation2 + $0xd0] sm:$0x7] %vm323, 0.0
        %338 = vst.msk [vmem:[#allocation2 + $0xb] sm:$0x7] %vm323, 0.0
        %339 = vst.msk [vmem:[#allocation2 + $0x1b] sm:$0x7] %vm323, 0.0
        %340 = vst.msk [vmem:[#allocation2 + $0x2b] sm:$0x7] %vm323, 0.0
        %341 = vst.msk [vmem:[#allocation2 + $0x3b] sm:$0x7] %vm323, 0.0
        %342 = vst.msk [vmem:[#allocation2 + $0x4b] sm:$0x7] %vm323, 0.0
        %343 = vst.msk [vmem:[#allocation2 + $0x5b] sm:$0x7] %vm323, 0.0
        %344 = vst.msk [vmem:[#allocation2 + $0x6b] sm:$0x7] %vm323, 0.0
        %345 = vst.msk [vmem:[#allocation2 + $0x7b] sm:$0x7] %vm323, 0.0
        %346 = vst.msk [vmem:[#allocation2 + $0x8b] sm:$0x7] %vm323, 0.0
        %347 = vst.msk [vmem:[#allocation2 + $0x9b] sm:$0x7] %vm323, 0.0
        %348 = vst.msk [vmem:[#allocation2 + $0xab] sm:$0x7] %vm323, 0.0
        %349 = vst.msk [vmem:[#allocation2 + $0xbb] sm:$0x7] %vm323, 0.0
        %350 = vst.msk [vmem:[#allocation2 + $0xcb] sm:$0x7] %vm323, 0.0
        %351 = vst.msk [vmem:[#allocation2 + $0xdb] sm:$0x7] %vm323, 0.0
        %v352 = vld [vmem:[%s304] sm:$0xff]
        %v353 = vld [vmem:[%s304 + $0x8] sm:$0xff]
        %v354 = vld [vmem:[%s304 + $0x10] sm:$0xff]
        %v355 = vld [vmem:[%s304 + $0x18] sm:$0xff]
        %v356 = vld [vmem:[%s304 + $0x20] sm:$0xff]
        %v357 = vld [vmem:[%s304 + $0x28] sm:$0xff]
        %v358 = vld [vmem:[%s304 + $0x30] sm:$0xff]
        %v359 = vld [vmem:[%s304 + $0x38] sm:$0xff]
        %v360 = vld [vmem:[%s304 + $0x40] sm:$0xff]
        %v361 = vld [vmem:[%s304 + $0x48] sm:$0xff]
        %v362 = vld [vmem:[%s304 + $0x50] sm:$0xff]
        %v363 = vld [vmem:[%s304 + $0x58] sm:$0xff]
        %v364 = vld [vmem:[%s304 + $0x60] sm:$0xff]
        %v365 = vld [vmem:[%s304 + $0x68] sm:$0xff]
        %v366 = vld [vmem:[%s304 + $0x70] sm:$0xff]
        %v367 = vld [vmem:[%s304 + $0x78] sm:$0xff]
        %v368 = vld [vmem:[%s304 + $0x80] sm:$0xff]
        %v369 = vld [vmem:[%s304 + $0x88] sm:$0xff]
        %v370 = vld [vmem:[%s304 + $0x90] sm:$0xff]
        %v371 = vld [vmem:[%s304 + $0x98] sm:$0xff]
        %v372 = vld [vmem:[%s304 + $0xa0] sm:$0xff]
        %v373 = vld [vmem:[%s304 + $0xa8] sm:$0xff]
        %v374 = vld [vmem:[%s304 + $0xb0] sm:$0xff]
        %v375 = vld [vmem:[%s304 + $0xb8] sm:$0xff]
        %v376 = vld [vmem:[%s304 + $0xc0] sm:$0xff]
        %v377 = vld [vmem:[%s304 + $0xc8] sm:$0xff]
        %v378 = vld [vmem:[%s304 + $0xd0] sm:$0xff]
        %v379 = vld [vmem:[%s304 + $0xd8] sm:$0xff]
        %v380 = vld [vmem:[%s304 + $0xe0] sm:$0xff]
        %v381 = vld [vmem:[%s304 + $0xe8] sm:$0xff]
        %v382 = vld [vmem:[%s304 + $0xf0] sm:$0xff]
        %v383 = vld [vmem:[%s304 + $0xf8] sm:$0xff]
        %v384 = vpack.c.bf16 %v353, %v352
        %v385 = vpack.c.bf16 %v355, %v354
        %v386 = vpack.c.bf16 %v357, %v356
        %v387 = vpack.c.bf16 %v359, %v358
        %v388 = vpack.c.bf16 %v361, %v360
        %v389 = vpack.c.bf16 %v363, %v362
        %v390 = vpack.c.bf16 %v365, %v364
        %v391 = vpack.c.bf16 %v367, %v366
        %v392 = vpack.c.bf16 %v369, %v368
        %v393 = vpack.c.bf16 %v371, %v370
        %v394 = vpack.c.bf16 %v373, %v372
        %v395 = vpack.c.bf16 %v375, %v374
        %v396 = vpack.c.bf16 %v377, %v376
        %v397 = vpack.c.bf16 %v379, %v378
        %v398 = vpack.c.bf16 %v381, %v380
        %v399 = vpack.c.bf16 %v383, %v382
        %v400 = vld [vmem:[%s2] sm:$0xf]
        %v401 = vld [vmem:[%s2 + $0x4] sm:$0x3]
        %v404 = vunpack.c.l.b16 %v400
        %v405 = vunpack.c.l.b16 %v401
        %v406 = vpack.c.b16 %v405, %v404
        %vm407 = vcmask 97280
        %v409 = vsel %vm407, %v384, 0
        %v412 = vsel %vm407, %v385, 0
        %v415 = vsel %vm407, %v386, 0
        %v418 = vsel %vm407, %v387, 0
        %v421 = vsel %vm407, %v388, 0
        %v424 = vsel %vm407, %v389, 0
        %v427 = vsel %vm407, %v390, 0
        %v430 = vsel %vm407, %v391, 0
        %v433 = vsel %vm407, %v392, 0
        %v436 = vsel %vm407, %v393, 0
        %v439 = vsel %vm407, %v394, 0
        %v442 = vsel %vm407, %v395, 0
        %v445 = vsel %vm407, %v396, 0
        %v448 = vsel %vm407, %v397, 0
        %v451 = vsel %vm407, %v398, 0
        %v454 = vsel %vm407, %v399, 0
        %vm456 = vcmask 1045504
        %v458 = vsel %vm456, %v406, 0
        %460 = vmatprep.subr.bf16.mxu0 0
        %461 = vmatpush1.bf16.msra.mxu0 %v458
        %462 = vmatprep.subr.bf16.mxu0 0
        %463 = vmatpush1.bf16.msra.mxu0 0
        %464 = vmatprep.subr.bf16.mxu0 0
        %465 = vmatpush1.bf16.msra.mxu0 0
        %466 = vmatprep.subr.bf16.mxu0 0
        %467 = vmatpush1.bf16.msra.mxu0 0
        %468 = vmatprep.subr.bf16.mxu0 0
        %469 = vmatpush1.bf16.msra.mxu0 0
        %470 = vmatprep.subr.bf16.mxu0 0
        %471 = vmatpush1.bf16.msra.mxu0 0
        %472 = vmatprep.subr.bf16.mxu0 0
        %473 = vmatpush1.bf16.msra.mxu0 0
        %474 = vmatprep.subr.bf16.mxu0 0
        %475 = vmatpush1.bf16.msra.mxu0 0
        %476 = vmatprep.subr.bf16.mxu0 0
        %477 = vmatpush1.bf16.msra.mxu0 0
        %478 = vmatprep.subr.bf16.mxu0 0
        %479 = vmatpush1.bf16.msra.mxu0 0
        %480 = vmatprep.subr.bf16.mxu0 0
        %481 = vmatpush1.bf16.msra.mxu0 0
        %482 = vmatprep.subr.bf16.mxu0 0
        %483 = vmatpush1.bf16.msra.mxu0 0
        %484 = vmatprep.subr.bf16.mxu0 0
        %485 = vmatpush1.bf16.msra.mxu0 0
        %486 = vmatprep.subr.bf16.mxu0 0
        %487 = vmatpush1.bf16.msra.mxu0 0
        %488 = vmatprep.subr.bf16.mxu0 0
        %489 = vmatpush1.bf16.msra.mxu0 0
        %490 = vmatprep.subr.bf16.mxu0 0
        %491 = vmatpush1.bf16.msra.mxu0 0
        %492 = vmatprep.mubr.bf16.mxu0 0
        %493 = vmatmul.mubr.bf16.gmra.mrb[0].mxu0 %v409
        %v494 = vpop.f32.mrb[0].mxu0
        %v495 = vadd.f32 0.0, %v494
        %v496 = vpop.f32.mrb[0].mxu0
        %v497 = vpop.f32.mrb[0].mxu0
        %v498 = vadd.f32 0.0, %v497
        %v499 = vpop.f32.mrb[0].mxu0
        %500 = vmatprep.mubr.bf16.mxu0 0
        %501 = vmatmul.mubr.bf16.gmra.mrb[0].mxu0 %v412
        %v502 = vpop.f32.mrb[0].mxu0
        %v503 = vadd.f32 0.0, %v502
        %v504 = vpop.f32.mrb[0].mxu0
        %v505 = vpop.f32.mrb[0].mxu0
        %v506 = vadd.f32 0.0, %v505
        %v507 = vpop.f32.mrb[0].mxu0
        %508 = vmatprep.mubr.bf16.mxu0 0
        %509 = vmatmul.mubr.bf16.gmra.mrb[0].mxu0 %v415
        %v510 = vpop.f32.mrb[0].mxu0
        %v511 = vadd.f32 0.0, %v510
        %v512 = vpop.f32.mrb[0].mxu0
        %v513 = vpop.f32.mrb[0].mxu0
        %v514 = vadd.f32 0.0, %v513
        %v515 = vpop.f32.mrb[0].mxu0
        %516 = vmatprep.mubr.bf16.mxu0 0
        %517 = vmatmul.mubr.bf16.gmra.mrb[0].mxu0 %v418
        %v518 = vpop.f32.mrb[0].mxu0
        %v519 = vadd.f32 0.0, %v518
        %v520 = vpop.f32.mrb[0].mxu0
        %v521 = vpop.f32.mrb[0].mxu0
        %v522 = vadd.f32 0.0, %v521
        %v523 = vpop.f32.mrb[0].mxu0
        %524 = vmatprep.mubr.bf16.mxu0 0
        %525 = vmatmul.mubr.bf16.gmra.mrb[0].mxu0 %v421
        %v526 = vpop.f32.mrb[0].mxu0
        %v527 = vadd.f32 0.0, %v526
        %v528 = vpop.f32.mrb[0].mxu0
        %v529 = vpop.f32.mrb[0].mxu0
        %v530 = vadd.f32 0.0, %v529
        %v531 = vpop.f32.mrb[0].mxu0
        %532 = vmatprep.mubr.bf16.mxu0 0
        %533 = vmatmul.mubr.bf16.gmra.mrb[0].mxu0 %v424
        %v534 = vpop.f32.mrb[0].mxu0
        %v535 = vadd.f32 0.0, %v534
        %v536 = vpop.f32.mrb[0].mxu0
        %v537 = vpop.f32.mrb[0].mxu0
        %v538 = vadd.f32 0.0, %v537
        %v539 = vpop.f32.mrb[0].mxu0
        %540 = vmatprep.mubr.bf16.mxu0 0
        %541 = vmatmul.mubr.bf16.gmra.mrb[0].mxu0 %v427
        %v542 = vpop.f32.mrb[0].mxu0
        %v543 = vadd.f32 0.0, %v542
        %v544 = vpop.f32.mrb[0].mxu0
        %v545 = vpop.f32.mrb[0].mxu0
        %v546 = vadd.f32 0.0, %v545
        %v547 = vpop.f32.mrb[0].mxu0
        %548 = vmatprep.mubr.bf16.mxu0 0
        %549 = vmatmul.mubr.bf16.gmra.mrb[0].mxu0 %v430
        %v550 = vpop.f32.mrb[0].mxu0
        %v551 = vadd.f32 0.0, %v550
        %v552 = vpop.f32.mrb[0].mxu0
        %v553 = vpop.f32.mrb[0].mxu0
        %v554 = vadd.f32 0.0, %v553
        %v555 = vpop.f32.mrb[0].mxu0
        %556 = vmatprep.mubr.bf16.mxu0 0
        %557 = vmatmul.mubr.bf16.gmra.mrb[0].mxu0 %v433
        %v558 = vpop.f32.mrb[0].mxu0
        %v559 = vadd.f32 0.0, %v558
        %v560 = vpop.f32.mrb[0].mxu0
        %v561 = vpop.f32.mrb[0].mxu0
        %v562 = vadd.f32 0.0, %v561
        %v563 = vpop.f32.mrb[0].mxu0
        %564 = vmatprep.mubr.bf16.mxu0 0
        %565 = vmatmul.mubr.bf16.gmra.mrb[0].mxu0 %v436
        %v566 = vpop.f32.mrb[0].mxu0
        %v567 = vadd.f32 0.0, %v566
        %v568 = vpop.f32.mrb[0].mxu0
        %v569 = vpop.f32.mrb[0].mxu0
        %v570 = vadd.f32 0.0, %v569
        %v571 = vpop.f32.mrb[0].mxu0
        %572 = vmatprep.mubr.bf16.mxu0 0
        %573 = vmatmul.mubr.bf16.gmra.mrb[0].mxu0 %v439
        %v574 = vpop.f32.mrb[0].mxu0
        %v575 = vadd.f32 0.0, %v574
        %v576 = vpop.f32.mrb[0].mxu0
        %v577 = vpop.f32.mrb[0].mxu0
        %v578 = vadd.f32 0.0, %v577
        %v579 = vpop.f32.mrb[0].mxu0
        %580 = vmatprep.mubr.bf16.mxu0 0
        %581 = vmatmul.mubr.bf16.gmra.mrb[0].mxu0 %v442
        %v582 = vpop.f32.mrb[0].mxu0
        %v583 = vadd.f32 0.0, %v582
        %v584 = vpop.f32.mrb[0].mxu0
        %v585 = vpop.f32.mrb[0].mxu0
        %v586 = vadd.f32 0.0, %v585
        %v587 = vpop.f32.mrb[0].mxu0
        %588 = vmatprep.mubr.bf16.mxu0 0
        %589 = vmatmul.mubr.bf16.gmra.mrb[0].mxu0 %v445
        %v590 = vpop.f32.mrb[0].mxu0
        %v591 = vadd.f32 0.0, %v590
        %v592 = vpop.f32.mrb[0].mxu0
        %v593 = vpop.f32.mrb[0].mxu0
        %v594 = vadd.f32 0.0, %v593
        %v595 = vpop.f32.mrb[0].mxu0
        %596 = vmatprep.mubr.bf16.mxu0 0
        %597 = vmatmul.mubr.bf16.gmra.mrb[0].mxu0 %v448
        %v598 = vpop.f32.mrb[0].mxu0
        %v599 = vadd.f32 0.0, %v598
        %v600 = vpop.f32.mrb[0].mxu0
        %v601 = vpop.f32.mrb[0].mxu0
        %v602 = vadd.f32 0.0, %v601
        %v603 = vpop.f32.mrb[0].mxu0
        %604 = vmatprep.mubr.bf16.mxu0 0
        %605 = vmatmul.mubr.bf16.gmra.mrb[0].mxu0 %v451
        %v606 = vpop.f32.mrb[0].mxu0
        %v607 = vadd.f32 0.0, %v606
        %v608 = vpop.f32.mrb[0].mxu0
        %v609 = vpop.f32.mrb[0].mxu0
        %v610 = vadd.f32 0.0, %v609
        %v611 = vpop.f32.mrb[0].mxu0
        %612 = vmatprep.mubr.bf16.mxu0 0
        %613 = vmatmul.mubr.bf16.gmra.mrb[0].mxu0 %v454
        %v614 = vpop.f32.mrb[0].mxu0
        %v615 = vadd.f32 0.0, %v614
        %v616 = vpop.f32.mrb[0].mxu0
        %v617 = vpop.f32.mrb[0].mxu0
        %v618 = vadd.f32 0.0, %v617
        %v619 = vpop.f32.mrb[0].mxu0
        %620 = vdwg.mxu0
        %v621 = vld [vmem:[%s3] sm:$0x1]
        %623 = vrot.lane.b32.xlu0 %v498, 112
        %v624 = vpop.permute.xlu0 %623
        %v626 = vadd.f32 %v495, %v624
        %628 = vrot.lane.b32.xlu0 %v503, 96
        %v629 = vpop.permute.xlu0 %628
        %v631 = vadd.f32 %v626, %v629
        %633 = vrot.lane.b32.xlu0 %v506, 80
        %v634 = vpop.permute.xlu0 %633
        %v636 = vadd.f32 %v631, %v634
        %v638 = vlaneseq
        %v639 = vshrl.u32 %v638, 7
        %v640 = vsub.s32 0, %v639
        %v641 = vrot.slane %v621, %v640
        %v643 = vadd.f32 %v636, %v641
        %644 = vst.msk [vmem:[#allocation3] sm:$0xff] %vm308, %v643
        %646 = vrot.lane.b32.xlu0 %v514, 112
        %v647 = vpop.permute.xlu0 %646
        %v649 = vadd.f32 %v511, %v647
        %651 = vrot.lane.b32.xlu0 %v519, 96
        %v652 = vpop.permute.xlu0 %651
        %v654 = vadd.f32 %v649, %v652
        %656 = vrot.lane.b32.xlu0 %v522, 80
        %v657 = vpop.permute.xlu0 %656
        %v659 = vadd.f32 %v654, %v657
        %v660 = vadd.f32 %v659, %v641
        %661 = vst.msk [vmem:[#allocation3 + $0x8] sm:$0xff] %vm308, %v660
        %663 = vrot.lane.b32.xlu0 %v530, 112
        %v664 = vpop.permute.xlu0 %663
        %v666 = vadd.f32 %v527, %v664
        %668 = vrot.lane.b32.xlu0 %v535, 96
        %v669 = vpop.permute.xlu0 %668
        %v671 = vadd.f32 %v666, %v669
        %673 = vrot.lane.b32.xlu0 %v538, 80
        %v674 = vpop.permute.xlu0 %673
        %v676 = vadd.f32 %v671, %v674
        %v677 = vadd.f32 %v676, %v641
        %678 = vst.msk [vmem:[#allocation3 + $0x10] sm:$0xff] %vm308, %v677
        %680 = vrot.lane.b32.xlu0 %v546, 112
        %v681 = vpop.permute.xlu0 %680
        %v683 = vadd.f32 %v543, %v681
        %685 = vrot.lane.b32.xlu0 %v551, 96
        %v686 = vpop.permute.xlu0 %685
        %v688 = vadd.f32 %v683, %v686
        %690 = vrot.lane.b32.xlu0 %v554, 80
        %v691 = vpop.permute.xlu0 %690
        %v693 = vadd.f32 %v688, %v691
        %v694 = vadd.f32 %v693, %v641
        %695 = vst.msk [vmem:[#allocation3 + $0x18] sm:$0xff] %vm308, %v694
        %697 = vrot.lane.b32.xlu0 %v562, 112
        %v698 = vpop.permute.xlu0 %697
        %v700 = vadd.f32 %v559, %v698
        %702 = vrot.lane.b32.xlu0 %v567, 96
        %v703 = vpop.permute.xlu0 %702
        %v705 = vadd.f32 %v700, %v703
        %707 = vrot.lane.b32.xlu0 %v570, 80
        %v708 = vpop.permute.xlu0 %707
        %v710 = vadd.f32 %v705, %v708
        %v711 = vadd.f32 %v710, %v641
        %712 = vst.msk [vmem:[#allocation3 + $0x20] sm:$0xff] %vm308, %v711
        %714 = vrot.lane.b32.xlu0 %v578, 112
        %v715 = vpop.permute.xlu0 %714
        %v717 = vadd.f32 %v575, %v715
        %719 = vrot.lane.b32.xlu0 %v583, 96
        %v720 = vpop.permute.xlu0 %719
        %v722 = vadd.f32 %v717, %v720
        %724 = vrot.lane.b32.xlu0 %v586, 80
        %v725 = vpop.permute.xlu0 %724
        %v727 = vadd.f32 %v722, %v725
        %v728 = vadd.f32 %v727, %v641
        %729 = vst.msk [vmem:[#allocation3 + $0x28] sm:$0xff] %vm308, %v728
        %731 = vrot.lane.b32.xlu0 %v594, 112
        %v732 = vpop.permute.xlu0 %731
        %v734 = vadd.f32 %v591, %v732
        %736 = vrot.lane.b32.xlu0 %v599, 96
        %v737 = vpop.permute.xlu0 %736
        %v739 = vadd.f32 %v734, %v737
        %741 = vrot.lane.b32.xlu0 %v602, 80
        %v742 = vpop.permute.xlu0 %741
        %v744 = vadd.f32 %v739, %v742
        %v745 = vadd.f32 %v744, %v641
        %746 = vst.msk [vmem:[#allocation3 + $0x30] sm:$0xff] %vm308, %v745
        %748 = vrot.lane.b32.xlu0 %v610, 112
        %v749 = vpop.permute.xlu0 %748
        %v751 = vadd.f32 %v607, %v749
        %753 = vrot.lane.b32.xlu0 %v615, 96
        %v754 = vpop.permute.xlu0 %753
        %v756 = vadd.f32 %v751, %v754
        %758 = vrot.lane.b32.xlu0 %v618, 80
        %v759 = vpop.permute.xlu0 %758
        %v761 = vadd.f32 %v756, %v759
        %v762 = vadd.f32 %v761, %v641
        %763 = vst.msk [vmem:[#allocation3 + $0x38] sm:$0xff] %vm308, %v762
        %v764 = vld [vmem:[#allocation3] sm:$0xff]
        %v765 = vld [vmem:[#allocation3 + $0x8] sm:$0xff]
        %v766 = vld [vmem:[#allocation3 + $0x10] sm:$0xff]
        %v767 = vld [vmem:[#allocation3 + $0x18] sm:$0xff]
        %v768 = vld [vmem:[#allocation3 + $0x20] sm:$0xff]
        %v769 = vld [vmem:[#allocation3 + $0x28] sm:$0xff]
        %v770 = vld [vmem:[#allocation3 + $0x30] sm:$0xff]
        %v771 = vld [vmem:[#allocation3 + $0x38] sm:$0xff]
        %vm772 = vcmp.ge.f32.partialorder %v764, 0.0
        %vm773 = vcmp.ge.f32.partialorder %v765, 0.0
        %vm774 = vcmp.ge.f32.partialorder %v766, 0.0
        %vm775 = vcmp.ge.f32.partialorder %v767, 0.0
        %vm776 = vcmp.ge.f32.partialorder %v768, 0.0
        %vm777 = vcmp.ge.f32.partialorder %v769, 0.0
        %vm778 = vcmp.ge.f32.partialorder %v770, 0.0
        %vm779 = vcmp.ge.f32.partialorder %v771, 0.0
        %v780 = vstv %s307
        %v781 = vmul.f32 %v780, %v764
        %v782 = vmul.f32 %v780, %v765
        %v783 = vmul.f32 %v780, %v766
        %v784 = vmul.f32 %v780, %v767
        %v785 = vmul.f32 %v780, %v768
        %v786 = vmul.f32 %v780, %v769
        %v787 = vmul.f32 %v780, %v770
        %v788 = vmul.f32 %v780, %v771
        %v789 = vsel %vm772, %v764, %v781
        %v790 = vsel %vm773, %v765, %v782
        %v791 = vsel %vm774, %v766, %v783
        %v792 = vsel %vm775, %v767, %v784
        %v793 = vsel %vm776, %v768, %v785
        %v794 = vsel %vm777, %v769, %v786
        %v795 = vsel %vm778, %v770, %v787
        %v796 = vsel %vm779, %v771, %v788
        %v797 = vpack.c.bf16 %v790, %v789
        %v798 = vpack.c.bf16 %v792, %v791
        %v799 = vpack.c.bf16 %v794, %v793
        %v800 = vpack.c.bf16 %v796, %v795
        %v801 = vld [vmem:[%s4] sm:$0xf]
        %v802 = vld [vmem:[%s4 + $0x4] sm:$0xf]
        %v803 = vld [vmem:[%s5] sm:$0x1]
        %v805 = vlaneseq
        %v806 = vshrl.u32 %v805, 7
        %v807 = vsub.s32 0, %v806
        %v808 = vrot.slane %v803, %v807
        %v812 = vunpack.c.l.b16 %v801
        %v813 = vunpack.c.l.b16 %v802
        %v814 = vpack.c.b16 %v813, %v812
        %v817 = vsel %vm308, %v797, 0
        %v820 = vsel %vm308, %v798, 0
        %v823 = vsel %vm308, %v799, 0
        %v826 = vsel %vm308, %v800, 0
        %828 = vmatprep.subr.bf16.mxu0 0
        %829 = vmatpush1.bf16.msra.mxu0 %v814
        %830 = vmatprep.subr.bf16.mxu0 0
        %831 = vmatpush1.bf16.msra.mxu0 0
        %832 = vmatprep.subr.bf16.mxu0 0
        %833 = vmatpush1.bf16.msra.mxu0 0
        %834 = vmatprep.subr.bf16.mxu0 0
        %835 = vmatpush1.bf16.msra.mxu0 0
        %836 = vmatprep.subr.bf16.mxu0 0
        %837 = vmatpush1.bf16.msra.mxu0 0
        %838 = vmatprep.subr.bf16.mxu0 0
        %839 = vmatpush1.bf16.msra.mxu0 0
        %840 = vmatprep.subr.bf16.mxu0 0
        %841 = vmatpush1.bf16.msra.mxu0 0
        %842 = vmatprep.subr.bf16.mxu0 0
        %843 = vmatpush1.bf16.msra.mxu0 0
        %844 = vmatprep.subr.bf16.mxu0 0
        %845 = vmatpush1.bf16.msra.mxu0 0
        %846 = vmatprep.subr.bf16.mxu0 0
        %847 = vmatpush1.bf16.msra.mxu0 0
        %848 = vmatprep.subr.bf16.mxu0 0
        %849 = vmatpush1.bf16.msra.mxu0 0
        %850 = vmatprep.subr.bf16.mxu0 0
        %851 = vmatpush1.bf16.msra.mxu0 0
        %852 = vmatprep.subr.bf16.mxu0 0
        %853 = vmatpush1.bf16.msra.mxu0 0
        %854 = vmatprep.subr.bf16.mxu0 0
        %855 = vmatpush1.bf16.msra.mxu0 0
        %856 = vmatprep.subr.bf16.mxu0 0
        %857 = vmatpush1.bf16.msra.mxu0 0
        %858 = vmatprep.subr.bf16.mxu0 0
        %859 = vmatpush1.bf16.msra.mxu0 0
        %860 = vmatprep.mubr.bf16.mxu0 0
        %861 = vmatmul.mubr.bf16.gmra.mrb[0].mxu0 %v817
        %v862 = vpop.f32.mrb[0].mxu0
        %v863 = vadd.f32 %v808, %v862
        %v864 = vpop.f32.mrb[0].mxu0
        %v865 = vpop.f32.mrb[0].mxu0
        %v866 = vadd.f32 %v808, %v865
        %v867 = vpop.f32.mrb[0].mxu0
        %868 = vmatprep.mubr.bf16.mxu0 0
        %869 = vmatmul.mubr.bf16.gmra.mrb[0].mxu0 %v820
        %v870 = vpop.f32.mrb[0].mxu0
        %v871 = vadd.f32 %v808, %v870
        %v872 = vpop.f32.mrb[0].mxu0
        %v873 = vpop.f32.mrb[0].mxu0
        %v874 = vadd.f32 %v808, %v873
        %v875 = vpop.f32.mrb[0].mxu0
        %876 = vmatprep.mubr.bf16.mxu0 0
        %877 = vmatmul.mubr.bf16.gmra.mrb[0].mxu0 %v823
        %v878 = vpop.f32.mrb[0].mxu0
        %v879 = vadd.f32 %v808, %v878
        %v880 = vpop.f32.mrb[0].mxu0
        %v881 = vpop.f32.mrb[0].mxu0
        %v882 = vadd.f32 %v808, %v881
        %v883 = vpop.f32.mrb[0].mxu0
        %884 = vmatprep.mubr.bf16.mxu0 0
        %885 = vmatmul.mubr.bf16.gmra.mrb[0].mxu0 %v826
        %v886 = vpop.f32.mrb[0].mxu0
        %v887 = vadd.f32 %v808, %v886
        %v888 = vpop.f32.mrb[0].mxu0
        %v889 = vpop.f32.mrb[0].mxu0
        %v890 = vadd.f32 %v808, %v889
        %v891 = vpop.f32.mrb[0].mxu0
        %892 = vdwg.mxu0
        %v893 = vmax.f32 %v863, 0.0
        %v894 = vmax.f32 %v866, 0.0
        %v895 = vmax.f32 %v871, 0.0
        %v896 = vmax.f32 %v874, 0.0
        %v897 = vmax.f32 %v879, 0.0
        %v898 = vmax.f32 %v882, 0.0
        %v899 = vmax.f32 %v887, 0.0
        %v900 = vmax.f32 %v890, 0.0
        %s901 = scalar_lea.vmem [#allocation2], 48
        %902 = vst.msk [vmem:[%s901 + $0x3] sm:$0xff] %vm308, %v893
        %s903 = scalar_lea.vmem [#allocation2], 64
        %904 = vst.msk [vmem:[%s903 + $0x3] sm:$0xff] %vm308, %v894
        %s905 = scalar_lea.vmem [#allocation2], 80
        %906 = vst.msk [vmem:[%s905 + $0x3] sm:$0xff] %vm308, %v895
        %s907 = scalar_lea.vmem [#allocation2], 96
        %908 = vst.msk [vmem:[%s907 + $0x3] sm:$0xff] %vm308, %v896
        %s909 = scalar_lea.vmem [#allocation2], 112
        %910 = vst.msk [vmem:[%s909 + $0x3] sm:$0xff] %vm308, %v897
        %s911 = scalar_lea.vmem [#allocation2], 128
        %912 = vst.msk [vmem:[%s911 + $0x3] sm:$0xff] %vm308, %v898
        %s913 = scalar_lea.vmem [#allocation2], 144
        %914 = vst.msk [vmem:[%s913 + $0x3] sm:$0xff] %vm308, %v899
        %s915 = scalar_lea.vmem [#allocation2], 160
        %916 = vst.msk [vmem:[%s915 + $0x3] sm:$0xff] %vm308, %v900
        %v917 = vld [vmem:[%s6] sm:$0xff]
        %v918 = vld [vmem:[%s6 + $0x8] sm:$0xff]
        %v919 = vld [vmem:[%s6 + $0x10] sm:$0xff]
        %v920 = vld [vmem:[%s6 + $0x18] sm:$0xff]
        %v921 = vld [vmem:[%s6 + $0x20] sm:$0xff]
        %v922 = vld [vmem:[%s6 + $0x28] sm:$0xff]
        %v923 = vld [vmem:[%s6 + $0x30] sm:$0x1]
        %v924 = vld [vmem:[%s7] sm:$0x1]
        %v925 = vld [vmem:[#allocation2] sm:$0xff]
        %v926 = vld [vmem:[#allocation2 + $0x10] sm:$0xff]
        %v927 = vld [vmem:[#allocation2 + $0x20] sm:$0xff]
        %v928 = vld [vmem:[#allocation2 + $0x30] sm:$0xff]
        %v929 = vld [vmem:[#allocation2 + $0x40] sm:$0xff]
        %v930 = vld [vmem:[#allocation2 + $0x50] sm:$0xff]
        %v931 = vld [vmem:[#allocation2 + $0x60] sm:$0xff]
        %v932 = vld [vmem:[#allocation2 + $0x70] sm:$0xff]
        %v933 = vlaneseq
        %v934 = vshrl.u32 %v933, 7
        %v935 = vsub.s32 0, %v934
        %v936 = vrot.slane %v917, %v935
        %v937 = vmul.f32 %v925, %v936
        %v938 = vmul.f32 %v926, %v936
        %v939 = vmul.f32 %v927, %v936
        %v940 = vmul.f32 %v928, %v936
        %v941 = vmul.f32 %v929, %v936
        %v942 = vmul.f32 %v930, %v936
        %v943 = vmul.f32 %v931, %v936
        %v944 = vmul.f32 %v932, %v936
        %v945 = vadd.f32 %v937, 0.0
        %v946 = vadd.f32 %v938, 0.0
        %v947 = vadd.f32 %v939, 0.0
        %v948 = vadd.f32 %v940, 0.0
        %v949 = vadd.f32 %v941, 0.0
        %v950 = vadd.f32 %v942, 0.0
        %v951 = vadd.f32 %v943, 0.0
        %v952 = vadd.f32 %v944, 0.0
        %v953 = vld [vmem:[#allocation2 + $0x1] sm:$0xff]
        %v954 = vld [vmem:[#allocation2 + $0x11] sm:$0xff]
        %v955 = vld [vmem:[#allocation2 + $0x21] sm:$0xff]
        %v956 = vld [vmem:[#allocation2 + $0x31] sm:$0xff]
        %v957 = vld [vmem:[#allocation2 + $0x41] sm:$0xff]
        %v958 = vld [vmem:[#allocation2 + $0x51] sm:$0xff]
        %v959 = vld [vmem:[#allocation2 + $0x61] sm:$0xff]
        %v960 = vld [vmem:[#allocation2 + $0x71] sm:$0xff]
        %v961 = vlaneseq
        %v962 = vshrl.u32 %v961, 7
        %v963 = vsub.s32 1, %v962
        %v964 = vrot.slane %v917, %v963
        %v965 = vmul.f32 %v953, %v964
        %v966 = vmul.f32 %v954, %v964
        %v967 = vmul.f32 %v955, %v964
        %v968 = vmul.f32 %v956, %v964
        %v969 = vmul.f32 %v957, %v964
        %v970 = vmul.f32 %v958, %v964
        %v971 = vmul.f32 %v959, %v964
        %v972 = vmul.f32 %v960, %v964
        %v973 = vadd.f32 %v945, %v965
        %v974 = vadd.f32 %v946, %v966
        %v975 = vadd.f32 %v947, %v967
        %v976 = vadd.f32 %v948, %v968
        %v977 = vadd.f32 %v949, %v969
        %v978 = vadd.f32 %v950, %v970
        %v979 = vadd.f32 %v951, %v971
        %v980 = vadd.f32 %v952, %v972
        %v981 = vld [vmem:[#allocation2 + $0x2] sm:$0xff]
        %v982 = vld [vmem:[#allocation2 + $0x12] sm:$0xff]
        %v983 = vld [vmem:[#allocation2 + $0x22] sm:$0xff]
        %v984 = vld [vmem:[#allocation2 + $0x32] sm:$0xff]
        %v985 = vld [vmem:[#allocation2 + $0x42] sm:$0xff]
        %v986 = vld [vmem:[#allocation2 + $0x52] sm:$0xff]
        %v987 = vld [vmem:[#allocation2 + $0x62] sm:$0xff]
        %v988 = vld [vmem:[#allocation2 + $0x72] sm:$0xff]
        %v989 = vlaneseq
        %v990 = vshrl.u32 %v989, 7
        %v991 = vsub.s32 2, %v990
        %v992 = vrot.slane %v917, %v991
        %v993 = vmul.f32 %v981, %v992
        %v994 = vmul.f32 %v982, %v992
        %v995 = vmul.f32 %v983, %v992
        %v996 = vmul.f32 %v984, %v992
        %v997 = vmul.f32 %v985, %v992
        %v998 = vmul.f32 %v986, %v992
        %v999 = vmul.f32 %v987, %v992
        %v1000 = vmul.f32 %v988, %v992
        %v1001 = vadd.f32 %v973, %v993
        %v1002 = vadd.f32 %v974, %v994
        %v1003 = vadd.f32 %v975, %v995
        %v1004 = vadd.f32 %v976, %v996
        %v1005 = vadd.f32 %v977, %v997
        %v1006 = vadd.f32 %v978, %v998
        %v1007 = vadd.f32 %v979, %v999
        %v1008 = vadd.f32 %v980, %v1000
        %v1009 = vld [vmem:[#allocation2 + $0x3] sm:$0xff]
        %v1010 = vld [vmem:[#allocation2 + $0x13] sm:$0xff]
        %v1011 = vld [vmem:[#allocation2 + $0x23] sm:$0xff]
        %v1012 = vld [vmem:[#allocation2 + $0x33] sm:$0xff]
        %v1013 = vld [vmem:[#allocation2 + $0x43] sm:$0xff]
        %v1014 = vld [vmem:[#allocation2 + $0x53] sm:$0xff]
        %v1015 = vld [vmem:[#allocation2 + $0x63] sm:$0xff]
        %v1016 = vld [vmem:[#allocation2 + $0x73] sm:$0xff]
        %v1017 = vlaneseq
        %v1018 = vshrl.u32 %v1017, 7
        %v1019 = vsub.s32 3, %v1018
        %v1020 = vrot.slane %v917, %v1019
        %v1021 = vmul.f32 %v1009, %v1020
        %v1022 = vmul.f32 %v1010, %v1020
        %v1023 = vmul.f32 %v1011, %v1020
        %v1024 = vmul.f32 %v1012, %v1020
        %v1025 = vmul.f32 %v1013, %v1020
        %v1026 = vmul.f32 %v1014, %v1020
        %v1027 = vmul.f32 %v1015, %v1020
        %v1028 = vmul.f32 %v1016, %v1020
        %v1029 = vadd.f32 %v1001, %v1021
        %v1030 = vadd.f32 %v1002, %v1022
        %v1031 = vadd.f32 %v1003, %v1023
        %v1032 = vadd.f32 %v1004, %v1024
        %v1033 = vadd.f32 %v1005, %v1025
        %v1034 = vadd.f32 %v1006, %v1026
        %v1035 = vadd.f32 %v1007, %v1027
        %v1036 = vadd.f32 %v1008, %v1028
        %v1037 = vld [vmem:[#allocation2 + $0x4] sm:$0xff]
        %v1038 = vld [vmem:[#allocation2 + $0x14] sm:$0xff]
        %v1039 = vld [vmem:[#allocation2 + $0x24] sm:$0xff]
        %v1040 = vld [vmem:[#allocation2 + $0x34] sm:$0xff]
        %v1041 = vld [vmem:[#allocation2 + $0x44] sm:$0xff]
        %v1042 = vld [vmem:[#allocation2 + $0x54] sm:$0xff]
        %v1043 = vld [vmem:[#allocation2 + $0x64] sm:$0xff]
        %v1044 = vld [vmem:[#allocation2 + $0x74] sm:$0xff]
        %v1045 = vlaneseq
        %v1046 = vshrl.u32 %v1045, 7
        %v1047 = vsub.s32 4, %v1046
        %v1048 = vrot.slane %v917, %v1047
        %v1049 = vmul.f32 %v1037, %v1048
        %v1050 = vmul.f32 %v1038, %v1048
        %v1051 = vmul.f32 %v1039, %v1048
        %v1052 = vmul.f32 %v1040, %v1048
        %v1053 = vmul.f32 %v1041, %v1048
        %v1054 = vmul.f32 %v1042, %v1048
        %v1055 = vmul.f32 %v1043, %v1048
        %v1056 = vmul.f32 %v1044, %v1048
        %v1057 = vadd.f32 %v1029, %v1049
        %v1058 = vadd.f32 %v1030, %v1050
        %v1059 = vadd.f32 %v1031, %v1051
        %v1060 = vadd.f32 %v1032, %v1052
        %v1061 = vadd.f32 %v1033, %v1053
        %v1062 = vadd.f32 %v1034, %v1054
        %v1063 = vadd.f32 %v1035, %v1055
        %v1064 = vadd.f32 %v1036, %v1056
        %v1065 = vld [vmem:[#allocation2 + $0x5] sm:$0xff]
        %v1066 = vld [vmem:[#allocation2 + $0x15] sm:$0xff]
        %v1067 = vld [vmem:[#allocation2 + $0x25] sm:$0xff]
        %v1068 = vld [vmem:[#allocation2 + $0x35] sm:$0xff]
        %v1069 = vld [vmem:[#allocation2 + $0x45] sm:$0xff]
        %v1070 = vld [vmem:[#allocation2 + $0x55] sm:$0xff]
        %v1071 = vld [vmem:[#allocation2 + $0x65] sm:$0xff]
        %v1072 = vld [vmem:[#allocation2 + $0x75] sm:$0xff]
        %v1073 = vlaneseq
        %v1074 = vshrl.u32 %v1073, 7
        %v1075 = vsub.s32 5, %v1074
        %v1076 = vrot.slane %v917, %v1075
        %v1077 = vmul.f32 %v1065, %v1076
        %v1078 = vmul.f32 %v1066, %v1076
        %v1079 = vmul.f32 %v1067, %v1076
        %v1080 = vmul.f32 %v1068, %v1076
        %v1081 = vmul.f32 %v1069, %v1076
        %v1082 = vmul.f32 %v1070, %v1076
        %v1083 = vmul.f32 %v1071, %v1076
        %v1084 = vmul.f32 %v1072, %v1076
        %v1085 = vadd.f32 %v1057, %v1077
        %v1086 = vadd.f32 %v1058, %v1078
        %v1087 = vadd.f32 %v1059, %v1079
        %v1088 = vadd.f32 %v1060, %v1080
        %v1089 = vadd.f32 %v1061, %v1081
        %v1090 = vadd.f32 %v1062, %v1082
        %v1091 = vadd.f32 %v1063, %v1083
        %v1092 = vadd.f32 %v1064, %v1084
        %v1093 = vld [vmem:[#allocation2 + $0x6] sm:$0xff]
        %v1094 = vld [vmem:[#allocation2 + $0x16] sm:$0xff]
        %v1095 = vld [vmem:[#allocation2 + $0x26] sm:$0xff]
        %v1096 = vld [vmem:[#allocation2 + $0x36] sm:$0xff]
        %v1097 = vld [vmem:[#allocation2 + $0x46] sm:$0xff]
        %v1098 = vld [vmem:[#allocation2 + $0x56] sm:$0xff]
        %v1099 = vld [vmem:[#allocation2 + $0x66] sm:$0xff]
        %v1100 = vld [vmem:[#allocation2 + $0x76] sm:$0xff]
        %v1101 = vlaneseq
        %v1102 = vshrl.u32 %v1101, 7
        %v1103 = vsub.s32 6, %v1102
        %v1104 = vrot.slane %v917, %v1103
        %v1105 = vmul.f32 %v1093, %v1104
        %v1106 = vmul.f32 %v1094, %v1104
        %v1107 = vmul.f32 %v1095, %v1104
        %v1108 = vmul.f32 %v1096, %v1104
        %v1109 = vmul.f32 %v1097, %v1104
        %v1110 = vmul.f32 %v1098, %v1104
        %v1111 = vmul.f32 %v1099, %v1104
        %v1112 = vmul.f32 %v1100, %v1104
        %v1113 = vadd.f32 %v1085, %v1105
        %v1114 = vadd.f32 %v1086, %v1106
        %v1115 = vadd.f32 %v1087, %v1107
        %v1116 = vadd.f32 %v1088, %v1108
        %v1117 = vadd.f32 %v1089, %v1109
        %v1118 = vadd.f32 %v1090, %v1110
        %v1119 = vadd.f32 %v1091, %v1111
        %v1120 = vadd.f32 %v1092, %v1112
        %s1121 = scalar_lea.vmem [#allocation2], 16
        %v1122 = vld [vmem:[%s1121] sm:$0xff]
        %v1123 = vld [vmem:[%s1121 + $0x10] sm:$0xff]
        %v1124 = vld [vmem:[%s1121 + $0x20] sm:$0xff]
        %v1125 = vld [vmem:[%s1121 + $0x30] sm:$0xff]
        %v1126 = vld [vmem:[%s1121 + $0x40] sm:$0xff]
        %v1127 = vld [vmem:[%s1121 + $0x50] sm:$0xff]
        %v1128 = vld [vmem:[%s1121 + $0x60] sm:$0xff]
        %v1129 = vld [vmem:[%s1121 + $0x70] sm:$0xff]
        %v1130 = vlaneseq
        %v1131 = vshrl.u32 %v1130, 7
        %v1132 = vsub.s32 7, %v1131
        %v1133 = vrot.slane %v917, %v1132
        %v1134 = vmul.f32 %v1122, %v1133
        %v1135 = vmul.f32 %v1123, %v1133
        %v1136 = vmul.f32 %v1124, %v1133
        %v1137 = vmul.f32 %v1125, %v1133
        %v1138 = vmul.f32 %v1126, %v1133
        %v1139 = vmul.f32 %v1127, %v1133
        %v1140 = vmul.f32 %v1128, %v1133
        %v1141 = vmul.f32 %v1129, %v1133
        %v1142 = vadd.f32 %v1113, %v1134
        %v1143 = vadd.f32 %v1114, %v1135
        %v1144 = vadd.f32 %v1115, %v1136
        %v1145 = vadd.f32 %v1116, %v1137
        %v1146 = vadd.f32 %v1117, %v1138
        %v1147 = vadd.f32 %v1118, %v1139
        %v1148 = vadd.f32 %v1119, %v1140
        %v1149 = vadd.f32 %v1120, %v1141
        %v1150 = vld [vmem:[%s1121 + $0x1] sm:$0xff]
        %v1151 = vld [vmem:[%s1121 + $0x11] sm:$0xff]
        %v1152 = vld [vmem:[%s1121 + $0x21] sm:$0xff]
        %v1153 = vld [vmem:[%s1121 + $0x31] sm:$0xff]
        %v1154 = vld [vmem:[%s1121 + $0x41] sm:$0xff]
        %v1155 = vld [vmem:[%s1121 + $0x51] sm:$0xff]
        %v1156 = vld [vmem:[%s1121 + $0x61] sm:$0xff]
        %v1157 = vld [vmem:[%s1121 + $0x71] sm:$0xff]
        %v1158 = vlaneseq
        %v1159 = vshrl.u32 %v1158, 7
        %v1160 = vsub.s32 0, %v1159
        %v1161 = vrot.slane %v918, %v1160
        %v1162 = vmul.f32 %v1150, %v1161
        %v1163 = vmul.f32 %v1151, %v1161
        %v1164 = vmul.f32 %v1152, %v1161
        %v1165 = vmul.f32 %v1153, %v1161
        %v1166 = vmul.f32 %v1154, %v1161
        %v1167 = vmul.f32 %v1155, %v1161
        %v1168 = vmul.f32 %v1156, %v1161
        %v1169 = vmul.f32 %v1157, %v1161
        %v1170 = vadd.f32 %v1142, %v1162
        %v1171 = vadd.f32 %v1143, %v1163
        %v1172 = vadd.f32 %v1144, %v1164
        %v1173 = vadd.f32 %v1145, %v1165
        %v1174 = vadd.f32 %v1146, %v1166
        %v1175 = vadd.f32 %v1147, %v1167
        %v1176 = vadd.f32 %v1148, %v1168
        %v1177 = vadd.f32 %v1149, %v1169
        %v1178 = vld [vmem:[%s1121 + $0x2] sm:$0xff]
        %v1179 = vld [vmem:[%s1121 + $0x12] sm:$0xff]
        %v1180 = vld [vmem:[%s1121 + $0x22] sm:$0xff]
        %v1181 = vld [vmem:[%s1121 + $0x32] sm:$0xff]
        %v1182 = vld [vmem:[%s1121 + $0x42] sm:$0xff]
        %v1183 = vld [vmem:[%s1121 + $0x52] sm:$0xff]
        %v1184 = vld [vmem:[%s1121 + $0x62] sm:$0xff]
        %v1185 = vld [vmem:[%s1121 + $0x72] sm:$0xff]
        %v1186 = vlaneseq
        %v1187 = vshrl.u32 %v1186, 7
        %v1188 = vsub.s32 1, %v1187
        %v1189 = vrot.slane %v918, %v1188
        %v1190 = vmul.f32 %v1178, %v1189
        %v1191 = vmul.f32 %v1179, %v1189
        %v1192 = vmul.f32 %v1180, %v1189
        %v1193 = vmul.f32 %v1181, %v1189
        %v1194 = vmul.f32 %v1182, %v1189
        %v1195 = vmul.f32 %v1183, %v1189
        %v1196 = vmul.f32 %v1184, %v1189
        %v1197 = vmul.f32 %v1185, %v1189
        %v1198 = vadd.f32 %v1170, %v1190
        %v1199 = vadd.f32 %v1171, %v1191
        %v1200 = vadd.f32 %v1172, %v1192
        %v1201 = vadd.f32 %v1173, %v1193
        %v1202 = vadd.f32 %v1174, %v1194
        %v1203 = vadd.f32 %v1175, %v1195
        %v1204 = vadd.f32 %v1176, %v1196
        %v1205 = vadd.f32 %v1177, %v1197
        %v1206 = vld [vmem:[%s1121 + $0x3] sm:$0xff]
        %v1207 = vld [vmem:[%s1121 + $0x13] sm:$0xff]
        %v1208 = vld [vmem:[%s1121 + $0x23] sm:$0xff]
        %v1209 = vld [vmem:[%s1121 + $0x33] sm:$0xff]
        %v1210 = vld [vmem:[%s1121 + $0x43] sm:$0xff]
        %v1211 = vld [vmem:[%s1121 + $0x53] sm:$0xff]
        %v1212 = vld [vmem:[%s1121 + $0x63] sm:$0xff]
        %v1213 = vld [vmem:[%s1121 + $0x73] sm:$0xff]
        %v1214 = vlaneseq
        %v1215 = vshrl.u32 %v1214, 7
        %v1216 = vsub.s32 2, %v1215
        %v1217 = vrot.slane %v918, %v1216
        %v1218 = vmul.f32 %v1206, %v1217
        %v1219 = vmul.f32 %v1207, %v1217
        %v1220 = vmul.f32 %v1208, %v1217
        %v1221 = vmul.f32 %v1209, %v1217
        %v1222 = vmul.f32 %v1210, %v1217
        %v1223 = vmul.f32 %v1211, %v1217
        %v1224 = vmul.f32 %v1212, %v1217
        %v1225 = vmul.f32 %v1213, %v1217
        %v1226 = vadd.f32 %v1198, %v1218
        %v1227 = vadd.f32 %v1199, %v1219
        %v1228 = vadd.f32 %v1200, %v1220
        %v1229 = vadd.f32 %v1201, %v1221
        %v1230 = vadd.f32 %v1202, %v1222
        %v1231 = vadd.f32 %v1203, %v1223
        %v1232 = vadd.f32 %v1204, %v1224
        %v1233 = vadd.f32 %v1205, %v1225
        %v1234 = vld [vmem:[%s1121 + $0x4] sm:$0xff]
        %v1235 = vld [vmem:[%s1121 + $0x14] sm:$0xff]
        %v1236 = vld [vmem:[%s1121 + $0x24] sm:$0xff]
        %v1237 = vld [vmem:[%s1121 + $0x34] sm:$0xff]
        %v1238 = vld [vmem:[%s1121 + $0x44] sm:$0xff]
        %v1239 = vld [vmem:[%s1121 + $0x54] sm:$0xff]
        %v1240 = vld [vmem:[%s1121 + $0x64] sm:$0xff]
        %v1241 = vld [vmem:[%s1121 + $0x74] sm:$0xff]
        %v1242 = vlaneseq
        %v1243 = vshrl.u32 %v1242, 7
        %v1244 = vsub.s32 3, %v1243
        %v1245 = vrot.slane %v918, %v1244
        %v1246 = vmul.f32 %v1234, %v1245
        %v1247 = vmul.f32 %v1235, %v1245
        %v1248 = vmul.f32 %v1236, %v1245
        %v1249 = vmul.f32 %v1237, %v1245
        %v1250 = vmul.f32 %v1238, %v1245
        %v1251 = vmul.f32 %v1239, %v1245
        %v1252 = vmul.f32 %v1240, %v1245
        %v1253 = vmul.f32 %v1241, %v1245
        %v1254 = vadd.f32 %v1226, %v1246
        %v1255 = vadd.f32 %v1227, %v1247
        %v1256 = vadd.f32 %v1228, %v1248
        %v1257 = vadd.f32 %v1229, %v1249
        %v1258 = vadd.f32 %v1230, %v1250
        %v1259 = vadd.f32 %v1231, %v1251
        %v1260 = vadd.f32 %v1232, %v1252
        %v1261 = vadd.f32 %v1233, %v1253
        %v1262 = vld [vmem:[%s1121 + $0x5] sm:$0xff]
        %v1263 = vld [vmem:[%s1121 + $0x15] sm:$0xff]
        %v1264 = vld [vmem:[%s1121 + $0x25] sm:$0xff]
        %v1265 = vld [vmem:[%s1121 + $0x35] sm:$0xff]
        %v1266 = vld [vmem:[%s1121 + $0x45] sm:$0xff]
        %v1267 = vld [vmem:[%s1121 + $0x55] sm:$0xff]
        %v1268 = vld [vmem:[%s1121 + $0x65] sm:$0xff]
        %v1269 = vld [vmem:[%s1121 + $0x75] sm:$0xff]
        %v1270 = vlaneseq
        %v1271 = vshrl.u32 %v1270, 7
        %v1272 = vsub.s32 4, %v1271
        %v1273 = vrot.slane %v918, %v1272
        %v1274 = vmul.f32 %v1262, %v1273
        %v1275 = vmul.f32 %v1263, %v1273
        %v1276 = vmul.f32 %v1264, %v1273
        %v1277 = vmul.f32 %v1265, %v1273
        %v1278 = vmul.f32 %v1266, %v1273
        %v1279 = vmul.f32 %v1267, %v1273
        %v1280 = vmul.f32 %v1268, %v1273
        %v1281 = vmul.f32 %v1269, %v1273
        %v1282 = vadd.f32 %v1254, %v1274
        %v1283 = vadd.f32 %v1255, %v1275
        %v1284 = vadd.f32 %v1256, %v1276
        %v1285 = vadd.f32 %v1257, %v1277
        %v1286 = vadd.f32 %v1258, %v1278
        %v1287 = vadd.f32 %v1259, %v1279
        %v1288 = vadd.f32 %v1260, %v1280
        %v1289 = vadd.f32 %v1261, %v1281
        %v1290 = vld [vmem:[%s1121 + $0x6] sm:$0xff]
        %v1291 = vld [vmem:[%s1121 + $0x16] sm:$0xff]
        %v1292 = vld [vmem:[%s1121 + $0x26] sm:$0xff]
        %v1293 = vld [vmem:[%s1121 + $0x36] sm:$0xff]
        %v1294 = vld [vmem:[%s1121 + $0x46] sm:$0xff]
        %v1295 = vld [vmem:[%s1121 + $0x56] sm:$0xff]
        %v1296 = vld [vmem:[%s1121 + $0x66] sm:$0xff]
        %v1297 = vld [vmem:[%s1121 + $0x76] sm:$0xff]
        %v1298 = vlaneseq
        %v1299 = vshrl.u32 %v1298, 7
        %v1300 = vsub.s32 5, %v1299
        %v1301 = vrot.slane %v918, %v1300
        %v1302 = vmul.f32 %v1290, %v1301
        %v1303 = vmul.f32 %v1291, %v1301
        %v1304 = vmul.f32 %v1292, %v1301
        %v1305 = vmul.f32 %v1293, %v1301
        %v1306 = vmul.f32 %v1294, %v1301
        %v1307 = vmul.f32 %v1295, %v1301
        %v1308 = vmul.f32 %v1296, %v1301
        %v1309 = vmul.f32 %v1297, %v1301
        %v1310 = vadd.f32 %v1282, %v1302
        %v1311 = vadd.f32 %v1283, %v1303
        %v1312 = vadd.f32 %v1284, %v1304
        %v1313 = vadd.f32 %v1285, %v1305
        %v1314 = vadd.f32 %v1286, %v1306
        %v1315 = vadd.f32 %v1287, %v1307
        %v1316 = vadd.f32 %v1288, %v1308
        %v1317 = vadd.f32 %v1289, %v1309
        %s1318 = scalar_lea.vmem [#allocation2], 32
        %v1319 = vld [vmem:[%s1318] sm:$0xff]
        %v1320 = vld [vmem:[%s1318 + $0x10] sm:$0xff]
        %v1321 = vld [vmem:[%s1318 + $0x20] sm:$0xff]
        %v1322 = vld [vmem:[%s1318 + $0x30] sm:$0xff]
        %v1323 = vld [vmem:[%s1318 + $0x40] sm:$0xff]
        %v1324 = vld [vmem:[%s1318 + $0x50] sm:$0xff]
        %v1325 = vld [vmem:[%s1318 + $0x60] sm:$0xff]
        %v1326 = vld [vmem:[%s1318 + $0x70] sm:$0xff]
        %v1327 = vlaneseq
        %v1328 = vshrl.u32 %v1327, 7
        %v1329 = vsub.s32 6, %v1328
        %v1330 = vrot.slane %v918, %v1329
        %v1331 = vmul.f32 %v1319, %v1330
        %v1332 = vmul.f32 %v1320, %v1330
        %v1333 = vmul.f32 %v1321, %v1330
        %v1334 = vmul.f32 %v1322, %v1330
        %v1335 = vmul.f32 %v1323, %v1330
        %v1336 = vmul.f32 %v1324, %v1330
        %v1337 = vmul.f32 %v1325, %v1330
        %v1338 = vmul.f32 %v1326, %v1330
        %v1339 = vadd.f32 %v1310, %v1331
        %v1340 = vadd.f32 %v1311, %v1332
        %v1341 = vadd.f32 %v1312, %v1333
        %v1342 = vadd.f32 %v1313, %v1334
        %v1343 = vadd.f32 %v1314, %v1335
        %v1344 = vadd.f32 %v1315, %v1336
        %v1345 = vadd.f32 %v1316, %v1337
        %v1346 = vadd.f32 %v1317, %v1338
        %v1347 = vld [vmem:[%s1318 + $0x1] sm:$0xff]
        %v1348 = vld [vmem:[%s1318 + $0x11] sm:$0xff]
        %v1349 = vld [vmem:[%s1318 + $0x21] sm:$0xff]
        %v1350 = vld [vmem:[%s1318 + $0x31] sm:$0xff]
        %v1351 = vld [vmem:[%s1318 + $0x41] sm:$0xff]
        %v1352 = vld [vmem:[%s1318 + $0x51] sm:$0xff]
        %v1353 = vld [vmem:[%s1318 + $0x61] sm:$0xff]
        %v1354 = vld [vmem:[%s1318 + $0x71] sm:$0xff]
        %v1355 = vlaneseq
        %v1356 = vshrl.u32 %v1355, 7
        %v1357 = vsub.s32 7, %v1356
        %v1358 = vrot.slane %v918, %v1357
        %v1359 = vmul.f32 %v1347, %v1358
        %v1360 = vmul.f32 %v1348, %v1358
        %v1361 = vmul.f32 %v1349, %v1358
        %v1362 = vmul.f32 %v1350, %v1358
        %v1363 = vmul.f32 %v1351, %v1358
        %v1364 = vmul.f32 %v1352, %v1358
        %v1365 = vmul.f32 %v1353, %v1358
        %v1366 = vmul.f32 %v1354, %v1358
        %v1367 = vadd.f32 %v1339, %v1359
        %v1368 = vadd.f32 %v1340, %v1360
        %v1369 = vadd.f32 %v1341, %v1361
        %v1370 = vadd.f32 %v1342, %v1362
        %v1371 = vadd.f32 %v1343, %v1363
        %v1372 = vadd.f32 %v1344, %v1364
        %v1373 = vadd.f32 %v1345, %v1365
        %v1374 = vadd.f32 %v1346, %v1366
        %v1375 = vld [vmem:[%s1318 + $0x2] sm:$0xff]
        %v1376 = vld [vmem:[%s1318 + $0x12] sm:$0xff]
        %v1377 = vld [vmem:[%s1318 + $0x22] sm:$0xff]
        %v1378 = vld [vmem:[%s1318 + $0x32] sm:$0xff]
        %v1379 = vld [vmem:[%s1318 + $0x42] sm:$0xff]
        %v1380 = vld [vmem:[%s1318 + $0x52] sm:$0xff]
        %v1381 = vld [vmem:[%s1318 + $0x62] sm:$0xff]
        %v1382 = vld [vmem:[%s1318 + $0x72] sm:$0xff]
        %v1383 = vlaneseq
        %v1384 = vshrl.u32 %v1383, 7
        %v1385 = vsub.s32 0, %v1384
        %v1386 = vrot.slane %v919, %v1385
        %v1387 = vmul.f32 %v1375, %v1386
        %v1388 = vmul.f32 %v1376, %v1386
        %v1389 = vmul.f32 %v1377, %v1386
        %v1390 = vmul.f32 %v1378, %v1386
        %v1391 = vmul.f32 %v1379, %v1386
        %v1392 = vmul.f32 %v1380, %v1386
        %v1393 = vmul.f32 %v1381, %v1386
        %v1394 = vmul.f32 %v1382, %v1386
        %v1395 = vadd.f32 %v1367, %v1387
        %v1396 = vadd.f32 %v1368, %v1388
        %v1397 = vadd.f32 %v1369, %v1389
        %v1398 = vadd.f32 %v1370, %v1390
        %v1399 = vadd.f32 %v1371, %v1391
        %v1400 = vadd.f32 %v1372, %v1392
        %v1401 = vadd.f32 %v1373, %v1393
        %v1402 = vadd.f32 %v1374, %v1394
        %v1403 = vld [vmem:[%s1318 + $0x3] sm:$0xff]
        %v1404 = vld [vmem:[%s1318 + $0x13] sm:$0xff]
        %v1405 = vld [vmem:[%s1318 + $0x23] sm:$0xff]
        %v1406 = vld [vmem:[%s1318 + $0x33] sm:$0xff]
        %v1407 = vld [vmem:[%s1318 + $0x43] sm:$0xff]
        %v1408 = vld [vmem:[%s1318 + $0x53] sm:$0xff]
        %v1409 = vld [vmem:[%s1318 + $0x63] sm:$0xff]
        %v1410 = vld [vmem:[%s1318 + $0x73] sm:$0xff]
        %v1411 = vlaneseq
        %v1412 = vshrl.u32 %v1411, 7
        %v1413 = vsub.s32 1, %v1412
        %v1414 = vrot.slane %v919, %v1413
        %v1415 = vmul.f32 %v1403, %v1414
        %v1416 = vmul.f32 %v1404, %v1414
        %v1417 = vmul.f32 %v1405, %v1414
        %v1418 = vmul.f32 %v1406, %v1414
        %v1419 = vmul.f32 %v1407, %v1414
        %v1420 = vmul.f32 %v1408, %v1414
        %v1421 = vmul.f32 %v1409, %v1414
        %v1422 = vmul.f32 %v1410, %v1414
        %v1423 = vadd.f32 %v1395, %v1415
        %v1424 = vadd.f32 %v1396, %v1416
        %v1425 = vadd.f32 %v1397, %v1417
        %v1426 = vadd.f32 %v1398, %v1418
        %v1427 = vadd.f32 %v1399, %v1419
        %v1428 = vadd.f32 %v1400, %v1420
        %v1429 = vadd.f32 %v1401, %v1421
        %v1430 = vadd.f32 %v1402, %v1422
        %v1431 = vld [vmem:[%s1318 + $0x4] sm:$0xff]
        %v1432 = vld [vmem:[%s1318 + $0x14] sm:$0xff]
        %v1433 = vld [vmem:[%s1318 + $0x24] sm:$0xff]
        %v1434 = vld [vmem:[%s1318 + $0x34] sm:$0xff]
        %v1435 = vld [vmem:[%s1318 + $0x44] sm:$0xff]
        %v1436 = vld [vmem:[%s1318 + $0x54] sm:$0xff]
        %v1437 = vld [vmem:[%s1318 + $0x64] sm:$0xff]
        %v1438 = vld [vmem:[%s1318 + $0x74] sm:$0xff]
        %v1439 = vlaneseq
        %v1440 = vshrl.u32 %v1439, 7
        %v1441 = vsub.s32 2, %v1440
        %v1442 = vrot.slane %v919, %v1441
        %v1443 = vmul.f32 %v1431, %v1442
        %v1444 = vmul.f32 %v1432, %v1442
        %v1445 = vmul.f32 %v1433, %v1442
        %v1446 = vmul.f32 %v1434, %v1442
        %v1447 = vmul.f32 %v1435, %v1442
        %v1448 = vmul.f32 %v1436, %v1442
        %v1449 = vmul.f32 %v1437, %v1442
        %v1450 = vmul.f32 %v1438, %v1442
        %v1451 = vadd.f32 %v1423, %v1443
        %v1452 = vadd.f32 %v1424, %v1444
        %v1453 = vadd.f32 %v1425, %v1445
        %v1454 = vadd.f32 %v1426, %v1446
        %v1455 = vadd.f32 %v1427, %v1447
        %v1456 = vadd.f32 %v1428, %v1448
        %v1457 = vadd.f32 %v1429, %v1449
        %v1458 = vadd.f32 %v1430, %v1450
        %v1459 = vld [vmem:[%s1318 + $0x5] sm:$0xff]
        %v1460 = vld [vmem:[%s1318 + $0x15] sm:$0xff]
        %v1461 = vld [vmem:[%s1318 + $0x25] sm:$0xff]
        %v1462 = vld [vmem:[%s1318 + $0x35] sm:$0xff]
        %v1463 = vld [vmem:[%s1318 + $0x45] sm:$0xff]
        %v1464 = vld [vmem:[%s1318 + $0x55] sm:$0xff]
        %v1465 = vld [vmem:[%s1318 + $0x65] sm:$0xff]
        %v1466 = vld [vmem:[%s1318 + $0x75] sm:$0xff]
        %v1467 = vlaneseq
        %v1468 = vshrl.u32 %v1467, 7
        %v1469 = vsub.s32 3, %v1468
        %v1470 = vrot.slane %v919, %v1469
        %v1471 = vmul.f32 %v1459, %v1470
        %v1472 = vmul.f32 %v1460, %v1470
        %v1473 = vmul.f32 %v1461, %v1470
        %v1474 = vmul.f32 %v1462, %v1470
        %v1475 = vmul.f32 %v1463, %v1470
        %v1476 = vmul.f32 %v1464, %v1470
        %v1477 = vmul.f32 %v1465, %v1470
        %v1478 = vmul.f32 %v1466, %v1470
        %v1479 = vadd.f32 %v1451, %v1471
        %v1480 = vadd.f32 %v1452, %v1472
        %v1481 = vadd.f32 %v1453, %v1473
        %v1482 = vadd.f32 %v1454, %v1474
        %v1483 = vadd.f32 %v1455, %v1475
        %v1484 = vadd.f32 %v1456, %v1476
        %v1485 = vadd.f32 %v1457, %v1477
        %v1486 = vadd.f32 %v1458, %v1478
        %v1487 = vld [vmem:[%s1318 + $0x6] sm:$0xff]
        %v1488 = vld [vmem:[%s1318 + $0x16] sm:$0xff]
        %v1489 = vld [vmem:[%s1318 + $0x26] sm:$0xff]
        %v1490 = vld [vmem:[%s1318 + $0x36] sm:$0xff]
        %v1491 = vld [vmem:[%s1318 + $0x46] sm:$0xff]
        %v1492 = vld [vmem:[%s1318 + $0x56] sm:$0xff]
        %v1493 = vld [vmem:[%s1318 + $0x66] sm:$0xff]
        %v1494 = vld [vmem:[%s1318 + $0x76] sm:$0xff]
        %v1495 = vlaneseq
        %v1496 = vshrl.u32 %v1495, 7
        %v1497 = vsub.s32 4, %v1496
        %v1498 = vrot.slane %v919, %v1497
        %v1499 = vmul.f32 %v1487, %v1498
        %v1500 = vmul.f32 %v1488, %v1498
        %v1501 = vmul.f32 %v1489, %v1498
        %v1502 = vmul.f32 %v1490, %v1498
        %v1503 = vmul.f32 %v1491, %v1498
        %v1504 = vmul.f32 %v1492, %v1498
        %v1505 = vmul.f32 %v1493, %v1498
        %v1506 = vmul.f32 %v1494, %v1498
        %v1507 = vadd.f32 %v1479, %v1499
        %v1508 = vadd.f32 %v1480, %v1500
        %v1509 = vadd.f32 %v1481, %v1501
        %v1510 = vadd.f32 %v1482, %v1502
        %v1511 = vadd.f32 %v1483, %v1503
        %v1512 = vadd.f32 %v1484, %v1504
        %v1513 = vadd.f32 %v1485, %v1505
        %v1514 = vadd.f32 %v1486, %v1506
        %v1515 = vld [vmem:[%s901] sm:$0xff]
        %v1516 = vld [vmem:[%s901 + $0x10] sm:$0xff]
        %v1517 = vld [vmem:[%s901 + $0x20] sm:$0xff]
        %v1518 = vld [vmem:[%s901 + $0x30] sm:$0xff]
        %v1519 = vld [vmem:[%s901 + $0x40] sm:$0xff]
        %v1520 = vld [vmem:[%s901 + $0x50] sm:$0xff]
        %v1521 = vld [vmem:[%s901 + $0x60] sm:$0xff]
        %v1522 = vld [vmem:[%s901 + $0x70] sm:$0xff]
        %v1523 = vlaneseq
        %v1524 = vshrl.u32 %v1523, 7
        %v1525 = vsub.s32 5, %v1524
        %v1526 = vrot.slane %v919, %v1525
        %v1527 = vmul.f32 %v1515, %v1526
        %v1528 = vmul.f32 %v1516, %v1526
        %v1529 = vmul.f32 %v1517, %v1526
        %v1530 = vmul.f32 %v1518, %v1526
        %v1531 = vmul.f32 %v1519, %v1526
        %v1532 = vmul.f32 %v1520, %v1526
        %v1533 = vmul.f32 %v1521, %v1526
        %v1534 = vmul.f32 %v1522, %v1526
        %v1535 = vadd.f32 %v1507, %v1527
        %v1536 = vadd.f32 %v1508, %v1528
        %v1537 = vadd.f32 %v1509, %v1529
        %v1538 = vadd.f32 %v1510, %v1530
        %v1539 = vadd.f32 %v1511, %v1531
        %v1540 = vadd.f32 %v1512, %v1532
        %v1541 = vadd.f32 %v1513, %v1533
        %v1542 = vadd.f32 %v1514, %v1534
        %v1543 = vld [vmem:[%s901 + $0x1] sm:$0xff]
        %v1544 = vld [vmem:[%s901 + $0x11] sm:$0xff]
        %v1545 = vld [vmem:[%s901 + $0x21] sm:$0xff]
        %v1546 = vld [vmem:[%s901 + $0x31] sm:$0xff]
        %v1547 = vld [vmem:[%s901 + $0x41] sm:$0xff]
        %v1548 = vld [vmem:[%s901 + $0x51] sm:$0xff]
        %v1549 = vld [vmem:[%s901 + $0x61] sm:$0xff]
        %v1550 = vld [vmem:[%s901 + $0x71] sm:$0xff]
        %v1551 = vlaneseq
        %v1552 = vshrl.u32 %v1551, 7
        %v1553 = vsub.s32 6, %v1552
        %v1554 = vrot.slane %v919, %v1553
        %v1555 = vmul.f32 %v1543, %v1554
        %v1556 = vmul.f32 %v1544, %v1554
        %v1557 = vmul.f32 %v1545, %v1554
        %v1558 = vmul.f32 %v1546, %v1554
        %v1559 = vmul.f32 %v1547, %v1554
        %v1560 = vmul.f32 %v1548, %v1554
        %v1561 = vmul.f32 %v1549, %v1554
        %v1562 = vmul.f32 %v1550, %v1554
        %v1563 = vadd.f32 %v1535, %v1555
        %v1564 = vadd.f32 %v1536, %v1556
        %v1565 = vadd.f32 %v1537, %v1557
        %v1566 = vadd.f32 %v1538, %v1558
        %v1567 = vadd.f32 %v1539, %v1559
        %v1568 = vadd.f32 %v1540, %v1560
        %v1569 = vadd.f32 %v1541, %v1561
        %v1570 = vadd.f32 %v1542, %v1562
        %v1571 = vld [vmem:[%s901 + $0x2] sm:$0xff]
        %v1572 = vld [vmem:[%s901 + $0x12] sm:$0xff]
        %v1573 = vld [vmem:[%s901 + $0x22] sm:$0xff]
        %v1574 = vld [vmem:[%s901 + $0x32] sm:$0xff]
        %v1575 = vld [vmem:[%s901 + $0x42] sm:$0xff]
        %v1576 = vld [vmem:[%s901 + $0x52] sm:$0xff]
        %v1577 = vld [vmem:[%s901 + $0x62] sm:$0xff]
        %v1578 = vld [vmem:[%s901 + $0x72] sm:$0xff]
        %v1579 = vlaneseq
        %v1580 = vshrl.u32 %v1579, 7
        %v1581 = vsub.s32 7, %v1580
        %v1582 = vrot.slane %v919, %v1581
        %v1583 = vmul.f32 %v1571, %v1582
        %v1584 = vmul.f32 %v1572, %v1582
        %v1585 = vmul.f32 %v1573, %v1582
        %v1586 = vmul.f32 %v1574, %v1582
        %v1587 = vmul.f32 %v1575, %v1582
        %v1588 = vmul.f32 %v1576, %v1582
        %v1589 = vmul.f32 %v1577, %v1582
        %v1590 = vmul.f32 %v1578, %v1582
        %v1591 = vadd.f32 %v1563, %v1583
        %v1592 = vadd.f32 %v1564, %v1584
        %v1593 = vadd.f32 %v1565, %v1585
        %v1594 = vadd.f32 %v1566, %v1586
        %v1595 = vadd.f32 %v1567, %v1587
        %v1596 = vadd.f32 %v1568, %v1588
        %v1597 = vadd.f32 %v1569, %v1589
        %v1598 = vadd.f32 %v1570, %v1590
        %v1599 = vld [vmem:[%s901 + $0x3] sm:$0xff]
        %v1600 = vld [vmem:[%s901 + $0x13] sm:$0xff]
        %v1601 = vld [vmem:[%s901 + $0x23] sm:$0xff]
        %v1602 = vld [vmem:[%s901 + $0x33] sm:$0xff]
        %v1603 = vld [vmem:[%s901 + $0x43] sm:$0xff]
        %v1604 = vld [vmem:[%s901 + $0x53] sm:$0xff]
        %v1605 = vld [vmem:[%s901 + $0x63] sm:$0xff]
        %v1606 = vld [vmem:[%s901 + $0x73] sm:$0xff]
        %v1607 = vlaneseq
        %v1608 = vshrl.u32 %v1607, 7
        %v1609 = vsub.s32 0, %v1608
        %v1610 = vrot.slane %v920, %v1609
        %v1611 = vmul.f32 %v1599, %v1610
        %v1612 = vmul.f32 %v1600, %v1610
        %v1613 = vmul.f32 %v1601, %v1610
        %v1614 = vmul.f32 %v1602, %v1610
        %v1615 = vmul.f32 %v1603, %v1610
        %v1616 = vmul.f32 %v1604, %v1610
        %v1617 = vmul.f32 %v1605, %v1610
        %v1618 = vmul.f32 %v1606, %v1610
        %v1619 = vadd.f32 %v1591, %v1611
        %v1620 = vadd.f32 %v1592, %v1612
        %v1621 = vadd.f32 %v1593, %v1613
        %v1622 = vadd.f32 %v1594, %v1614
        %v1623 = vadd.f32 %v1595, %v1615
        %v1624 = vadd.f32 %v1596, %v1616
        %v1625 = vadd.f32 %v1597, %v1617
        %v1626 = vadd.f32 %v1598, %v1618
        %v1627 = vld [vmem:[%s901 + $0x4] sm:$0xff]
        %v1628 = vld [vmem:[%s901 + $0x14] sm:$0xff]
        %v1629 = vld [vmem:[%s901 + $0x24] sm:$0xff]
        %v1630 = vld [vmem:[%s901 + $0x34] sm:$0xff]
        %v1631 = vld [vmem:[%s901 + $0x44] sm:$0xff]
        %v1632 = vld [vmem:[%s901 + $0x54] sm:$0xff]
        %v1633 = vld [vmem:[%s901 + $0x64] sm:$0xff]
        %v1634 = vld [vmem:[%s901 + $0x74] sm:$0xff]
        %v1635 = vlaneseq
        %v1636 = vshrl.u32 %v1635, 7
        %v1637 = vsub.s32 1, %v1636
        %v1638 = vrot.slane %v920, %v1637
        %v1639 = vmul.f32 %v1627, %v1638
        %v1640 = vmul.f32 %v1628, %v1638
        %v1641 = vmul.f32 %v1629, %v1638
        %v1642 = vmul.f32 %v1630, %v1638
        %v1643 = vmul.f32 %v1631, %v1638
        %v1644 = vmul.f32 %v1632, %v1638
        %v1645 = vmul.f32 %v1633, %v1638
        %v1646 = vmul.f32 %v1634, %v1638
        %v1647 = vadd.f32 %v1619, %v1639
        %v1648 = vadd.f32 %v1620, %v1640
        %v1649 = vadd.f32 %v1621, %v1641
        %v1650 = vadd.f32 %v1622, %v1642
        %v1651 = vadd.f32 %v1623, %v1643
        %v1652 = vadd.f32 %v1624, %v1644
        %v1653 = vadd.f32 %v1625, %v1645
        %v1654 = vadd.f32 %v1626, %v1646
        %v1655 = vld [vmem:[%s901 + $0x5] sm:$0xff]
        %v1656 = vld [vmem:[%s901 + $0x15] sm:$0xff]
        %v1657 = vld [vmem:[%s901 + $0x25] sm:$0xff]
        %v1658 = vld [vmem:[%s901 + $0x35] sm:$0xff]
        %v1659 = vld [vmem:[%s901 + $0x45] sm:$0xff]
        %v1660 = vld [vmem:[%s901 + $0x55] sm:$0xff]
        %v1661 = vld [vmem:[%s901 + $0x65] sm:$0xff]
        %v1662 = vld [vmem:[%s901 + $0x75] sm:$0xff]
        %v1663 = vlaneseq
        %v1664 = vshrl.u32 %v1663, 7
        %v1665 = vsub.s32 2, %v1664
        %v1666 = vrot.slane %v920, %v1665
        %v1667 = vmul.f32 %v1655, %v1666
        %v1668 = vmul.f32 %v1656, %v1666
        %v1669 = vmul.f32 %v1657, %v1666
        %v1670 = vmul.f32 %v1658, %v1666
        %v1671 = vmul.f32 %v1659, %v1666
        %v1672 = vmul.f32 %v1660, %v1666
        %v1673 = vmul.f32 %v1661, %v1666
        %v1674 = vmul.f32 %v1662, %v1666
        %v1675 = vadd.f32 %v1647, %v1667
        %v1676 = vadd.f32 %v1648, %v1668
        %v1677 = vadd.f32 %v1649, %v1669
        %v1678 = vadd.f32 %v1650, %v1670
        %v1679 = vadd.f32 %v1651, %v1671
        %v1680 = vadd.f32 %v1652, %v1672
        %v1681 = vadd.f32 %v1653, %v1673
        %v1682 = vadd.f32 %v1654, %v1674
        %v1683 = vld [vmem:[%s901 + $0x6] sm:$0xff]
        %v1684 = vld [vmem:[%s901 + $0x16] sm:$0xff]
        %v1685 = vld [vmem:[%s901 + $0x26] sm:$0xff]
        %v1686 = vld [vmem:[%s901 + $0x36] sm:$0xff]
        %v1687 = vld [vmem:[%s901 + $0x46] sm:$0xff]
        %v1688 = vld [vmem:[%s901 + $0x56] sm:$0xff]
        %v1689 = vld [vmem:[%s901 + $0x66] sm:$0xff]
        %v1690 = vld [vmem:[%s901 + $0x76] sm:$0xff]
        %v1691 = vlaneseq
        %v1692 = vshrl.u32 %v1691, 7
        %v1693 = vsub.s32 3, %v1692
        %v1694 = vrot.slane %v920, %v1693
        %v1695 = vmul.f32 %v1683, %v1694
        %v1696 = vmul.f32 %v1684, %v1694
        %v1697 = vmul.f32 %v1685, %v1694
        %v1698 = vmul.f32 %v1686, %v1694
        %v1699 = vmul.f32 %v1687, %v1694
        %v1700 = vmul.f32 %v1688, %v1694
        %v1701 = vmul.f32 %v1689, %v1694
        %v1702 = vmul.f32 %v1690, %v1694
        %v1703 = vadd.f32 %v1675, %v1695
        %v1704 = vadd.f32 %v1676, %v1696
        %v1705 = vadd.f32 %v1677, %v1697
        %v1706 = vadd.f32 %v1678, %v1698
        %v1707 = vadd.f32 %v1679, %v1699
        %v1708 = vadd.f32 %v1680, %v1700
        %v1709 = vadd.f32 %v1681, %v1701
        %v1710 = vadd.f32 %v1682, %v1702
        %v1711 = vld [vmem:[%s903] sm:$0xff]
        %v1712 = vld [vmem:[%s903 + $0x10] sm:$0xff]
        %v1713 = vld [vmem:[%s903 + $0x20] sm:$0xff]
        %v1714 = vld [vmem:[%s903 + $0x30] sm:$0xff]
        %v1715 = vld [vmem:[%s903 + $0x40] sm:$0xff]
        %v1716 = vld [vmem:[%s903 + $0x50] sm:$0xff]
        %v1717 = vld [vmem:[%s903 + $0x60] sm:$0xff]
        %v1718 = vld [vmem:[%s903 + $0x70] sm:$0xff]
        %v1719 = vlaneseq
        %v1720 = vshrl.u32 %v1719, 7
        %v1721 = vsub.s32 4, %v1720
        %v1722 = vrot.slane %v920, %v1721
        %v1723 = vmul.f32 %v1711, %v1722
        %v1724 = vmul.f32 %v1712, %v1722
        %v1725 = vmul.f32 %v1713, %v1722
        %v1726 = vmul.f32 %v1714, %v1722
        %v1727 = vmul.f32 %v1715, %v1722
        %v1728 = vmul.f32 %v1716, %v1722
        %v1729 = vmul.f32 %v1717, %v1722
        %v1730 = vmul.f32 %v1718, %v1722
        %v1731 = vadd.f32 %v1703, %v1723
        %v1732 = vadd.f32 %v1704, %v1724
        %v1733 = vadd.f32 %v1705, %v1725
        %v1734 = vadd.f32 %v1706, %v1726
        %v1735 = vadd.f32 %v1707, %v1727
        %v1736 = vadd.f32 %v1708, %v1728
        %v1737 = vadd.f32 %v1709, %v1729
        %v1738 = vadd.f32 %v1710, %v1730
        %v1739 = vld [vmem:[%s903 + $0x1] sm:$0xff]
        %v1740 = vld [vmem:[%s903 + $0x11] sm:$0xff]
        %v1741 = vld [vmem:[%s903 + $0x21] sm:$0xff]
        %v1742 = vld [vmem:[%s903 + $0x31] sm:$0xff]
        %v1743 = vld [vmem:[%s903 + $0x41] sm:$0xff]
        %v1744 = vld [vmem:[%s903 + $0x51] sm:$0xff]
        %v1745 = vld [vmem:[%s903 + $0x61] sm:$0xff]
        %v1746 = vld [vmem:[%s903 + $0x71] sm:$0xff]
        %v1747 = vlaneseq
        %v1748 = vshrl.u32 %v1747, 7
        %v1749 = vsub.s32 5, %v1748
        %v1750 = vrot.slane %v920, %v1749
        %v1751 = vmul.f32 %v1739, %v1750
        %v1752 = vmul.f32 %v1740, %v1750
        %v1753 = vmul.f32 %v1741, %v1750
        %v1754 = vmul.f32 %v1742, %v1750
        %v1755 = vmul.f32 %v1743, %v1750
        %v1756 = vmul.f32 %v1744, %v1750
        %v1757 = vmul.f32 %v1745, %v1750
        %v1758 = vmul.f32 %v1746, %v1750
        %v1759 = vadd.f32 %v1731, %v1751
        %v1760 = vadd.f32 %v1732, %v1752
        %v1761 = vadd.f32 %v1733, %v1753
        %v1762 = vadd.f32 %v1734, %v1754
        %v1763 = vadd.f32 %v1735, %v1755
        %v1764 = vadd.f32 %v1736, %v1756
        %v1765 = vadd.f32 %v1737, %v1757
        %v1766 = vadd.f32 %v1738, %v1758
        %v1767 = vld [vmem:[%s903 + $0x2] sm:$0xff]
        %v1768 = vld [vmem:[%s903 + $0x12] sm:$0xff]
        %v1769 = vld [vmem:[%s903 + $0x22] sm:$0xff]
        %v1770 = vld [vmem:[%s903 + $0x32] sm:$0xff]
        %v1771 = vld [vmem:[%s903 + $0x42] sm:$0xff]
        %v1772 = vld [vmem:[%s903 + $0x52] sm:$0xff]
        %v1773 = vld [vmem:[%s903 + $0x62] sm:$0xff]
        %v1774 = vld [vmem:[%s903 + $0x72] sm:$0xff]
        %v1775 = vlaneseq
        %v1776 = vshrl.u32 %v1775, 7
        %v1777 = vsub.s32 6, %v1776
        %v1778 = vrot.slane %v920, %v1777
        %v1779 = vmul.f32 %v1767, %v1778
        %v1780 = vmul.f32 %v1768, %v1778
        %v1781 = vmul.f32 %v1769, %v1778
        %v1782 = vmul.f32 %v1770, %v1778
        %v1783 = vmul.f32 %v1771, %v1778
        %v1784 = vmul.f32 %v1772, %v1778
        %v1785 = vmul.f32 %v1773, %v1778
        %v1786 = vmul.f32 %v1774, %v1778
        %v1787 = vadd.f32 %v1759, %v1779
        %v1788 = vadd.f32 %v1760, %v1780
        %v1789 = vadd.f32 %v1761, %v1781
        %v1790 = vadd.f32 %v1762, %v1782
        %v1791 = vadd.f32 %v1763, %v1783
        %v1792 = vadd.f32 %v1764, %v1784
        %v1793 = vadd.f32 %v1765, %v1785
        %v1794 = vadd.f32 %v1766, %v1786
        %v1795 = vld [vmem:[%s903 + $0x3] sm:$0xff]
        %v1796 = vld [vmem:[%s903 + $0x13] sm:$0xff]
        %v1797 = vld [vmem:[%s903 + $0x23] sm:$0xff]
        %v1798 = vld [vmem:[%s903 + $0x33] sm:$0xff]
        %v1799 = vld [vmem:[%s903 + $0x43] sm:$0xff]
        %v1800 = vld [vmem:[%s903 + $0x53] sm:$0xff]
        %v1801 = vld [vmem:[%s903 + $0x63] sm:$0xff]
        %v1802 = vld [vmem:[%s903 + $0x73] sm:$0xff]
        %v1803 = vlaneseq
        %v1804 = vshrl.u32 %v1803, 7
        %v1805 = vsub.s32 7, %v1804
        %v1806 = vrot.slane %v920, %v1805
        %v1807 = vmul.f32 %v1795, %v1806
        %v1808 = vmul.f32 %v1796, %v1806
        %v1809 = vmul.f32 %v1797, %v1806
        %v1810 = vmul.f32 %v1798, %v1806
        %v1811 = vmul.f32 %v1799, %v1806
        %v1812 = vmul.f32 %v1800, %v1806
        %v1813 = vmul.f32 %v1801, %v1806
        %v1814 = vmul.f32 %v1802, %v1806
        %v1815 = vadd.f32 %v1787, %v1807
        %v1816 = vadd.f32 %v1788, %v1808
        %v1817 = vadd.f32 %v1789, %v1809
        %v1818 = vadd.f32 %v1790, %v1810
        %v1819 = vadd.f32 %v1791, %v1811
        %v1820 = vadd.f32 %v1792, %v1812
        %v1821 = vadd.f32 %v1793, %v1813
        %v1822 = vadd.f32 %v1794, %v1814
        %v1823 = vld [vmem:[%s903 + $0x4] sm:$0xff]
        %v1824 = vld [vmem:[%s903 + $0x14] sm:$0xff]
        %v1825 = vld [vmem:[%s903 + $0x24] sm:$0xff]
        %v1826 = vld [vmem:[%s903 + $0x34] sm:$0xff]
        %v1827 = vld [vmem:[%s903 + $0x44] sm:$0xff]
        %v1828 = vld [vmem:[%s903 + $0x54] sm:$0xff]
        %v1829 = vld [vmem:[%s903 + $0x64] sm:$0xff]
        %v1830 = vld [vmem:[%s903 + $0x74] sm:$0xff]
        %v1831 = vlaneseq
        %v1832 = vshrl.u32 %v1831, 7
        %v1833 = vsub.s32 0, %v1832
        %v1834 = vrot.slane %v921, %v1833
        %v1835 = vmul.f32 %v1823, %v1834
        %v1836 = vmul.f32 %v1824, %v1834
        %v1837 = vmul.f32 %v1825, %v1834
        %v1838 = vmul.f32 %v1826, %v1834
        %v1839 = vmul.f32 %v1827, %v1834
        %v1840 = vmul.f32 %v1828, %v1834
        %v1841 = vmul.f32 %v1829, %v1834
        %v1842 = vmul.f32 %v1830, %v1834
        %v1843 = vadd.f32 %v1815, %v1835
        %v1844 = vadd.f32 %v1816, %v1836
        %v1845 = vadd.f32 %v1817, %v1837
        %v1846 = vadd.f32 %v1818, %v1838
        %v1847 = vadd.f32 %v1819, %v1839
        %v1848 = vadd.f32 %v1820, %v1840
        %v1849 = vadd.f32 %v1821, %v1841
        %v1850 = vadd.f32 %v1822, %v1842
        %v1851 = vld [vmem:[%s903 + $0x5] sm:$0xff]
        %v1852 = vld [vmem:[%s903 + $0x15] sm:$0xff]
        %v1853 = vld [vmem:[%s903 + $0x25] sm:$0xff]
        %v1854 = vld [vmem:[%s903 + $0x35] sm:$0xff]
        %v1855 = vld [vmem:[%s903 + $0x45] sm:$0xff]
        %v1856 = vld [vmem:[%s903 + $0x55] sm:$0xff]
        %v1857 = vld [vmem:[%s903 + $0x65] sm:$0xff]
        %v1858 = vld [vmem:[%s903 + $0x75] sm:$0xff]
        %v1859 = vlaneseq
        %v1860 = vshrl.u32 %v1859, 7
        %v1861 = vsub.s32 1, %v1860
        %v1862 = vrot.slane %v921, %v1861
        %v1863 = vmul.f32 %v1851, %v1862
        %v1864 = vmul.f32 %v1852, %v1862
        %v1865 = vmul.f32 %v1853, %v1862
        %v1866 = vmul.f32 %v1854, %v1862
        %v1867 = vmul.f32 %v1855, %v1862
        %v1868 = vmul.f32 %v1856, %v1862
        %v1869 = vmul.f32 %v1857, %v1862
        %v1870 = vmul.f32 %v1858, %v1862
        %v1871 = vadd.f32 %v1843, %v1863
        %v1872 = vadd.f32 %v1844, %v1864
        %v1873 = vadd.f32 %v1845, %v1865
        %v1874 = vadd.f32 %v1846, %v1866
        %v1875 = vadd.f32 %v1847, %v1867
        %v1876 = vadd.f32 %v1848, %v1868
        %v1877 = vadd.f32 %v1849, %v1869
        %v1878 = vadd.f32 %v1850, %v1870
        %v1879 = vld [vmem:[%s903 + $0x6] sm:$0xff]
        %v1880 = vld [vmem:[%s903 + $0x16] sm:$0xff]
        %v1881 = vld [vmem:[%s903 + $0x26] sm:$0xff]
        %v1882 = vld [vmem:[%s903 + $0x36] sm:$0xff]
        %v1883 = vld [vmem:[%s903 + $0x46] sm:$0xff]
        %v1884 = vld [vmem:[%s903 + $0x56] sm:$0xff]
        %v1885 = vld [vmem:[%s903 + $0x66] sm:$0xff]
        %v1886 = vld [vmem:[%s903 + $0x76] sm:$0xff]
        %v1887 = vlaneseq
        %v1888 = vshrl.u32 %v1887, 7
        %v1889 = vsub.s32 2, %v1888
        %v1890 = vrot.slane %v921, %v1889
        %v1891 = vmul.f32 %v1879, %v1890
        %v1892 = vmul.f32 %v1880, %v1890
        %v1893 = vmul.f32 %v1881, %v1890
        %v1894 = vmul.f32 %v1882, %v1890
        %v1895 = vmul.f32 %v1883, %v1890
        %v1896 = vmul.f32 %v1884, %v1890
        %v1897 = vmul.f32 %v1885, %v1890
        %v1898 = vmul.f32 %v1886, %v1890
        %v1899 = vadd.f32 %v1871, %v1891
        %v1900 = vadd.f32 %v1872, %v1892
        %v1901 = vadd.f32 %v1873, %v1893
        %v1902 = vadd.f32 %v1874, %v1894
        %v1903 = vadd.f32 %v1875, %v1895
        %v1904 = vadd.f32 %v1876, %v1896
        %v1905 = vadd.f32 %v1877, %v1897
        %v1906 = vadd.f32 %v1878, %v1898
        %v1907 = vld [vmem:[%s905] sm:$0xff]
        %v1908 = vld [vmem:[%s905 + $0x10] sm:$0xff]
        %v1909 = vld [vmem:[%s905 + $0x20] sm:$0xff]
        %v1910 = vld [vmem:[%s905 + $0x30] sm:$0xff]
        %v1911 = vld [vmem:[%s905 + $0x40] sm:$0xff]
        %v1912 = vld [vmem:[%s905 + $0x50] sm:$0xff]
        %v1913 = vld [vmem:[%s905 + $0x60] sm:$0xff]
        %v1914 = vld [vmem:[%s905 + $0x70] sm:$0xff]
        %v1915 = vlaneseq
        %v1916 = vshrl.u32 %v1915, 7
        %v1917 = vsub.s32 3, %v1916
        %v1918 = vrot.slane %v921, %v1917
        %v1919 = vmul.f32 %v1907, %v1918
        %v1920 = vmul.f32 %v1908, %v1918
        %v1921 = vmul.f32 %v1909, %v1918
        %v1922 = vmul.f32 %v1910, %v1918
        %v1923 = vmul.f32 %v1911, %v1918
        %v1924 = vmul.f32 %v1912, %v1918
        %v1925 = vmul.f32 %v1913, %v1918
        %v1926 = vmul.f32 %v1914, %v1918
        %v1927 = vadd.f32 %v1899, %v1919
        %v1928 = vadd.f32 %v1900, %v1920
        %v1929 = vadd.f32 %v1901, %v1921
        %v1930 = vadd.f32 %v1902, %v1922
        %v1931 = vadd.f32 %v1903, %v1923
        %v1932 = vadd.f32 %v1904, %v1924
        %v1933 = vadd.f32 %v1905, %v1925
        %v1934 = vadd.f32 %v1906, %v1926
        %v1935 = vld [vmem:[%s905 + $0x1] sm:$0xff]
        %v1936 = vld [vmem:[%s905 + $0x11] sm:$0xff]
        %v1937 = vld [vmem:[%s905 + $0x21] sm:$0xff]
        %v1938 = vld [vmem:[%s905 + $0x31] sm:$0xff]
        %v1939 = vld [vmem:[%s905 + $0x41] sm:$0xff]
        %v1940 = vld [vmem:[%s905 + $0x51] sm:$0xff]
        %v1941 = vld [vmem:[%s905 + $0x61] sm:$0xff]
        %v1942 = vld [vmem:[%s905 + $0x71] sm:$0xff]
        %v1943 = vlaneseq
        %v1944 = vshrl.u32 %v1943, 7
        %v1945 = vsub.s32 4, %v1944
        %v1946 = vrot.slane %v921, %v1945
        %v1947 = vmul.f32 %v1935, %v1946
        %v1948 = vmul.f32 %v1936, %v1946
        %v1949 = vmul.f32 %v1937, %v1946
        %v1950 = vmul.f32 %v1938, %v1946
        %v1951 = vmul.f32 %v1939, %v1946
        %v1952 = vmul.f32 %v1940, %v1946
        %v1953 = vmul.f32 %v1941, %v1946
        %v1954 = vmul.f32 %v1942, %v1946
        %v1955 = vadd.f32 %v1927, %v1947
        %v1956 = vadd.f32 %v1928, %v1948
        %v1957 = vadd.f32 %v1929, %v1949
        %v1958 = vadd.f32 %v1930, %v1950
        %v1959 = vadd.f32 %v1931, %v1951
        %v1960 = vadd.f32 %v1932, %v1952
        %v1961 = vadd.f32 %v1933, %v1953
        %v1962 = vadd.f32 %v1934, %v1954
        %v1963 = vld [vmem:[%s905 + $0x2] sm:$0xff]
        %v1964 = vld [vmem:[%s905 + $0x12] sm:$0xff]
        %v1965 = vld [vmem:[%s905 + $0x22] sm:$0xff]
        %v1966 = vld [vmem:[%s905 + $0x32] sm:$0xff]
        %v1967 = vld [vmem:[%s905 + $0x42] sm:$0xff]
        %v1968 = vld [vmem:[%s905 + $0x52] sm:$0xff]
        %v1969 = vld [vmem:[%s905 + $0x62] sm:$0xff]
        %v1970 = vld [vmem:[%s905 + $0x72] sm:$0xff]
        %v1971 = vlaneseq
        %v1972 = vshrl.u32 %v1971, 7
        %v1973 = vsub.s32 5, %v1972
        %v1974 = vrot.slane %v921, %v1973
        %v1975 = vmul.f32 %v1963, %v1974
        %v1976 = vmul.f32 %v1964, %v1974
        %v1977 = vmul.f32 %v1965, %v1974
        %v1978 = vmul.f32 %v1966, %v1974
        %v1979 = vmul.f32 %v1967, %v1974
        %v1980 = vmul.f32 %v1968, %v1974
        %v1981 = vmul.f32 %v1969, %v1974
        %v1982 = vmul.f32 %v1970, %v1974
        %v1983 = vadd.f32 %v1955, %v1975
        %v1984 = vadd.f32 %v1956, %v1976
        %v1985 = vadd.f32 %v1957, %v1977
        %v1986 = vadd.f32 %v1958, %v1978
        %v1987 = vadd.f32 %v1959, %v1979
        %v1988 = vadd.f32 %v1960, %v1980
        %v1989 = vadd.f32 %v1961, %v1981
        %v1990 = vadd.f32 %v1962, %v1982
        %v1991 = vld [vmem:[%s905 + $0x3] sm:$0xff]
        %v1992 = vld [vmem:[%s905 + $0x13] sm:$0xff]
        %v1993 = vld [vmem:[%s905 + $0x23] sm:$0xff]
        %v1994 = vld [vmem:[%s905 + $0x33] sm:$0xff]
        %v1995 = vld [vmem:[%s905 + $0x43] sm:$0xff]
        %v1996 = vld [vmem:[%s905 + $0x53] sm:$0xff]
        %v1997 = vld [vmem:[%s905 + $0x63] sm:$0xff]
        %v1998 = vld [vmem:[%s905 + $0x73] sm:$0xff]
        %v1999 = vlaneseq
        %v2000 = vshrl.u32 %v1999, 7
        %v2001 = vsub.s32 6, %v2000
        %v2002 = vrot.slane %v921, %v2001
        %v2003 = vmul.f32 %v1991, %v2002
        %v2004 = vmul.f32 %v1992, %v2002
        %v2005 = vmul.f32 %v1993, %v2002
        %v2006 = vmul.f32 %v1994, %v2002
        %v2007 = vmul.f32 %v1995, %v2002
        %v2008 = vmul.f32 %v1996, %v2002
        %v2009 = vmul.f32 %v1997, %v2002
        %v2010 = vmul.f32 %v1998, %v2002
        %v2011 = vadd.f32 %v1983, %v2003
        %v2012 = vadd.f32 %v1984, %v2004
        %v2013 = vadd.f32 %v1985, %v2005
        %v2014 = vadd.f32 %v1986, %v2006
        %v2015 = vadd.f32 %v1987, %v2007
        %v2016 = vadd.f32 %v1988, %v2008
        %v2017 = vadd.f32 %v1989, %v2009
        %v2018 = vadd.f32 %v1990, %v2010
        %v2019 = vld [vmem:[%s905 + $0x4] sm:$0xff]
        %v2020 = vld [vmem:[%s905 + $0x14] sm:$0xff]
        %v2021 = vld [vmem:[%s905 + $0x24] sm:$0xff]
        %v2022 = vld [vmem:[%s905 + $0x34] sm:$0xff]
        %v2023 = vld [vmem:[%s905 + $0x44] sm:$0xff]
        %v2024 = vld [vmem:[%s905 + $0x54] sm:$0xff]
        %v2025 = vld [vmem:[%s905 + $0x64] sm:$0xff]
        %v2026 = vld [vmem:[%s905 + $0x74] sm:$0xff]
        %v2027 = vlaneseq
        %v2028 = vshrl.u32 %v2027, 7
        %v2029 = vsub.s32 7, %v2028
        %v2030 = vrot.slane %v921, %v2029
        %v2031 = vmul.f32 %v2019, %v2030
        %v2032 = vmul.f32 %v2020, %v2030
        %v2033 = vmul.f32 %v2021, %v2030
        %v2034 = vmul.f32 %v2022, %v2030
        %v2035 = vmul.f32 %v2023, %v2030
        %v2036 = vmul.f32 %v2024, %v2030
        %v2037 = vmul.f32 %v2025, %v2030
        %v2038 = vmul.f32 %v2026, %v2030
        %v2039 = vadd.f32 %v2011, %v2031
        %v2040 = vadd.f32 %v2012, %v2032
        %v2041 = vadd.f32 %v2013, %v2033
        %v2042 = vadd.f32 %v2014, %v2034
        %v2043 = vadd.f32 %v2015, %v2035
        %v2044 = vadd.f32 %v2016, %v2036
        %v2045 = vadd.f32 %v2017, %v2037
        %v2046 = vadd.f32 %v2018, %v2038
        %v2047 = vld [vmem:[%s905 + $0x5] sm:$0xff]
        %v2048 = vld [vmem:[%s905 + $0x15] sm:$0xff]
        %v2049 = vld [vmem:[%s905 + $0x25] sm:$0xff]
        %v2050 = vld [vmem:[%s905 + $0x35] sm:$0xff]
        %v2051 = vld [vmem:[%s905 + $0x45] sm:$0xff]
        %v2052 = vld [vmem:[%s905 + $0x55] sm:$0xff]
        %v2053 = vld [vmem:[%s905 + $0x65] sm:$0xff]
        %v2054 = vld [vmem:[%s905 + $0x75] sm:$0xff]
        %v2055 = vlaneseq
        %v2056 = vshrl.u32 %v2055, 7
        %v2057 = vsub.s32 0, %v2056
        %v2058 = vrot.slane %v922, %v2057
        %v2059 = vmul.f32 %v2047, %v2058
        %v2060 = vmul.f32 %v2048, %v2058
        %v2061 = vmul.f32 %v2049, %v2058
        %v2062 = vmul.f32 %v2050, %v2058
        %v2063 = vmul.f32 %v2051, %v2058
        %v2064 = vmul.f32 %v2052, %v2058
        %v2065 = vmul.f32 %v2053, %v2058
        %v2066 = vmul.f32 %v2054, %v2058
        %v2067 = vadd.f32 %v2039, %v2059
        %v2068 = vadd.f32 %v2040, %v2060
        %v2069 = vadd.f32 %v2041, %v2061
        %v2070 = vadd.f32 %v2042, %v2062
        %v2071 = vadd.f32 %v2043, %v2063
        %v2072 = vadd.f32 %v2044, %v2064
        %v2073 = vadd.f32 %v2045, %v2065
        %v2074 = vadd.f32 %v2046, %v2066
        %v2075 = vld [vmem:[%s905 + $0x6] sm:$0xff]
        %v2076 = vld [vmem:[%s905 + $0x16] sm:$0xff]
        %v2077 = vld [vmem:[%s905 + $0x26] sm:$0xff]
        %v2078 = vld [vmem:[%s905 + $0x36] sm:$0xff]
        %v2079 = vld [vmem:[%s905 + $0x46] sm:$0xff]
        %v2080 = vld [vmem:[%s905 + $0x56] sm:$0xff]
        %v2081 = vld [vmem:[%s905 + $0x66] sm:$0xff]
        %v2082 = vld [vmem:[%s905 + $0x76] sm:$0xff]
        %v2083 = vlaneseq
        %v2084 = vshrl.u32 %v2083, 7
        %v2085 = vsub.s32 1, %v2084
        %v2086 = vrot.slane %v922, %v2085
        %v2087 = vmul.f32 %v2075, %v2086
        %v2088 = vmul.f32 %v2076, %v2086
        %v2089 = vmul.f32 %v2077, %v2086
        %v2090 = vmul.f32 %v2078, %v2086
        %v2091 = vmul.f32 %v2079, %v2086
        %v2092 = vmul.f32 %v2080, %v2086
        %v2093 = vmul.f32 %v2081, %v2086
        %v2094 = vmul.f32 %v2082, %v2086
        %v2095 = vadd.f32 %v2067, %v2087
        %v2096 = vadd.f32 %v2068, %v2088
        %v2097 = vadd.f32 %v2069, %v2089
        %v2098 = vadd.f32 %v2070, %v2090
        %v2099 = vadd.f32 %v2071, %v2091
        %v2100 = vadd.f32 %v2072, %v2092
        %v2101 = vadd.f32 %v2073, %v2093
        %v2102 = vadd.f32 %v2074, %v2094
        %v2103 = vld [vmem:[%s907] sm:$0xff]
        %v2104 = vld [vmem:[%s907 + $0x10] sm:$0xff]
        %v2105 = vld [vmem:[%s907 + $0x20] sm:$0xff]
        %v2106 = vld [vmem:[%s907 + $0x30] sm:$0xff]
        %v2107 = vld [vmem:[%s907 + $0x40] sm:$0xff]
        %v2108 = vld [vmem:[%s907 + $0x50] sm:$0xff]
        %v2109 = vld [vmem:[%s907 + $0x60] sm:$0xff]
        %v2110 = vld [vmem:[%s907 + $0x70] sm:$0xff]
        %v2111 = vlaneseq
        %v2112 = vshrl.u32 %v2111, 7
        %v2113 = vsub.s32 2, %v2112
        %v2114 = vrot.slane %v922, %v2113
        %v2115 = vmul.f32 %v2103, %v2114
        %v2116 = vmul.f32 %v2104, %v2114
        %v2117 = vmul.f32 %v2105, %v2114
        %v2118 = vmul.f32 %v2106, %v2114
        %v2119 = vmul.f32 %v2107, %v2114
        %v2120 = vmul.f32 %v2108, %v2114
        %v2121 = vmul.f32 %v2109, %v2114
        %v2122 = vmul.f32 %v2110, %v2114
        %v2123 = vadd.f32 %v2095, %v2115
        %v2124 = vadd.f32 %v2096, %v2116
        %v2125 = vadd.f32 %v2097, %v2117
        %v2126 = vadd.f32 %v2098, %v2118
        %v2127 = vadd.f32 %v2099, %v2119
        %v2128 = vadd.f32 %v2100, %v2120
        %v2129 = vadd.f32 %v2101, %v2121
        %v2130 = vadd.f32 %v2102, %v2122
        %v2131 = vld [vmem:[%s907 + $0x1] sm:$0xff]
        %v2132 = vld [vmem:[%s907 + $0x11] sm:$0xff]
        %v2133 = vld [vmem:[%s907 + $0x21] sm:$0xff]
        %v2134 = vld [vmem:[%s907 + $0x31] sm:$0xff]
        %v2135 = vld [vmem:[%s907 + $0x41] sm:$0xff]
        %v2136 = vld [vmem:[%s907 + $0x51] sm:$0xff]
        %v2137 = vld [vmem:[%s907 + $0x61] sm:$0xff]
        %v2138 = vld [vmem:[%s907 + $0x71] sm:$0xff]
        %v2139 = vlaneseq
        %v2140 = vshrl.u32 %v2139, 7
        %v2141 = vsub.s32 3, %v2140
        %v2142 = vrot.slane %v922, %v2141
        %v2143 = vmul.f32 %v2131, %v2142
        %v2144 = vmul.f32 %v2132, %v2142
        %v2145 = vmul.f32 %v2133, %v2142
        %v2146 = vmul.f32 %v2134, %v2142
        %v2147 = vmul.f32 %v2135, %v2142
        %v2148 = vmul.f32 %v2136, %v2142
        %v2149 = vmul.f32 %v2137, %v2142
        %v2150 = vmul.f32 %v2138, %v2142
        %v2151 = vadd.f32 %v2123, %v2143
        %v2152 = vadd.f32 %v2124, %v2144
        %v2153 = vadd.f32 %v2125, %v2145
        %v2154 = vadd.f32 %v2126, %v2146
        %v2155 = vadd.f32 %v2127, %v2147
        %v2156 = vadd.f32 %v2128, %v2148
        %v2157 = vadd.f32 %v2129, %v2149
        %v2158 = vadd.f32 %v2130, %v2150
        %v2159 = vld [vmem:[%s907 + $0x2] sm:$0xff]
        %v2160 = vld [vmem:[%s907 + $0x12] sm:$0xff]
        %v2161 = vld [vmem:[%s907 + $0x22] sm:$0xff]
        %v2162 = vld [vmem:[%s907 + $0x32] sm:$0xff]
        %v2163 = vld [vmem:[%s907 + $0x42] sm:$0xff]
        %v2164 = vld [vmem:[%s907 + $0x52] sm:$0xff]
        %v2165 = vld [vmem:[%s907 + $0x62] sm:$0xff]
        %v2166 = vld [vmem:[%s907 + $0x72] sm:$0xff]
        %v2167 = vlaneseq
        %v2168 = vshrl.u32 %v2167, 7
        %v2169 = vsub.s32 4, %v2168
        %v2170 = vrot.slane %v922, %v2169
        %v2171 = vmul.f32 %v2159, %v2170
        %v2172 = vmul.f32 %v2160, %v2170
        %v2173 = vmul.f32 %v2161, %v2170
        %v2174 = vmul.f32 %v2162, %v2170
        %v2175 = vmul.f32 %v2163, %v2170
        %v2176 = vmul.f32 %v2164, %v2170
        %v2177 = vmul.f32 %v2165, %v2170
        %v2178 = vmul.f32 %v2166, %v2170
        %v2179 = vadd.f32 %v2151, %v2171
        %v2180 = vadd.f32 %v2152, %v2172
        %v2181 = vadd.f32 %v2153, %v2173
        %v2182 = vadd.f32 %v2154, %v2174
        %v2183 = vadd.f32 %v2155, %v2175
        %v2184 = vadd.f32 %v2156, %v2176
        %v2185 = vadd.f32 %v2157, %v2177
        %v2186 = vadd.f32 %v2158, %v2178
        %v2187 = vld [vmem:[%s907 + $0x3] sm:$0xff]
        %v2188 = vld [vmem:[%s907 + $0x13] sm:$0xff]
        %v2189 = vld [vmem:[%s907 + $0x23] sm:$0xff]
        %v2190 = vld [vmem:[%s907 + $0x33] sm:$0xff]
        %v2191 = vld [vmem:[%s907 + $0x43] sm:$0xff]
        %v2192 = vld [vmem:[%s907 + $0x53] sm:$0xff]
        %v2193 = vld [vmem:[%s907 + $0x63] sm:$0xff]
        %v2194 = vld [vmem:[%s907 + $0x73] sm:$0xff]
        %v2195 = vlaneseq
        %v2196 = vshrl.u32 %v2195, 7
        %v2197 = vsub.s32 5, %v2196
        %v2198 = vrot.slane %v922, %v2197
        %v2199 = vmul.f32 %v2187, %v2198
        %v2200 = vmul.f32 %v2188, %v2198
        %v2201 = vmul.f32 %v2189, %v2198
        %v2202 = vmul.f32 %v2190, %v2198
        %v2203 = vmul.f32 %v2191, %v2198
        %v2204 = vmul.f32 %v2192, %v2198
        %v2205 = vmul.f32 %v2193, %v2198
        %v2206 = vmul.f32 %v2194, %v2198
        %v2207 = vadd.f32 %v2179, %v2199
        %v2208 = vadd.f32 %v2180, %v2200
        %v2209 = vadd.f32 %v2181, %v2201
        %v2210 = vadd.f32 %v2182, %v2202
        %v2211 = vadd.f32 %v2183, %v2203
        %v2212 = vadd.f32 %v2184, %v2204
        %v2213 = vadd.f32 %v2185, %v2205
        %v2214 = vadd.f32 %v2186, %v2206
        %v2215 = vld [vmem:[%s907 + $0x4] sm:$0xff]
        %v2216 = vld [vmem:[%s907 + $0x14] sm:$0xff]
        %v2217 = vld [vmem:[%s907 + $0x24] sm:$0xff]
        %v2218 = vld [vmem:[%s907 + $0x34] sm:$0xff]
        %v2219 = vld [vmem:[%s907 + $0x44] sm:$0xff]
        %v2220 = vld [vmem:[%s907 + $0x54] sm:$0xff]
        %v2221 = vld [vmem:[%s907 + $0x64] sm:$0xff]
        %v2222 = vld [vmem:[%s907 + $0x74] sm:$0xff]
        %v2223 = vlaneseq
        %v2224 = vshrl.u32 %v2223, 7
        %v2225 = vsub.s32 6, %v2224
        %v2226 = vrot.slane %v922, %v2225
        %v2227 = vmul.f32 %v2215, %v2226
        %v2228 = vmul.f32 %v2216, %v2226
        %v2229 = vmul.f32 %v2217, %v2226
        %v2230 = vmul.f32 %v2218, %v2226
        %v2231 = vmul.f32 %v2219, %v2226
        %v2232 = vmul.f32 %v2220, %v2226
        %v2233 = vmul.f32 %v2221, %v2226
        %v2234 = vmul.f32 %v2222, %v2226
        %v2235 = vadd.f32 %v2207, %v2227
        %v2236 = vadd.f32 %v2208, %v2228
        %v2237 = vadd.f32 %v2209, %v2229
        %v2238 = vadd.f32 %v2210, %v2230
        %v2239 = vadd.f32 %v2211, %v2231
        %v2240 = vadd.f32 %v2212, %v2232
        %v2241 = vadd.f32 %v2213, %v2233
        %v2242 = vadd.f32 %v2214, %v2234
        %v2243 = vld [vmem:[%s907 + $0x5] sm:$0xff]
        %v2244 = vld [vmem:[%s907 + $0x15] sm:$0xff]
        %v2245 = vld [vmem:[%s907 + $0x25] sm:$0xff]
        %v2246 = vld [vmem:[%s907 + $0x35] sm:$0xff]
        %v2247 = vld [vmem:[%s907 + $0x45] sm:$0xff]
        %v2248 = vld [vmem:[%s907 + $0x55] sm:$0xff]
        %v2249 = vld [vmem:[%s907 + $0x65] sm:$0xff]
        %v2250 = vld [vmem:[%s907 + $0x75] sm:$0xff]
        %v2251 = vlaneseq
        %v2252 = vshrl.u32 %v2251, 7
        %v2253 = vsub.s32 7, %v2252
        %v2254 = vrot.slane %v922, %v2253
        %v2255 = vmul.f32 %v2243, %v2254
        %v2256 = vmul.f32 %v2244, %v2254
        %v2257 = vmul.f32 %v2245, %v2254
        %v2258 = vmul.f32 %v2246, %v2254
        %v2259 = vmul.f32 %v2247, %v2254
        %v2260 = vmul.f32 %v2248, %v2254
        %v2261 = vmul.f32 %v2249, %v2254
        %v2262 = vmul.f32 %v2250, %v2254
        %v2263 = vadd.f32 %v2235, %v2255
        %v2264 = vadd.f32 %v2236, %v2256
        %v2265 = vadd.f32 %v2237, %v2257
        %v2266 = vadd.f32 %v2238, %v2258
        %v2267 = vadd.f32 %v2239, %v2259
        %v2268 = vadd.f32 %v2240, %v2260
        %v2269 = vadd.f32 %v2241, %v2261
        %v2270 = vadd.f32 %v2242, %v2262
        %v2271 = vld [vmem:[%s907 + $0x6] sm:$0xff]
        %v2272 = vld [vmem:[%s907 + $0x16] sm:$0xff]
        %v2273 = vld [vmem:[%s907 + $0x26] sm:$0xff]
        %v2274 = vld [vmem:[%s907 + $0x36] sm:$0xff]
        %v2275 = vld [vmem:[%s907 + $0x46] sm:$0xff]
        %v2276 = vld [vmem:[%s907 + $0x56] sm:$0xff]
        %v2277 = vld [vmem:[%s907 + $0x66] sm:$0xff]
        %v2278 = vld [vmem:[%s907 + $0x76] sm:$0xff]
        %v2279 = vlaneseq
        %v2280 = vshrl.u32 %v2279, 7
        %v2281 = vsub.s32 0, %v2280
        %v2282 = vrot.slane %v923, %v2281
        %v2283 = vmul.f32 %v2271, %v2282
        %v2284 = vmul.f32 %v2272, %v2282
        %v2285 = vmul.f32 %v2273, %v2282
        %v2286 = vmul.f32 %v2274, %v2282
        %v2287 = vmul.f32 %v2275, %v2282
        %v2288 = vmul.f32 %v2276, %v2282
        %v2289 = vmul.f32 %v2277, %v2282
        %v2290 = vmul.f32 %v2278, %v2282
        %v2291 = vadd.f32 %v2263, %v2283
        %v2292 = vadd.f32 %v2264, %v2284
        %v2293 = vadd.f32 %v2265, %v2285
        %v2294 = vadd.f32 %v2266, %v2286
        %v2295 = vadd.f32 %v2267, %v2287
        %v2296 = vadd.f32 %v2268, %v2288
        %v2297 = vadd.f32 %v2269, %v2289
        %v2298 = vadd.f32 %v2270, %v2290
        %v2300 = vlaneseq
        %v2301 = vshrl.u32 %v2300, 7
        %v2302 = vsub.s32 0, %v2301
        %v2303 = vrot.slane %v924, %v2302
        %v2305 = vadd.f32 %v2291, %v2303
        %v2306 = vadd.f32 %v2292, %v2303
        %v2307 = vadd.f32 %v2293, %v2303
        %v2308 = vadd.f32 %v2294, %v2303
        %v2309 = vadd.f32 %v2295, %v2303
        %v2310 = vadd.f32 %v2296, %v2303
        %v2311 = vadd.f32 %v2297, %v2303
        %v2312 = vadd.f32 %v2298, %v2303
        %2313 = vst.msk [vmem:[%s299] sm:$0xff] %vm308, %v2305
        %2314 = vst.msk [vmem:[%s299 + $0x8] sm:$0xff] %vm308, %v2306
        %2315 = vst.msk [vmem:[%s299 + $0x10] sm:$0xff] %vm308, %v2307
        %2316 = vst.msk [vmem:[%s299 + $0x18] sm:$0xff] %vm308, %v2308
        %2317 = vst.msk [vmem:[%s299 + $0x20] sm:$0xff] %vm308, %v2309
        %2318 = vst.msk [vmem:[%s299 + $0x28] sm:$0xff] %vm308, %v2310
        %2319 = vst.msk [vmem:[%s299 + $0x30] sm:$0xff] %vm308, %v2311
        %2320 = vst.msk [vmem:[%s299 + $0x38] sm:$0xff] %vm308, %v2312
        %s2321 = sand.u32 %s204, 1
        %s2322 = scalar_lea.sflag [#allocation6], %s2321
        %s2323 = sand.u32 %s204, 1
        %s2324 = smul.addr %s2323, 64
        %s2325 = scalar_lea.vmem [#allocation5], %s2324
        // Predicated region
        $region53: #{tpu_custom_call.1} parent=51 // pred_check
          %p2326 = pneg %p214
        $region54: #{tpu_custom_call.1} parent=51 // pred_check_branch
          %2328 = sbr.rel (%p2326) target = $region56
        $region55: #{tpu_custom_call.1} parent=51 // pred_region
          %s2329 = smul.u32 8, %s23
          %s2331 = ssub.s32 1024, 1024
          %2332 = vsyncadd %s2322, %s2331
          %s2333 = smul.addr %s2329, 128
          %s2334 = scalar_lea.hbm %s8, %s2333
          %s2335 = sshll.u32 %s2325, 4
          %s2336 = int_to_ptr.vmem [resolvable:$true] %s2335
          %2341 = dma.vmem_to_hbm [thread:$0]  %s2336, 1024, %s2334, %s2322, 128, 128, 8
        $region56: #{tpu_custom_call.1} parent=51 // pred_fallthru
          _
      $region52: #{tpu_custom_call.1} parent=5 // pred_fallthru
        _
      %p2342 = scmp.le.s32.totalorder 2, %s18
      // Predicated region
      $region57: #{tpu_custom_call.1} parent=5 // pred_check
        %p2343 = pneg %p2342
      $region58: #{tpu_custom_call.1} parent=5 // pred_check_branch
        %2345 = sbr.rel (%p2343) target = $region60
      $region59: #{tpu_custom_call.1} parent=5 // pred_region
        %s2346 = ssub.s32 %s18, 2
        // Predicated region
        $region61: #{tpu_custom_call.1} parent=59 // pred_check
          %p2347 = pneg %p220
        $region62: #{tpu_custom_call.1} parent=59 // pred_check_branch
          %2349 = sbr.rel (%p2347) target = $region64
        $region63: #{tpu_custom_call.1} parent=59 // pred_region
          %s2350 = sand.u32 %s205, 1
          %s2351 = scalar_lea.sflag [#allocation6], %s2350
          %s2352 = sand.u32 %s205, 1
          %s2353 = smul.addr %s2352, 64
          %s2354 = scalar_lea.vmem [#allocation5], %s2353
          %2355 = dma.done %s2351, 1024
        $region64: #{tpu_custom_call.1} parent=59 // pred_fallthru
          _
      $region60: #{tpu_custom_call.1} parent=5 // pred_fallthru
        _
    $region6: #{tpu_custom_call.1} parent=1 // loop_footer
      %s22 = sadd.s32 1, %s18
    $region7: #{tpu_custom_call.1} parent=1 // loop_footer_branch
      %17 = sbr.rel target = $region3
    $region8: #{tpu_custom_call.1} parent=1 // loop_exit
      _
    %2356 = vsyncpa [#allocation6], 1
    %s2357 = scalar_lea.sflag [#allocation6], 1
    %2358 = vsyncpa %s2357, 1

</llo_original>
